<compile_context>
chip_gen: v5e
topology: v5e:2x2
jax: 0.10.0
libtpu: 0.0.40
codegen_flags: <defaults>
</compile_context>

<pallas_src>
import functools

import jax
import jax.numpy as jnp
from jax import lax
from jax.experimental import pallas as pl
from jax.experimental.pallas import tpu as pltpu

# ----------------------------- small config -------------------------------
VOCAB_SIZE = 65          # e.g. Shakespeare char vocab
VOCAB_PAD = 128          # token table / lm_head padded to a lane-dense width
N_EMBD = 64              # scaled-down from 384
N_HEAD = 4               # scaled-down from 6
N_LAYER = 2              # scaled-down from 6
HEAD_SIZE = N_EMBD // N_HEAD
MAX_CONTEXT_LEN = 32     # scaled-down from 256
LN_EPS = 1e-5
NEG_BIG = -1e30          # finite large-negative mask value (exp underflows to 0)
# NOTE: pl.reciprocal(approx=True) in the softmax denominator is a deliberate
# ~1e-3-relative-error deviation from the exact PyTorch softmax (inference-ok).


# ------------------------------ kernel utils ------------------------------
def _layernorm(x, g, b):
    # x: (N, C) f32, g/b: (1, C) — one-pass mean / mean-of-squares statistics.
    mu = jnp.mean(x, axis=-1, keepdims=True)
    var = jnp.mean(x * x, axis=-1, keepdims=True) - mu * mu
    return (x - mu) * lax.rsqrt(var + LN_EPS) * g + b


# --------------------------- fused forward kernel ---------------------------
def gpt_kernel(idx_ref, tok_ref, pos_ref,
               ln1g_ref, ln1b_ref, wqkv_ref, wproj_ref, bproj_ref,
               ln2g_ref, ln2b_ref, w1_ref, b1_ref, w2_ref, b2_ref,
               lnfg_ref, lnfb_ref, wlm_ref, blm_ref,
               out_ref, *, batch, seq):
    B, T, C = batch, seq, N_EMBD
    BT = B * T

    # ---- fused embedding: one-hot(idx) @ tok_table  +  positional add ----
    ids = idx_ref[...]                                            # (BT, 1) i32
    vocab_iota = lax.broadcasted_iota(jnp.int32, (BT, VOCAB_PAD), 1)
    onehot = (vocab_iota == ids).astype(jnp.float32)              # (BT, 128)
    x = jnp.dot(onehot, tok_ref[...],
                preferred_element_type=jnp.float32)               # (BT, C) f32
    pos = pos_ref[0:T, :]                                         # (T, C) static
    x = (x.reshape(B, T, C) + pos[None, :, :]).reshape(BT, C)

    # ---- causal mask built once in-kernel (shared by all heads / layers) ----
    row = lax.broadcasted_iota(jnp.int32, (T, T), 0)
    col = lax.broadcasted_iota(jnp.int32, (T, T), 1)
    causal = (col <= row)[None, :, :]                             # (1, T, T)

    for l in range(N_LAYER):                 # unrolled: N_LAYER is small/static
        # ---- x + MultiHeadAttention(LayerNorm1(x)) ----
        h = _layernorm(x, ln1g_ref[l], ln1b_ref[l])               # (BT, C) f32
        # fused Q/K/V: one (BT,C)@(C,3C) lane-dense bf16 matmul
        # (1/sqrt(head_size) already folded into the Q columns at init)
        qkv = jnp.dot(h.astype(jnp.bfloat16), wqkv_ref[l],
                      preferred_element_type=jnp.float32)         # (BT, 3C) f32
        qkv3 = qkv.reshape(B, T, 3 * C)

        heads = []
        for hd in range(N_HEAD):
            lo = hd * HEAD_SIZE
            q = qkv3[:, :, lo:lo + HEAD_SIZE].astype(jnp.bfloat16)          # (B,T,hs)
            k = qkv3[:, :, C + lo:C + lo + HEAD_SIZE].astype(jnp.bfloat16)
            v = qkv3[:, :, 2 * C + lo:2 * C + lo + HEAD_SIZE].astype(jnp.bfloat16)

            # per-batch (T,T) scores — no flattened BT x BT attention
            s = jnp.einsum('bqd,bkd->bqk', q, k,
                           preferred_element_type=jnp.float32)    # (B,T,T) f32
            s = jnp.where(causal, s, NEG_BIG)
            m = jnp.max(s, axis=-1, keepdims=True)
            e = jnp.exp(s - m)
            p = e * pl.reciprocal(jnp.sum(e, axis=-1, keepdims=True),
                                  approx=True)                    # softmax (EUP)
            o = jnp.einsum('bqk,bkd->bqd', p.astype(jnp.bfloat16), v,
                           preferred_element_type=jnp.float32)    # (B,T,hs) f32
            heads.append(o.reshape(BT, HEAD_SIZE))

        att_cat = jnp.concatenate(heads, axis=-1)                 # (BT, C) concat
        attn = jnp.dot(att_cat.astype(jnp.bfloat16), wproj_ref[l],
                       preferred_element_type=jnp.float32) + bproj_ref[l]
        x = x + attn                            # residual 1 (dropout = identity)

        # ---- x + FeedForward(LayerNorm2(x)) ----
        h2 = _layernorm(x, ln2g_ref[l], ln2b_ref[l])
        f = jnp.dot(h2.astype(jnp.bfloat16), w1_ref[l],
                    preferred_element_type=jnp.float32) + b1_ref[l]
        f = jnp.maximum(f, 0.0)                                   # ReLU (f32)
        f = jnp.dot(f.astype(jnp.bfloat16), w2_ref[l],
                    preferred_element_type=jnp.float32) + b2_ref[l]
        x = x + f                               # residual 2 (dropout = identity)

    # ---- final LayerNorm + lm_head (128-lane padded logits, dense store) ----
    h = _layernorm(x, lnfg_ref[...], lnfb_ref[...])
    out_ref[...] = (jnp.dot(h.astype(jnp.bfloat16), wlm_ref[...],
                            preferred_element_type=jnp.float32) + blm_ref[...])


def run_gpt(idx2d, batch, seq, params):
    BT = idx2d.shape[0]
    flat = (params['tok_emb'], params['pos_emb'],
            params['ln1_g'], params['ln1_b'], params['w_qkv'], params['w_proj'],
            params['b_proj'], params['ln2_g'], params['ln2_b'],
            params['w1'], params['b1'], params['w2'], params['b2'],
            params['ln_f_g'], params['ln_f_b'], params['w_lm'], params['b_lm'])

    in_specs = [pl.BlockSpec(idx2d.shape, lambda i: (0, 0))]
    for p in flat:
        in_specs.append(pl.BlockSpec(p.shape, lambda i, nd=p.ndim: (0,) * nd))

    kernel = functools.partial(gpt_kernel, batch=batch, seq=seq)
    return pl.pallas_call(
        kernel,
        out_shape=jax.ShapeDtypeStruct((BT, VOCAB_PAD), jnp.float32),
        grid=(1,),
        in_specs=in_specs,
        out_specs=pl.BlockSpec((BT, VOCAB_PAD), lambda i: (0, 0)),
        compiler_params=pltpu.CompilerParams(
            dimension_semantics=("arbitrary",),
            vmem_limit_bytes=64 * 1024 * 1024),
    )(idx2d, *flat)


# ----------------------------- parameter init ------------------------------
def init_params(key):
    """Deterministic init matching _init_weights: Linear/Embedding ~ N(0, 0.02),
    biases zero, LayerNorm gamma=1 beta=0. Weights pre-packed for the kernel:
    per-layer stacking, fused QKV with folded 1/sqrt(hs) scale, bf16 matmul
    weights, zero-padded token table / lm_head."""
    ks = iter(jax.random.split(key, 64))
    n = lambda shape: 0.02 * jax.random.normal(next(ks), shape, jnp.float32)
    L, C = N_LAYER, N_EMBD

    def make_wqkv():
        wq = n((C, C)) * (HEAD_SIZE ** -0.5)   # fold attention scale into Wq
        wk = n((C, C))
        wv = n((C, C))
        return jnp.concatenate([wq, wk, wv], axis=1)          # (C, 3C)

    tok = jnp.pad(n((VOCAB_SIZE, C)), ((0, VOCAB_PAD - VOCAB_SIZE), (0, 0)))
    w_lm = jnp.pad(n((C, VOCAB_SIZE)), ((0, 0), (0, VOCAB_PAD - VOCAB_SIZE)))

    bf = jnp.bfloat16
    params = {
        'tok_emb': tok,                                              # (128, C) f32
        'pos_emb': n((MAX_CONTEXT_LEN, C)),                          # (32, C)  f32
        'ln1_g': jnp.ones((L, 1, C), jnp.float32),
        'ln1_b': jnp.zeros((L, 1, C), jnp.float32),
        'w_qkv': jnp.stack([make_wqkv() for _ in range(L)]).astype(bf),   # (L,C,3C)
        'w_proj': jnp.stack([n((C, C)) for _ in range(L)]).astype(bf),    # (L,C,C)
        'b_proj': jnp.zeros((L, 1, C), jnp.float32),
        'ln2_g': jnp.ones((L, 1, C), jnp.float32),
        'ln2_b': jnp.zeros((L, 1, C), jnp.float32),
        'w1': jnp.stack([n((C, 4 * C)) for _ in range(L)]).astype(bf),    # (L,C,4C)
        'b1': jnp.zeros((L, 1, 4 * C), jnp.float32),
        'w2': jnp.stack([n((4 * C, C)) for _ in range(L)]).astype(bf),    # (L,4C,C)
        'b2': jnp.zeros((L, 1, C), jnp.float32),
        'ln_f_g': jnp.ones((1, C), jnp.float32),
        'ln_f_b': jnp.zeros((1, C), jnp.float32),
        'w_lm': w_lm.astype(bf),                                     # (C, 128) bf16
        'b_lm': jnp.zeros((1, VOCAB_PAD), jnp.float32),
    }
    return params


# ------------------------------- forward -----------------------------------
@jax.jit
def gpt_forward(idx, params):
    """idx: (B, T) int32 tokens -> logits (B, T, vocab_size).
    targets/loss path not exercised (targets=None => loss=None)."""
    # TODO(synk): cross-entropy loss path (targets != None) and generate() loop
    # are not implemented in-kernel; only the logits forward is translated.
    B, T = idx.shape
    idx2d = idx.reshape(B * T, 1).astype(jnp.int32)
    logits_pad = run_gpt(idx2d, B, T, params)                 # (BT, 128)
    logits = logits_pad.reshape(B, T, VOCAB_PAD)[..., :VOCAB_SIZE]
    return logits


# --------------------------------- main -------------------------------------
if __name__ == "__main__":
    key = jax.random.PRNGKey(0)
    k_param, k_idx = jax.random.split(key)

    params = init_params(k_param)

    B, T = 2, 16
    idx = jax.random.randint(k_idx, (B, T), 0, VOCAB_SIZE, dtype=jnp.int32)

    logits = gpt_forward(idx, params)
    jax.block_until_ready(logits)

    assert logits.shape == (B, T, VOCAB_SIZE), logits.shape
    assert logits.dtype == jnp.float32
    assert bool(jnp.all(jnp.isfinite(logits)))
    print("KERNEL_OK")
</pallas_src>

<mosaic_0001>
module attributes {stable_mosaic.version = 11 : i64} {
  func.func @gpt_kernel(%arg0: i32, %arg1: memref<32x1xi32, #tpu.memory_space<vmem>>, %arg2: memref<128x64xf32, #tpu.memory_space<vmem>>, %arg3: memref<32x64xf32, #tpu.memory_space<vmem>>, %arg4: memref<2x1x64xf32, #tpu.memory_space<vmem>>, %arg5: memref<2x1x64xf32, #tpu.memory_space<vmem>>, %arg6: memref<2x64x192xbf16, #tpu.memory_space<vmem>>, %arg7: memref<2x64x64xbf16, #tpu.memory_space<vmem>>, %arg8: memref<2x1x64xf32, #tpu.memory_space<vmem>>, %arg9: memref<2x1x64xf32, #tpu.memory_space<vmem>>, %arg10: memref<2x1x64xf32, #tpu.memory_space<vmem>>, %arg11: memref<2x64x256xbf16, #tpu.memory_space<vmem>>, %arg12: memref<2x1x256xf32, #tpu.memory_space<vmem>>, %arg13: memref<2x256x64xbf16, #tpu.memory_space<vmem>>, %arg14: memref<2x1x64xf32, #tpu.memory_space<vmem>>, %arg15: memref<1x64xf32, #tpu.memory_space<vmem>>, %arg16: memref<1x64xf32, #tpu.memory_space<vmem>>, %arg17: memref<64x128xbf16, #tpu.memory_space<vmem>>, %arg18: memref<1x128xf32, #tpu.memory_space<vmem>>, %arg19: memref<32x128xf32, #tpu.memory_space<vmem>>) attributes {dimension_semantics = [#tpu.dimension_semantics<arbitrary>], iteration_bounds = array<i64: 1>, scalar_prefetch = 0 : i64, scratch_operands = 0 : i64, tpu.core_type = #tpu.core_type<tc>, window_params = [{pipeline_mode = #tpu.pipeline_mode<synchronous>, transform_indices = @transform_0, window_bounds = array<i64: 32, 1>}, {pipeline_mode = #tpu.pipeline_mode<synchronous>, transform_indices = @transform_1, window_bounds = array<i64: 128, 64>}, {pipeline_mode = #tpu.pipeline_mode<synchronous>, transform_indices = @transform_2, window_bounds = array<i64: 32, 64>}, {pipeline_mode = #tpu.pipeline_mode<synchronous>, transform_indices = @transform_3, window_bounds = array<i64: 2, 1, 64>}, {pipeline_mode = #tpu.pipeline_mode<synchronous>, transform_indices = @transform_4, window_bounds = array<i64: 2, 1, 64>}, {pipeline_mode = #tpu.pipeline_mode<synchronous>, transform_indices = @transform_5, window_bounds = array<i64: 2, 64, 192>}, {pipeline_mode = #tpu.pipeline_mode<synchronous>, transform_indices = @transform_6, window_bounds = array<i64: 2, 64, 64>}, {pipeline_mode = #tpu.pipeline_mode<synchronous>, transform_indices = @transform_7, window_bounds = array<i64: 2, 1, 64>}, {pipeline_mode = #tpu.pipeline_mode<synchronous>, transform_indices = @transform_8, window_bounds = array<i64: 2, 1, 64>}, {pipeline_mode = #tpu.pipeline_mode<synchronous>, transform_indices = @transform_9, window_bounds = array<i64: 2, 1, 64>}, {pipeline_mode = #tpu.pipeline_mode<synchronous>, transform_indices = @transform_10, window_bounds = array<i64: 2, 64, 256>}, {pipeline_mode = #tpu.pipeline_mode<synchronous>, transform_indices = @transform_11, window_bounds = array<i64: 2, 1, 256>}, {pipeline_mode = #tpu.pipeline_mode<synchronous>, transform_indices = @transform_12, window_bounds = array<i64: 2, 256, 64>}, {pipeline_mode = #tpu.pipeline_mode<synchronous>, transform_indices = @transform_13, window_bounds = array<i64: 2, 1, 64>}, {pipeline_mode = #tpu.pipeline_mode<synchronous>, transform_indices = @transform_14, window_bounds = array<i64: 1, 64>}, {pipeline_mode = #tpu.pipeline_mode<synchronous>, transform_indices = @transform_15, window_bounds = array<i64: 1, 64>}, {pipeline_mode = #tpu.pipeline_mode<synchronous>, transform_indices = @transform_16, window_bounds = array<i64: 64, 128>}, {pipeline_mode = #tpu.pipeline_mode<synchronous>, transform_indices = @transform_17, window_bounds = array<i64: 1, 128>}, {pipeline_mode = #tpu.pipeline_mode<synchronous>, transform_indices = @transform_18, window_bounds = array<i64: 32, 128>}]} {
    %c0 = arith.constant 0 : index
    %c0_0 = arith.constant 0 : index
    %0 = vector.load %arg1[%c0, %c0_0] : memref<32x1xi32, #tpu.memory_space<vmem>>, vector<32x1xi32>
    %1 = tpu.iota {dimensions = array<i32: 1>} : vector<32x128xi32>
    %2 = vector.broadcast %0 : vector<32x1xi32> to vector<32x128xi32>
    %3 = arith.cmpi eq, %1, %2 : vector<32x128xi32>
    %4 = arith.extui %3 : vector<32x128xi1> to vector<32x128xi32>
    %5 = arith.sitofp %4 : vector<32x128xi32> to vector<32x128xf32>
    %c0_1 = arith.constant 0 : index
    %c0_2 = arith.constant 0 : index
    %6 = vector.load %arg2[%c0_1, %c0_2] : memref<128x64xf32, #tpu.memory_space<vmem>>, vector<128x64xf32>
    %cst = arith.constant dense<0.000000e+00> : vector<32x64xf32>
    %7 = tpu.matmul %5, %6, %cst {dimension_numbers = #tpu.dot_dimension_numbers<[1], [0], [0], [1], [0, 0, 1, 1], [], []>} : vector<32x128xf32>, vector<128x64xf32>, vector<32x64xf32> -> vector<32x64xf32>
    %c0_3 = arith.constant 0 : index
    %c0_4 = arith.constant 0 : index
    %8 = vector.load %arg3[%c0_3, %c0_4] : memref<32x64xf32, #tpu.memory_space<vmem>>, vector<16x64xf32>
    %9 = vector.shape_cast %7 : vector<32x64xf32> to vector<2x16x64xf32>
    %10 = vector.shape_cast %8 : vector<16x64xf32> to vector<1x16x64xf32>
    %11 = vector.broadcast %10 : vector<1x16x64xf32> to vector<2x16x64xf32>
    %12 = arith.addf %9, %11 : vector<2x16x64xf32>
    %13 = vector.shape_cast %12 : vector<2x16x64xf32> to vector<32x64xf32>
    %14 = tpu.iota {dimensions = array<i32: 0>} : vector<16x16xi32>
    %15 = tpu.iota {dimensions = array<i32: 1>} : vector<16x16xi32>
    %16 = arith.cmpi sle, %15, %14 : vector<16x16xi32>
    %17 = vector.shape_cast %16 : vector<16x16xi1> to vector<1x16x16xi1>
    %c0_5 = arith.constant 0 : index
    %c0_6 = arith.constant 0 : index
    %c0_7 = arith.constant 0 : index
    %18 = vector.load %arg4[%c0_5, %c0_6, %c0_7] : memref<2x1x64xf32, #tpu.memory_space<vmem>>, vector<1x1x64xf32>
    %19 = vector.shape_cast %18 : vector<1x1x64xf32> to vector<1x64xf32>
    %c0_8 = arith.constant 0 : index
    %c0_9 = arith.constant 0 : index
    %c0_10 = arith.constant 0 : index
    %20 = vector.load %arg5[%c0_8, %c0_9, %c0_10] : memref<2x1x64xf32, #tpu.memory_space<vmem>>, vector<1x1x64xf32>
    %21 = vector.shape_cast %20 : vector<1x1x64xf32> to vector<1x64xf32>
    %cst_11 = arith.constant dense<0.000000e+00> : vector<32xf32>
    %22 = vector.multi_reduction <add>, %13, %cst_11 [1] : vector<32x64xf32> to vector<32xf32>
    %23 = vector.shape_cast %22 : vector<32xf32> to vector<32x1xf32>
    %cst_12 = arith.constant 6.400000e+01 : f32
    %24 = vector.broadcast %cst_12 : f32 to vector<32x1xf32>
    %25 = arith.divf %23, %24 : vector<32x1xf32>
    %26 = arith.mulf %13, %13 : vector<32x64xf32>
    %cst_13 = arith.constant dense<0.000000e+00> : vector<32xf32>
    %27 = vector.multi_reduction <add>, %26, %cst_13 [1] : vector<32x64xf32> to vector<32xf32>
    %28 = vector.shape_cast %27 : vector<32xf32> to vector<32x1xf32>
    %cst_14 = arith.constant 6.400000e+01 : f32
    %29 = vector.broadcast %cst_14 : f32 to vector<32x1xf32>
    %30 = arith.divf %28, %29 : vector<32x1xf32>
    %31 = arith.mulf %25, %25 : vector<32x1xf32>
    %32 = arith.subf %30, %31 : vector<32x1xf32>
    %33 = vector.broadcast %25 : vector<32x1xf32> to vector<32x64xf32>
    %34 = arith.subf %13, %33 : vector<32x64xf32>
    %cst_15 = arith.constant 9.99999974E-6 : f32
    %35 = vector.broadcast %cst_15 : f32 to vector<32x1xf32>
    %36 = arith.addf %32, %35 : vector<32x1xf32>
    %37 = math.rsqrt %36 : vector<32x1xf32>
    %38 = vector.broadcast %37 : vector<32x1xf32> to vector<32x64xf32>
    %39 = arith.mulf %34, %38 : vector<32x64xf32>
    %40 = vector.broadcast %19 : vector<1x64xf32> to vector<32x64xf32>
    %41 = arith.mulf %39, %40 : vector<32x64xf32>
    %42 = vector.broadcast %21 : vector<1x64xf32> to vector<32x64xf32>
    %43 = arith.addf %41, %42 : vector<32x64xf32>
    %44 = arith.truncf %43 : vector<32x64xf32> to vector<32x64xbf16>
    %c0_16 = arith.constant 0 : index
    %c0_17 = arith.constant 0 : index
    %c0_18 = arith.constant 0 : index
    %45 = vector.load %arg6[%c0_16, %c0_17, %c0_18] : memref<2x64x192xbf16, #tpu.memory_space<vmem>>, vector<1x64x192xbf16>
    %46 = vector.shape_cast %45 : vector<1x64x192xbf16> to vector<64x192xbf16>
    %cst_19 = arith.constant dense<0.000000e+00> : vector<32x192xf32>
    %47 = tpu.matmul %44, %46, %cst_19 {dimension_numbers = #tpu.dot_dimension_numbers<[1], [0], [0], [1], [0, 0, 1, 1], [], []>} : vector<32x64xbf16>, vector<64x192xbf16>, vector<32x192xf32> -> vector<32x192xf32>
    %48 = vector.shape_cast %47 : vector<32x192xf32> to vector<2x16x192xf32>
    %49 = vector.extract_strided_slice %48 {offsets = [0, 0, 0], sizes = [2, 16, 16], strides = [1, 1, 1]} : vector<2x16x192xf32> to vector<2x16x16xf32>
    %50 = arith.truncf %49 : vector<2x16x16xf32> to vector<2x16x16xbf16>
    %51 = vector.extract_strided_slice %48 {offsets = [0, 0, 64], sizes = [2, 16, 16], strides = [1, 1, 1]} : vector<2x16x192xf32> to vector<2x16x16xf32>
    %52 = arith.truncf %51 : vector<2x16x16xf32> to vector<2x16x16xbf16>
    %53 = vector.extract_strided_slice %48 {offsets = [0, 0, 128], sizes = [2, 16, 16], strides = [1, 1, 1]} : vector<2x16x192xf32> to vector<2x16x16xf32>
    %54 = arith.truncf %53 : vector<2x16x16xf32> to vector<2x16x16xbf16>
    "tpu.trace_start"() <{level = 10 : i32, message = "bqd,bkd->bqk"}> : () -> ()
    %cst_20 = arith.constant dense<0.000000e+00> : vector<2x16x16xf32>
    %55 = tpu.matmul %50, %52, %cst_20 {dimension_numbers = #tpu.dot_dimension_numbers<[2], [2], [1], [1], [0, 0, 0, 1, 1, 1], [0], [0]>} : vector<2x16x16xbf16>, vector<2x16x16xbf16>, vector<2x16x16xf32> -> vector<2x16x16xf32>
    %cst_21 = arith.constant -1.000000e+30 : f32
    "tpu.trace_stop"() : () -> ()
    %56 = vector.shape_cast %17 : vector<1x16x16xi1> to vector<1x16x16xi1>
    %57 = vector.broadcast %56 : vector<1x16x16xi1> to vector<2x16x16xi1>
    %58 = vector.broadcast %cst_21 : f32 to vector<2x16x16xf32>
    %59 = arith.select %57, %55, %58 : vector<2x16x16xi1>, vector<2x16x16xf32>
    %cst_22 = arith.constant dense<0xFF800000> : vector<2x16xf32>
    %60 = vector.multi_reduction <maximumf>, %59, %cst_22 [2] : vector<2x16x16xf32> to vector<2x16xf32>
    %61 = vector.shape_cast %60 : vector<2x16xf32> to vector<2x16x1xf32>
    %62 = vector.broadcast %61 : vector<2x16x1xf32> to vector<2x16x16xf32>
    %63 = arith.subf %59, %62 : vector<2x16x16xf32>
    %64 = math.exp %63 : vector<2x16x16xf32>
    %cst_23 = arith.constant dense<0.000000e+00> : vector<2x16xf32>
    %65 = vector.multi_reduction <add>, %64, %cst_23 [2] : vector<2x16x16xf32> to vector<2x16xf32>
    %66 = vector.shape_cast %65 : vector<2x16xf32> to vector<2x16x1xf32>
    %67 = tpu.reciprocal %66 {approx = true} : vector<2x16x1xf32> -> vector<2x16x1xf32>
    %68 = vector.broadcast %67 : vector<2x16x1xf32> to vector<2x16x16xf32>
    %69 = arith.mulf %64, %68 : vector<2x16x16xf32>
    %70 = arith.truncf %69 : vector<2x16x16xf32> to vector<2x16x16xbf16>
    "tpu.trace_start"() <{level = 10 : i32, message = "bqk,bkd->bqd"}> : () -> ()
    %cst_24 = arith.constant dense<0.000000e+00> : vector<2x16x16xf32>
    %71 = tpu.matmul %70, %54, %cst_24 {dimension_numbers = #tpu.dot_dimension_numbers<[2], [1], [1], [2], [0, 0, 0, 1, 1, 2], [0], [0]>} : vector<2x16x16xbf16>, vector<2x16x16xbf16>, vector<2x16x16xf32> -> vector<2x16x16xf32>
    "tpu.trace_stop"() : () -> ()
    %72 = vector.shape_cast %71 : vector<2x16x16xf32> to vector<32x16xf32>
    %73 = vector.extract_strided_slice %48 {offsets = [0, 0, 16], sizes = [2, 16, 16], strides = [1, 1, 1]} : vector<2x16x192xf32> to vector<2x16x16xf32>
    %74 = arith.truncf %73 : vector<2x16x16xf32> to vector<2x16x16xbf16>
    %75 = vector.extract_strided_slice %48 {offsets = [0, 0, 80], sizes = [2, 16, 16], strides = [1, 1, 1]} : vector<2x16x192xf32> to vector<2x16x16xf32>
    %76 = arith.truncf %75 : vector<2x16x16xf32> to vector<2x16x16xbf16>
    %77 = vector.extract_strided_slice %48 {offsets = [0, 0, 144], sizes = [2, 16, 16], strides = [1, 1, 1]} : vector<2x16x192xf32> to vector<2x16x16xf32>
    %78 = arith.truncf %77 : vector<2x16x16xf32> to vector<2x16x16xbf16>
    "tpu.trace_start"() <{level = 10 : i32, message = "bqd,bkd->bqk"}> : () -> ()
    %cst_25 = arith.constant dense<0.000000e+00> : vector<2x16x16xf32>
    %79 = tpu.matmul %74, %76, %cst_25 {dimension_numbers = #tpu.dot_dimension_numbers<[2], [2], [1], [1], [0, 0, 0, 1, 1, 1], [0], [0]>} : vector<2x16x16xbf16>, vector<2x16x16xbf16>, vector<2x16x16xf32> -> vector<2x16x16xf32>
    %cst_26 = arith.constant -1.000000e+30 : f32
    "tpu.trace_stop"() : () -> ()
    %80 = vector.shape_cast %17 : vector<1x16x16xi1> to vector<1x16x16xi1>
    %81 = vector.broadcast %80 : vector<1x16x16xi1> to vector<2x16x16xi1>
    %82 = vector.broadcast %cst_26 : f32 to vector<2x16x16xf32>
    %83 = arith.select %81, %79, %82 : vector<2x16x16xi1>, vector<2x16x16xf32>
    %cst_27 = arith.constant dense<0xFF800000> : vector<2x16xf32>
    %84 = vector.multi_reduction <maximumf>, %83, %cst_27 [2] : vector<2x16x16xf32> to vector<2x16xf32>
    %85 = vector.shape_cast %84 : vector<2x16xf32> to vector<2x16x1xf32>
    %86 = vector.broadcast %85 : vector<2x16x1xf32> to vector<2x16x16xf32>
    %87 = arith.subf %83, %86 : vector<2x16x16xf32>
    %88 = math.exp %87 : vector<2x16x16xf32>
    %cst_28 = arith.constant dense<0.000000e+00> : vector<2x16xf32>
    %89 = vector.multi_reduction <add>, %88, %cst_28 [2] : vector<2x16x16xf32> to vector<2x16xf32>
    %90 = vector.shape_cast %89 : vector<2x16xf32> to vector<2x16x1xf32>
    %91 = tpu.reciprocal %90 {approx = true} : vector<2x16x1xf32> -> vector<2x16x1xf32>
    %92 = vector.broadcast %91 : vector<2x16x1xf32> to vector<2x16x16xf32>
    %93 = arith.mulf %88, %92 : vector<2x16x16xf32>
    %94 = arith.truncf %93 : vector<2x16x16xf32> to vector<2x16x16xbf16>
    "tpu.trace_start"() <{level = 10 : i32, message = "bqk,bkd->bqd"}> : () -> ()
    %cst_29 = arith.constant dense<0.000000e+00> : vector<2x16x16xf32>
    %95 = tpu.matmul %94, %78, %cst_29 {dimension_numbers = #tpu.dot_dimension_numbers<[2], [1], [1], [2], [0, 0, 0, 1, 1, 2], [0], [0]>} : vector<2x16x16xbf16>, vector<2x16x16xbf16>, vector<2x16x16xf32> -> vector<2x16x16xf32>
    "tpu.trace_stop"() : () -> ()
    %96 = vector.shape_cast %95 : vector<2x16x16xf32> to vector<32x16xf32>
    %97 = vector.extract_strided_slice %48 {offsets = [0, 0, 32], sizes = [2, 16, 16], strides = [1, 1, 1]} : vector<2x16x192xf32> to vector<2x16x16xf32>
    %98 = arith.truncf %97 : vector<2x16x16xf32> to vector<2x16x16xbf16>
    %99 = vector.extract_strided_slice %48 {offsets = [0, 0, 96], sizes = [2, 16, 16], strides = [1, 1, 1]} : vector<2x16x192xf32> to vector<2x16x16xf32>
    %100 = arith.truncf %99 : vector<2x16x16xf32> to vector<2x16x16xbf16>
    %101 = vector.extract_strided_slice %48 {offsets = [0, 0, 160], sizes = [2, 16, 16], strides = [1, 1, 1]} : vector<2x16x192xf32> to vector<2x16x16xf32>
    %102 = arith.truncf %101 : vector<2x16x16xf32> to vector<2x16x16xbf16>
    "tpu.trace_start"() <{level = 10 : i32, message = "bqd,bkd->bqk"}> : () -> ()
    %cst_30 = arith.constant dense<0.000000e+00> : vector<2x16x16xf32>
    %103 = tpu.matmul %98, %100, %cst_30 {dimension_numbers = #tpu.dot_dimension_numbers<[2], [2], [1], [1], [0, 0, 0, 1, 1, 1], [0], [0]>} : vector<2x16x16xbf16>, vector<2x16x16xbf16>, vector<2x16x16xf32> -> vector<2x16x16xf32>
    %cst_31 = arith.constant -1.000000e+30 : f32
    "tpu.trace_stop"() : () -> ()
    %104 = vector.shape_cast %17 : vector<1x16x16xi1> to vector<1x16x16xi1>
    %105 = vector.broadcast %104 : vector<1x16x16xi1> to vector<2x16x16xi1>
    %106 = vector.broadcast %cst_31 : f32 to vector<2x16x16xf32>
    %107 = arith.select %105, %103, %106 : vector<2x16x16xi1>, vector<2x16x16xf32>
    %cst_32 = arith.constant dense<0xFF800000> : vector<2x16xf32>
    %108 = vector.multi_reduction <maximumf>, %107, %cst_32 [2] : vector<2x16x16xf32> to vector<2x16xf32>
    %109 = vector.shape_cast %108 : vector<2x16xf32> to vector<2x16x1xf32>
    %110 = vector.broadcast %109 : vector<2x16x1xf32> to vector<2x16x16xf32>
    %111 = arith.subf %107, %110 : vector<2x16x16xf32>
    %112 = math.exp %111 : vector<2x16x16xf32>
    %cst_33 = arith.constant dense<0.000000e+00> : vector<2x16xf32>
    %113 = vector.multi_reduction <add>, %112, %cst_33 [2] : vector<2x16x16xf32> to vector<2x16xf32>
    %114 = vector.shape_cast %113 : vector<2x16xf32> to vector<2x16x1xf32>
    %115 = tpu.reciprocal %114 {approx = true} : vector<2x16x1xf32> -> vector<2x16x1xf32>
    %116 = vector.broadcast %115 : vector<2x16x1xf32> to vector<2x16x16xf32>
    %117 = arith.mulf %112, %116 : vector<2x16x16xf32>
    %118 = arith.truncf %117 : vector<2x16x16xf32> to vector<2x16x16xbf16>
    "tpu.trace_start"() <{level = 10 : i32, message = "bqk,bkd->bqd"}> : () -> ()
    %cst_34 = arith.constant dense<0.000000e+00> : vector<2x16x16xf32>
    %119 = tpu.matmul %118, %102, %cst_34 {dimension_numbers = #tpu.dot_dimension_numbers<[2], [1], [1], [2], [0, 0, 0, 1, 1, 2], [0], [0]>} : vector<2x16x16xbf16>, vector<2x16x16xbf16>, vector<2x16x16xf32> -> vector<2x16x16xf32>
    "tpu.trace_stop"() : () -> ()
    %120 = vector.shape_cast %119 : vector<2x16x16xf32> to vector<32x16xf32>
    %121 = vector.extract_strided_slice %48 {offsets = [0, 0, 48], sizes = [2, 16, 16], strides = [1, 1, 1]} : vector<2x16x192xf32> to vector<2x16x16xf32>
    %122 = arith.truncf %121 : vector<2x16x16xf32> to vector<2x16x16xbf16>
    %123 = vector.extract_strided_slice %48 {offsets = [0, 0, 112], sizes = [2, 16, 16], strides = [1, 1, 1]} : vector<2x16x192xf32> to vector<2x16x16xf32>
    %124 = arith.truncf %123 : vector<2x16x16xf32> to vector<2x16x16xbf16>
    %125 = vector.extract_strided_slice %48 {offsets = [0, 0, 176], sizes = [2, 16, 16], strides = [1, 1, 1]} : vector<2x16x192xf32> to vector<2x16x16xf32>
    %126 = arith.truncf %125 : vector<2x16x16xf32> to vector<2x16x16xbf16>
    "tpu.trace_start"() <{level = 10 : i32, message = "bqd,bkd->bqk"}> : () -> ()
    %cst_35 = arith.constant dense<0.000000e+00> : vector<2x16x16xf32>
    %127 = tpu.matmul %122, %124, %cst_35 {dimension_numbers = #tpu.dot_dimension_numbers<[2], [2], [1], [1], [0, 0, 0, 1, 1, 1], [0], [0]>} : vector<2x16x16xbf16>, vector<2x16x16xbf16>, vector<2x16x16xf32> -> vector<2x16x16xf32>
    %cst_36 = arith.constant -1.000000e+30 : f32
    "tpu.trace_stop"() : () -> ()
    %128 = vector.shape_cast %17 : vector<1x16x16xi1> to vector<1x16x16xi1>
    %129 = vector.broadcast %128 : vector<1x16x16xi1> to vector<2x16x16xi1>
    %130 = vector.broadcast %cst_36 : f32 to vector<2x16x16xf32>
    %131 = arith.select %129, %127, %130 : vector<2x16x16xi1>, vector<2x16x16xf32>
    %cst_37 = arith.constant dense<0xFF800000> : vector<2x16xf32>
    %132 = vector.multi_reduction <maximumf>, %131, %cst_37 [2] : vector<2x16x16xf32> to vector<2x16xf32>
    %133 = vector.shape_cast %132 : vector<2x16xf32> to vector<2x16x1xf32>
    %134 = vector.broadcast %133 : vector<2x16x1xf32> to vector<2x16x16xf32>
    %135 = arith.subf %131, %134 : vector<2x16x16xf32>
    %136 = math.exp %135 : vector<2x16x16xf32>
    %cst_38 = arith.constant dense<0.000000e+00> : vector<2x16xf32>
    %137 = vector.multi_reduction <add>, %136, %cst_38 [2] : vector<2x16x16xf32> to vector<2x16xf32>
    %138 = vector.shape_cast %137 : vector<2x16xf32> to vector<2x16x1xf32>
    %139 = tpu.reciprocal %138 {approx = true} : vector<2x16x1xf32> -> vector<2x16x1xf32>
    %140 = vector.broadcast %139 : vector<2x16x1xf32> to vector<2x16x16xf32>
    %141 = arith.mulf %136, %140 : vector<2x16x16xf32>
    %142 = arith.truncf %141 : vector<2x16x16xf32> to vector<2x16x16xbf16>
    "tpu.trace_start"() <{level = 10 : i32, message = "bqk,bkd->bqd"}> : () -> ()
    %cst_39 = arith.constant dense<0.000000e+00> : vector<2x16x16xf32>
    %143 = tpu.matmul %142, %126, %cst_39 {dimension_numbers = #tpu.dot_dimension_numbers<[2], [1], [1], [2], [0, 0, 0, 1, 1, 2], [0], [0]>} : vector<2x16x16xbf16>, vector<2x16x16xbf16>, vector<2x16x16xf32> -> vector<2x16x16xf32>
    "tpu.trace_stop"() : () -> ()
    %144 = vector.shape_cast %143 : vector<2x16x16xf32> to vector<32x16xf32>
    %145 = tpu.concatenate %72, %96, %120, %144 in 1 : vector<32x16xf32>, vector<32x16xf32>, vector<32x16xf32>, vector<32x16xf32> -> vector<32x64xf32>
    %146 = arith.truncf %145 : vector<32x64xf32> to vector<32x64xbf16>
    %c0_40 = arith.constant 0 : index
    %c0_41 = arith.constant 0 : index
    %c0_42 = arith.constant 0 : index
    %147 = vector.load %arg7[%c0_40, %c0_41, %c0_42] : memref<2x64x64xbf16, #tpu.memory_space<vmem>>, vector<1x64x64xbf16>
    %148 = vector.shape_cast %147 : vector<1x64x64xbf16> to vector<64x64xbf16>
    %cst_43 = arith.constant dense<0.000000e+00> : vector<32x64xf32>
    %149 = tpu.matmul %146, %148, %cst_43 {dimension_numbers = #tpu.dot_dimension_numbers<[1], [0], [0], [1], [0, 0, 1, 1], [], []>} : vector<32x64xbf16>, vector<64x64xbf16>, vector<32x64xf32> -> vector<32x64xf32>
    %c0_44 = arith.constant 0 : index
    %c0_45 = arith.constant 0 : index
    %c0_46 = arith.constant 0 : index
    %150 = vector.load %arg8[%c0_44, %c0_45, %c0_46] : memref<2x1x64xf32, #tpu.memory_space<vmem>>, vector<1x1x64xf32>
    %151 = vector.shape_cast %150 : vector<1x1x64xf32> to vector<1x64xf32>
    %152 = vector.broadcast %151 : vector<1x64xf32> to vector<32x64xf32>
    %153 = arith.addf %149, %152 : vector<32x64xf32>
    %154 = arith.addf %13, %153 : vector<32x64xf32>
    %c0_47 = arith.constant 0 : index
    %c0_48 = arith.constant 0 : index
    %c0_49 = arith.constant 0 : index
    %155 = vector.load %arg9[%c0_47, %c0_48, %c0_49] : memref<2x1x64xf32, #tpu.memory_space<vmem>>, vector<1x1x64xf32>
    %156 = vector.shape_cast %155 : vector<1x1x64xf32> to vector<1x64xf32>
    %c0_50 = arith.constant 0 : index
    %c0_51 = arith.constant 0 : index
    %c0_52 = arith.constant 0 : index
    %157 = vector.load %arg10[%c0_50, %c0_51, %c0_52] : memref<2x1x64xf32, #tpu.memory_space<vmem>>, vector<1x1x64xf32>
    %158 = vector.shape_cast %157 : vector<1x1x64xf32> to vector<1x64xf32>
    %cst_53 = arith.constant dense<0.000000e+00> : vector<32xf32>
    %159 = vector.multi_reduction <add>, %154, %cst_53 [1] : vector<32x64xf32> to vector<32xf32>
    %160 = vector.shape_cast %159 : vector<32xf32> to vector<32x1xf32>
    %cst_54 = arith.constant 6.400000e+01 : f32
    %161 = vector.broadcast %cst_54 : f32 to vector<32x1xf32>
    %162 = arith.divf %160, %161 : vector<32x1xf32>
    %163 = arith.mulf %154, %154 : vector<32x64xf32>
    %cst_55 = arith.constant dense<0.000000e+00> : vector<32xf32>
    %164 = vector.multi_reduction <add>, %163, %cst_55 [1] : vector<32x64xf32> to vector<32xf32>
    %165 = vector.shape_cast %164 : vector<32xf32> to vector<32x1xf32>
    %cst_56 = arith.constant 6.400000e+01 : f32
    %166 = vector.broadcast %cst_56 : f32 to vector<32x1xf32>
    %167 = arith.divf %165, %166 : vector<32x1xf32>
    %168 = arith.mulf %162, %162 : vector<32x1xf32>
    %169 = arith.subf %167, %168 : vector<32x1xf32>
    %170 = vector.broadcast %162 : vector<32x1xf32> to vector<32x64xf32>
    %171 = arith.subf %154, %170 : vector<32x64xf32>
    %cst_57 = arith.constant 9.99999974E-6 : f32
    %172 = vector.broadcast %cst_57 : f32 to vector<32x1xf32>
    %173 = arith.addf %169, %172 : vector<32x1xf32>
    %174 = math.rsqrt %173 : vector<32x1xf32>
    %175 = vector.broadcast %174 : vector<32x1xf32> to vector<32x64xf32>
    %176 = arith.mulf %171, %175 : vector<32x64xf32>
    %177 = vector.broadcast %156 : vector<1x64xf32> to vector<32x64xf32>
    %178 = arith.mulf %176, %177 : vector<32x64xf32>
    %179 = vector.broadcast %158 : vector<1x64xf32> to vector<32x64xf32>
    %180 = arith.addf %178, %179 : vector<32x64xf32>
    %181 = arith.truncf %180 : vector<32x64xf32> to vector<32x64xbf16>
    %c0_58 = arith.constant 0 : index
    %c0_59 = arith.constant 0 : index
    %c0_60 = arith.constant 0 : index
    %182 = vector.load %arg11[%c0_58, %c0_59, %c0_60] : memref<2x64x256xbf16, #tpu.memory_space<vmem>>, vector<1x64x256xbf16>
    %183 = vector.shape_cast %182 : vector<1x64x256xbf16> to vector<64x256xbf16>
    %cst_61 = arith.constant dense<0.000000e+00> : vector<32x256xf32>
    %184 = tpu.matmul %181, %183, %cst_61 {dimension_numbers = #tpu.dot_dimension_numbers<[1], [0], [0], [1], [0, 0, 1, 1], [], []>} : vector<32x64xbf16>, vector<64x256xbf16>, vector<32x256xf32> -> vector<32x256xf32>
    %c0_62 = arith.constant 0 : index
    %c0_63 = arith.constant 0 : index
    %c0_64 = arith.constant 0 : index
    %185 = vector.load %arg12[%c0_62, %c0_63, %c0_64] : memref<2x1x256xf32, #tpu.memory_space<vmem>>, vector<1x1x256xf32>
    %186 = vector.shape_cast %185 : vector<1x1x256xf32> to vector<1x256xf32>
    %187 = vector.broadcast %186 : vector<1x256xf32> to vector<32x256xf32>
    %188 = arith.addf %184, %187 : vector<32x256xf32>
    %cst_65 = arith.constant 0.000000e+00 : f32
    %189 = vector.broadcast %cst_65 : f32 to vector<32x256xf32>
    %190 = arith.maximumf %188, %189 : vector<32x256xf32>
    %191 = arith.truncf %190 : vector<32x256xf32> to vector<32x256xbf16>
    %c0_66 = arith.constant 0 : index
    %c0_67 = arith.constant 0 : index
    %c0_68 = arith.constant 0 : index
    %192 = vector.load %arg13[%c0_66, %c0_67, %c0_68] : memref<2x256x64xbf16, #tpu.memory_space<vmem>>, vector<1x256x64xbf16>
    %193 = vector.shape_cast %192 : vector<1x256x64xbf16> to vector<256x64xbf16>
    %cst_69 = arith.constant dense<0.000000e+00> : vector<32x64xf32>
    %194 = tpu.matmul %191, %193, %cst_69 {dimension_numbers = #tpu.dot_dimension_numbers<[1], [0], [0], [1], [0, 0, 1, 1], [], []>} : vector<32x256xbf16>, vector<256x64xbf16>, vector<32x64xf32> -> vector<32x64xf32>
    %c0_70 = arith.constant 0 : index
    %c0_71 = arith.constant 0 : index
    %c0_72 = arith.constant 0 : index
    %195 = vector.load %arg14[%c0_70, %c0_71, %c0_72] : memref<2x1x64xf32, #tpu.memory_space<vmem>>, vector<1x1x64xf32>
    %196 = vector.shape_cast %195 : vector<1x1x64xf32> to vector<1x64xf32>
    %197 = vector.broadcast %196 : vector<1x64xf32> to vector<32x64xf32>
    %198 = arith.addf %194, %197 : vector<32x64xf32>
    %199 = arith.addf %154, %198 : vector<32x64xf32>
    %c1 = arith.constant 1 : index
    %c0_73 = arith.constant 0 : index
    %c0_74 = arith.constant 0 : index
    %200 = vector.load %arg4[%c1, %c0_73, %c0_74] : memref<2x1x64xf32, #tpu.memory_space<vmem>>, vector<1x1x64xf32>
    %201 = vector.shape_cast %200 : vector<1x1x64xf32> to vector<1x64xf32>
    %c1_75 = arith.constant 1 : index
    %c0_76 = arith.constant 0 : index
    %c0_77 = arith.constant 0 : index
    %202 = vector.load %arg5[%c1_75, %c0_76, %c0_77] : memref<2x1x64xf32, #tpu.memory_space<vmem>>, vector<1x1x64xf32>
    %203 = vector.shape_cast %202 : vector<1x1x64xf32> to vector<1x64xf32>
    %cst_78 = arith.constant dense<0.000000e+00> : vector<32xf32>
    %204 = vector.multi_reduction <add>, %199, %cst_78 [1] : vector<32x64xf32> to vector<32xf32>
    %205 = vector.shape_cast %204 : vector<32xf32> to vector<32x1xf32>
    %cst_79 = arith.constant 6.400000e+01 : f32
    %206 = vector.broadcast %cst_79 : f32 to vector<32x1xf32>
    %207 = arith.divf %205, %206 : vector<32x1xf32>
    %208 = arith.mulf %199, %199 : vector<32x64xf32>
    %cst_80 = arith.constant dense<0.000000e+00> : vector<32xf32>
    %209 = vector.multi_reduction <add>, %208, %cst_80 [1] : vector<32x64xf32> to vector<32xf32>
    %210 = vector.shape_cast %209 : vector<32xf32> to vector<32x1xf32>
    %cst_81 = arith.constant 6.400000e+01 : f32
    %211 = vector.broadcast %cst_81 : f32 to vector<32x1xf32>
    %212 = arith.divf %210, %211 : vector<32x1xf32>
    %213 = arith.mulf %207, %207 : vector<32x1xf32>
    %214 = arith.subf %212, %213 : vector<32x1xf32>
    %215 = vector.broadcast %207 : vector<32x1xf32> to vector<32x64xf32>
    %216 = arith.subf %199, %215 : vector<32x64xf32>
    %cst_82 = arith.constant 9.99999974E-6 : f32
    %217 = vector.broadcast %cst_82 : f32 to vector<32x1xf32>
    %218 = arith.addf %214, %217 : vector<32x1xf32>
    %219 = math.rsqrt %218 : vector<32x1xf32>
    %220 = vector.broadcast %219 : vector<32x1xf32> to vector<32x64xf32>
    %221 = arith.mulf %216, %220 : vector<32x64xf32>
    %222 = vector.broadcast %201 : vector<1x64xf32> to vector<32x64xf32>
    %223 = arith.mulf %221, %222 : vector<32x64xf32>
    %224 = vector.broadcast %203 : vector<1x64xf32> to vector<32x64xf32>
    %225 = arith.addf %223, %224 : vector<32x64xf32>
    %226 = arith.truncf %225 : vector<32x64xf32> to vector<32x64xbf16>
    %c1_83 = arith.constant 1 : index
    %c0_84 = arith.constant 0 : index
    %c0_85 = arith.constant 0 : index
    %227 = vector.load %arg6[%c1_83, %c0_84, %c0_85] : memref<2x64x192xbf16, #tpu.memory_space<vmem>>, vector<1x64x192xbf16>
    %228 = vector.shape_cast %227 : vector<1x64x192xbf16> to vector<64x192xbf16>
    %cst_86 = arith.constant dense<0.000000e+00> : vector<32x192xf32>
    %229 = tpu.matmul %226, %228, %cst_86 {dimension_numbers = #tpu.dot_dimension_numbers<[1], [0], [0], [1], [0, 0, 1, 1], [], []>} : vector<32x64xbf16>, vector<64x192xbf16>, vector<32x192xf32> -> vector<32x192xf32>
    %230 = vector.shape_cast %229 : vector<32x192xf32> to vector<2x16x192xf32>
    %231 = vector.extract_strided_slice %230 {offsets = [0, 0, 0], sizes = [2, 16, 16], strides = [1, 1, 1]} : vector<2x16x192xf32> to vector<2x16x16xf32>
    %232 = arith.truncf %231 : vector<2x16x16xf32> to vector<2x16x16xbf16>
    %233 = vector.extract_strided_slice %230 {offsets = [0, 0, 64], sizes = [2, 16, 16], strides = [1, 1, 1]} : vector<2x16x192xf32> to vector<2x16x16xf32>
    %234 = arith.truncf %233 : vector<2x16x16xf32> to vector<2x16x16xbf16>
    %235 = vector.extract_strided_slice %230 {offsets = [0, 0, 128], sizes = [2, 16, 16], strides = [1, 1, 1]} : vector<2x16x192xf32> to vector<2x16x16xf32>
    %236 = arith.truncf %235 : vector<2x16x16xf32> to vector<2x16x16xbf16>
    "tpu.trace_start"() <{level = 10 : i32, message = "bqd,bkd->bqk"}> : () -> ()
    %cst_87 = arith.constant dense<0.000000e+00> : vector<2x16x16xf32>
    %237 = tpu.matmul %232, %234, %cst_87 {dimension_numbers = #tpu.dot_dimension_numbers<[2], [2], [1], [1], [0, 0, 0, 1, 1, 1], [0], [0]>} : vector<2x16x16xbf16>, vector<2x16x16xbf16>, vector<2x16x16xf32> -> vector<2x16x16xf32>
    %cst_88 = arith.constant -1.000000e+30 : f32
    "tpu.trace_stop"() : () -> ()
    %238 = vector.shape_cast %17 : vector<1x16x16xi1> to vector<1x16x16xi1>
    %239 = vector.broadcast %238 : vector<1x16x16xi1> to vector<2x16x16xi1>
    %240 = vector.broadcast %cst_88 : f32 to vector<2x16x16xf32>
    %241 = arith.select %239, %237, %240 : vector<2x16x16xi1>, vector<2x16x16xf32>
    %cst_89 = arith.constant dense<0xFF800000> : vector<2x16xf32>
    %242 = vector.multi_reduction <maximumf>, %241, %cst_89 [2] : vector<2x16x16xf32> to vector<2x16xf32>
    %243 = vector.shape_cast %242 : vector<2x16xf32> to vector<2x16x1xf32>
    %244 = vector.broadcast %243 : vector<2x16x1xf32> to vector<2x16x16xf32>
    %245 = arith.subf %241, %244 : vector<2x16x16xf32>
    %246 = math.exp %245 : vector<2x16x16xf32>
    %cst_90 = arith.constant dense<0.000000e+00> : vector<2x16xf32>
    %247 = vector.multi_reduction <add>, %246, %cst_90 [2] : vector<2x16x16xf32> to vector<2x16xf32>
    %248 = vector.shape_cast %247 : vector<2x16xf32> to vector<2x16x1xf32>
    %249 = tpu.reciprocal %248 {approx = true} : vector<2x16x1xf32> -> vector<2x16x1xf32>
    %250 = vector.broadcast %249 : vector<2x16x1xf32> to vector<2x16x16xf32>
    %251 = arith.mulf %246, %250 : vector<2x16x16xf32>
    %252 = arith.truncf %251 : vector<2x16x16xf32> to vector<2x16x16xbf16>
    "tpu.trace_start"() <{level = 10 : i32, message = "bqk,bkd->bqd"}> : () -> ()
    %cst_91 = arith.constant dense<0.000000e+00> : vector<2x16x16xf32>
    %253 = tpu.matmul %252, %236, %cst_91 {dimension_numbers = #tpu.dot_dimension_numbers<[2], [1], [1], [2], [0, 0, 0, 1, 1, 2], [0], [0]>} : vector<2x16x16xbf16>, vector<2x16x16xbf16>, vector<2x16x16xf32> -> vector<2x16x16xf32>
    "tpu.trace_stop"() : () -> ()
    %254 = vector.shape_cast %253 : vector<2x16x16xf32> to vector<32x16xf32>
    %255 = vector.extract_strided_slice %230 {offsets = [0, 0, 16], sizes = [2, 16, 16], strides = [1, 1, 1]} : vector<2x16x192xf32> to vector<2x16x16xf32>
    %256 = arith.truncf %255 : vector<2x16x16xf32> to vector<2x16x16xbf16>
    %257 = vector.extract_strided_slice %230 {offsets = [0, 0, 80], sizes = [2, 16, 16], strides = [1, 1, 1]} : vector<2x16x192xf32> to vector<2x16x16xf32>
    %258 = arith.truncf %257 : vector<2x16x16xf32> to vector<2x16x16xbf16>
    %259 = vector.extract_strided_slice %230 {offsets = [0, 0, 144], sizes = [2, 16, 16], strides = [1, 1, 1]} : vector<2x16x192xf32> to vector<2x16x16xf32>
    %260 = arith.truncf %259 : vector<2x16x16xf32> to vector<2x16x16xbf16>
    "tpu.trace_start"() <{level = 10 : i32, message = "bqd,bkd->bqk"}> : () -> ()
    %cst_92 = arith.constant dense<0.000000e+00> : vector<2x16x16xf32>
    %261 = tpu.matmul %256, %258, %cst_92 {dimension_numbers = #tpu.dot_dimension_numbers<[2], [2], [1], [1], [0, 0, 0, 1, 1, 1], [0], [0]>} : vector<2x16x16xbf16>, vector<2x16x16xbf16>, vector<2x16x16xf32> -> vector<2x16x16xf32>
    %cst_93 = arith.constant -1.000000e+30 : f32
    "tpu.trace_stop"() : () -> ()
    %262 = vector.shape_cast %17 : vector<1x16x16xi1> to vector<1x16x16xi1>
    %263 = vector.broadcast %262 : vector<1x16x16xi1> to vector<2x16x16xi1>
    %264 = vector.broadcast %cst_93 : f32 to vector<2x16x16xf32>
    %265 = arith.select %263, %261, %264 : vector<2x16x16xi1>, vector<2x16x16xf32>
    %cst_94 = arith.constant dense<0xFF800000> : vector<2x16xf32>
    %266 = vector.multi_reduction <maximumf>, %265, %cst_94 [2] : vector<2x16x16xf32> to vector<2x16xf32>
    %267 = vector.shape_cast %266 : vector<2x16xf32> to vector<2x16x1xf32>
    %268 = vector.broadcast %267 : vector<2x16x1xf32> to vector<2x16x16xf32>
    %269 = arith.subf %265, %268 : vector<2x16x16xf32>
    %270 = math.exp %269 : vector<2x16x16xf32>
    %cst_95 = arith.constant dense<0.000000e+00> : vector<2x16xf32>
    %271 = vector.multi_reduction <add>, %270, %cst_95 [2] : vector<2x16x16xf32> to vector<2x16xf32>
    %272 = vector.shape_cast %271 : vector<2x16xf32> to vector<2x16x1xf32>
    %273 = tpu.reciprocal %272 {approx = true} : vector<2x16x1xf32> -> vector<2x16x1xf32>
    %274 = vector.broadcast %273 : vector<2x16x1xf32> to vector<2x16x16xf32>
    %275 = arith.mulf %270, %274 : vector<2x16x16xf32>
    %276 = arith.truncf %275 : vector<2x16x16xf32> to vector<2x16x16xbf16>
    "tpu.trace_start"() <{level = 10 : i32, message = "bqk,bkd->bqd"}> : () -> ()
    %cst_96 = arith.constant dense<0.000000e+00> : vector<2x16x16xf32>
    %277 = tpu.matmul %276, %260, %cst_96 {dimension_numbers = #tpu.dot_dimension_numbers<[2], [1], [1], [2], [0, 0, 0, 1, 1, 2], [0], [0]>} : vector<2x16x16xbf16>, vector<2x16x16xbf16>, vector<2x16x16xf32> -> vector<2x16x16xf32>
    "tpu.trace_stop"() : () -> ()
    %278 = vector.shape_cast %277 : vector<2x16x16xf32> to vector<32x16xf32>
    %279 = vector.extract_strided_slice %230 {offsets = [0, 0, 32], sizes = [2, 16, 16], strides = [1, 1, 1]} : vector<2x16x192xf32> to vector<2x16x16xf32>
    %280 = arith.truncf %279 : vector<2x16x16xf32> to vector<2x16x16xbf16>
    %281 = vector.extract_strided_slice %230 {offsets = [0, 0, 96], sizes = [2, 16, 16], strides = [1, 1, 1]} : vector<2x16x192xf32> to vector<2x16x16xf32>
    %282 = arith.truncf %281 : vector<2x16x16xf32> to vector<2x16x16xbf16>
    %283 = vector.extract_strided_slice %230 {offsets = [0, 0, 160], sizes = [2, 16, 16], strides = [1, 1, 1]} : vector<2x16x192xf32> to vector<2x16x16xf32>
    %284 = arith.truncf %283 : vector<2x16x16xf32> to vector<2x16x16xbf16>
    "tpu.trace_start"() <{level = 10 : i32, message = "bqd,bkd->bqk"}> : () -> ()
    %cst_97 = arith.constant dense<0.000000e+00> : vector<2x16x16xf32>
    %285 = tpu.matmul %280, %282, %cst_97 {dimension_numbers = #tpu.dot_dimension_numbers<[2], [2], [1], [1], [0, 0, 0, 1, 1, 1], [0], [0]>} : vector<2x16x16xbf16>, vector<2x16x16xbf16>, vector<2x16x16xf32> -> vector<2x16x16xf32>
    %cst_98 = arith.constant -1.000000e+30 : f32
    "tpu.trace_stop"() : () -> ()
    %286 = vector.shape_cast %17 : vector<1x16x16xi1> to vector<1x16x16xi1>
    %287 = vector.broadcast %286 : vector<1x16x16xi1> to vector<2x16x16xi1>
    %288 = vector.broadcast %cst_98 : f32 to vector<2x16x16xf32>
    %289 = arith.select %287, %285, %288 : vector<2x16x16xi1>, vector<2x16x16xf32>
    %cst_99 = arith.constant dense<0xFF800000> : vector<2x16xf32>
    %290 = vector.multi_reduction <maximumf>, %289, %cst_99 [2] : vector<2x16x16xf32> to vector<2x16xf32>
    %291 = vector.shape_cast %290 : vector<2x16xf32> to vector<2x16x1xf32>
    %292 = vector.broadcast %291 : vector<2x16x1xf32> to vector<2x16x16xf32>
    %293 = arith.subf %289, %292 : vector<2x16x16xf32>
    %294 = math.exp %293 : vector<2x16x16xf32>
    %cst_100 = arith.constant dense<0.000000e+00> : vector<2x16xf32>
    %295 = vector.multi_reduction <add>, %294, %cst_100 [2] : vector<2x16x16xf32> to vector<2x16xf32>
    %296 = vector.shape_cast %295 : vector<2x16xf32> to vector<2x16x1xf32>
    %297 = tpu.reciprocal %296 {approx = true} : vector<2x16x1xf32> -> vector<2x16x1xf32>
    %298 = vector.broadcast %297 : vector<2x16x1xf32> to vector<2x16x16xf32>
    %299 = arith.mulf %294, %298 : vector<2x16x16xf32>
    %300 = arith.truncf %299 : vector<2x16x16xf32> to vector<2x16x16xbf16>
    "tpu.trace_start"() <{level = 10 : i32, message = "bqk,bkd->bqd"}> : () -> ()
    %cst_101 = arith.constant dense<0.000000e+00> : vector<2x16x16xf32>
    %301 = tpu.matmul %300, %284, %cst_101 {dimension_numbers = #tpu.dot_dimension_numbers<[2], [1], [1], [2], [0, 0, 0, 1, 1, 2], [0], [0]>} : vector<2x16x16xbf16>, vector<2x16x16xbf16>, vector<2x16x16xf32> -> vector<2x16x16xf32>
    "tpu.trace_stop"() : () -> ()
    %302 = vector.shape_cast %301 : vector<2x16x16xf32> to vector<32x16xf32>
    %303 = vector.extract_strided_slice %230 {offsets = [0, 0, 48], sizes = [2, 16, 16], strides = [1, 1, 1]} : vector<2x16x192xf32> to vector<2x16x16xf32>
    %304 = arith.truncf %303 : vector<2x16x16xf32> to vector<2x16x16xbf16>
    %305 = vector.extract_strided_slice %230 {offsets = [0, 0, 112], sizes = [2, 16, 16], strides = [1, 1, 1]} : vector<2x16x192xf32> to vector<2x16x16xf32>
    %306 = arith.truncf %305 : vector<2x16x16xf32> to vector<2x16x16xbf16>
    %307 = vector.extract_strided_slice %230 {offsets = [0, 0, 176], sizes = [2, 16, 16], strides = [1, 1, 1]} : vector<2x16x192xf32> to vector<2x16x16xf32>
    %308 = arith.truncf %307 : vector<2x16x16xf32> to vector<2x16x16xbf16>
    "tpu.trace_start"() <{level = 10 : i32, message = "bqd,bkd->bqk"}> : () -> ()
    %cst_102 = arith.constant dense<0.000000e+00> : vector<2x16x16xf32>
    %309 = tpu.matmul %304, %306, %cst_102 {dimension_numbers = #tpu.dot_dimension_numbers<[2], [2], [1], [1], [0, 0, 0, 1, 1, 1], [0], [0]>} : vector<2x16x16xbf16>, vector<2x16x16xbf16>, vector<2x16x16xf32> -> vector<2x16x16xf32>
    %cst_103 = arith.constant -1.000000e+30 : f32
    "tpu.trace_stop"() : () -> ()
    %310 = vector.shape_cast %17 : vector<1x16x16xi1> to vector<1x16x16xi1>
    %311 = vector.broadcast %310 : vector<1x16x16xi1> to vector<2x16x16xi1>
    %312 = vector.broadcast %cst_103 : f32 to vector<2x16x16xf32>
    %313 = arith.select %311, %309, %312 : vector<2x16x16xi1>, vector<2x16x16xf32>
    %cst_104 = arith.constant dense<0xFF800000> : vector<2x16xf32>
    %314 = vector.multi_reduction <maximumf>, %313, %cst_104 [2] : vector<2x16x16xf32> to vector<2x16xf32>
    %315 = vector.shape_cast %314 : vector<2x16xf32> to vector<2x16x1xf32>
    %316 = vector.broadcast %315 : vector<2x16x1xf32> to vector<2x16x16xf32>
    %317 = arith.subf %313, %316 : vector<2x16x16xf32>
    %318 = math.exp %317 : vector<2x16x16xf32>
    %cst_105 = arith.constant dense<0.000000e+00> : vector<2x16xf32>
    %319 = vector.multi_reduction <add>, %318, %cst_105 [2] : vector<2x16x16xf32> to vector<2x16xf32>
    %320 = vector.shape_cast %319 : vector<2x16xf32> to vector<2x16x1xf32>
    %321 = tpu.reciprocal %320 {approx = true} : vector<2x16x1xf32> -> vector<2x16x1xf32>
    %322 = vector.broadcast %321 : vector<2x16x1xf32> to vector<2x16x16xf32>
    %323 = arith.mulf %318, %322 : vector<2x16x16xf32>
    %324 = arith.truncf %323 : vector<2x16x16xf32> to vector<2x16x16xbf16>
    "tpu.trace_start"() <{level = 10 : i32, message = "bqk,bkd->bqd"}> : () -> ()
    %cst_106 = arith.constant dense<0.000000e+00> : vector<2x16x16xf32>
    %325 = tpu.matmul %324, %308, %cst_106 {dimension_numbers = #tpu.dot_dimension_numbers<[2], [1], [1], [2], [0, 0, 0, 1, 1, 2], [0], [0]>} : vector<2x16x16xbf16>, vector<2x16x16xbf16>, vector<2x16x16xf32> -> vector<2x16x16xf32>
    "tpu.trace_stop"() : () -> ()
    %326 = vector.shape_cast %325 : vector<2x16x16xf32> to vector<32x16xf32>
    %327 = tpu.concatenate %254, %278, %302, %326 in 1 : vector<32x16xf32>, vector<32x16xf32>, vector<32x16xf32>, vector<32x16xf32> -> vector<32x64xf32>
    %328 = arith.truncf %327 : vector<32x64xf32> to vector<32x64xbf16>
    %c1_107 = arith.constant 1 : index
    %c0_108 = arith.constant 0 : index
    %c0_109 = arith.constant 0 : index
    %329 = vector.load %arg7[%c1_107, %c0_108, %c0_109] : memref<2x64x64xbf16, #tpu.memory_space<vmem>>, vector<1x64x64xbf16>
    %330 = vector.shape_cast %329 : vector<1x64x64xbf16> to vector<64x64xbf16>
    %cst_110 = arith.constant dense<0.000000e+00> : vector<32x64xf32>
    %331 = tpu.matmul %328, %330, %cst_110 {dimension_numbers = #tpu.dot_dimension_numbers<[1], [0], [0], [1], [0, 0, 1, 1], [], []>} : vector<32x64xbf16>, vector<64x64xbf16>, vector<32x64xf32> -> vector<32x64xf32>
    %c1_111 = arith.constant 1 : index
    %c0_112 = arith.constant 0 : index
    %c0_113 = arith.constant 0 : index
    %332 = vector.load %arg8[%c1_111, %c0_112, %c0_113] : memref<2x1x64xf32, #tpu.memory_space<vmem>>, vector<1x1x64xf32>
    %333 = vector.shape_cast %332 : vector<1x1x64xf32> to vector<1x64xf32>
    %334 = vector.broadcast %333 : vector<1x64xf32> to vector<32x64xf32>
    %335 = arith.addf %331, %334 : vector<32x64xf32>
    %336 = arith.addf %199, %335 : vector<32x64xf32>
    %c1_114 = arith.constant 1 : index
    %c0_115 = arith.constant 0 : index
    %c0_116 = arith.constant 0 : index
    %337 = vector.load %arg9[%c1_114, %c0_115, %c0_116] : memref<2x1x64xf32, #tpu.memory_space<vmem>>, vector<1x1x64xf32>
    %338 = vector.shape_cast %337 : vector<1x1x64xf32> to vector<1x64xf32>
    %c1_117 = arith.constant 1 : index
    %c0_118 = arith.constant 0 : index
    %c0_119 = arith.constant 0 : index
    %339 = vector.load %arg10[%c1_117, %c0_118, %c0_119] : memref<2x1x64xf32, #tpu.memory_space<vmem>>, vector<1x1x64xf32>
    %340 = vector.shape_cast %339 : vector<1x1x64xf32> to vector<1x64xf32>
    %cst_120 = arith.constant dense<0.000000e+00> : vector<32xf32>
    %341 = vector.multi_reduction <add>, %336, %cst_120 [1] : vector<32x64xf32> to vector<32xf32>
    %342 = vector.shape_cast %341 : vector<32xf32> to vector<32x1xf32>
    %cst_121 = arith.constant 6.400000e+01 : f32
    %343 = vector.broadcast %cst_121 : f32 to vector<32x1xf32>
    %344 = arith.divf %342, %343 : vector<32x1xf32>
    %345 = arith.mulf %336, %336 : vector<32x64xf32>
    %cst_122 = arith.constant dense<0.000000e+00> : vector<32xf32>
    %346 = vector.multi_reduction <add>, %345, %cst_122 [1] : vector<32x64xf32> to vector<32xf32>
    %347 = vector.shape_cast %346 : vector<32xf32> to vector<32x1xf32>
    %cst_123 = arith.constant 6.400000e+01 : f32
    %348 = vector.broadcast %cst_123 : f32 to vector<32x1xf32>
    %349 = arith.divf %347, %348 : vector<32x1xf32>
    %350 = arith.mulf %344, %344 : vector<32x1xf32>
    %351 = arith.subf %349, %350 : vector<32x1xf32>
    %352 = vector.broadcast %344 : vector<32x1xf32> to vector<32x64xf32>
    %353 = arith.subf %336, %352 : vector<32x64xf32>
    %cst_124 = arith.constant 9.99999974E-6 : f32
    %354 = vector.broadcast %cst_124 : f32 to vector<32x1xf32>
    %355 = arith.addf %351, %354 : vector<32x1xf32>
    %356 = math.rsqrt %355 : vector<32x1xf32>
    %357 = vector.broadcast %356 : vector<32x1xf32> to vector<32x64xf32>
    %358 = arith.mulf %353, %357 : vector<32x64xf32>
    %359 = vector.broadcast %338 : vector<1x64xf32> to vector<32x64xf32>
    %360 = arith.mulf %358, %359 : vector<32x64xf32>
    %361 = vector.broadcast %340 : vector<1x64xf32> to vector<32x64xf32>
    %362 = arith.addf %360, %361 : vector<32x64xf32>
    %363 = arith.truncf %362 : vector<32x64xf32> to vector<32x64xbf16>
    %c1_125 = arith.constant 1 : index
    %c0_126 = arith.constant 0 : index
    %c0_127 = arith.constant 0 : index
    %364 = vector.load %arg11[%c1_125, %c0_126, %c0_127] : memref<2x64x256xbf16, #tpu.memory_space<vmem>>, vector<1x64x256xbf16>
    %365 = vector.shape_cast %364 : vector<1x64x256xbf16> to vector<64x256xbf16>
    %cst_128 = arith.constant dense<0.000000e+00> : vector<32x256xf32>
    %366 = tpu.matmul %363, %365, %cst_128 {dimension_numbers = #tpu.dot_dimension_numbers<[1], [0], [0], [1], [0, 0, 1, 1], [], []>} : vector<32x64xbf16>, vector<64x256xbf16>, vector<32x256xf32> -> vector<32x256xf32>
    %c1_129 = arith.constant 1 : index
    %c0_130 = arith.constant 0 : index
    %c0_131 = arith.constant 0 : index
    %367 = vector.load %arg12[%c1_129, %c0_130, %c0_131] : memref<2x1x256xf32, #tpu.memory_space<vmem>>, vector<1x1x256xf32>
    %368 = vector.shape_cast %367 : vector<1x1x256xf32> to vector<1x256xf32>
    %369 = vector.broadcast %368 : vector<1x256xf32> to vector<32x256xf32>
    %370 = arith.addf %366, %369 : vector<32x256xf32>
    %cst_132 = arith.constant 0.000000e+00 : f32
    %371 = vector.broadcast %cst_132 : f32 to vector<32x256xf32>
    %372 = arith.maximumf %370, %371 : vector<32x256xf32>
    %373 = arith.truncf %372 : vector<32x256xf32> to vector<32x256xbf16>
    %c1_133 = arith.constant 1 : index
    %c0_134 = arith.constant 0 : index
    %c0_135 = arith.constant 0 : index
    %374 = vector.load %arg13[%c1_133, %c0_134, %c0_135] : memref<2x256x64xbf16, #tpu.memory_space<vmem>>, vector<1x256x64xbf16>
    %375 = vector.shape_cast %374 : vector<1x256x64xbf16> to vector<256x64xbf16>
    %cst_136 = arith.constant dense<0.000000e+00> : vector<32x64xf32>
    %376 = tpu.matmul %373, %375, %cst_136 {dimension_numbers = #tpu.dot_dimension_numbers<[1], [0], [0], [1], [0, 0, 1, 1], [], []>} : vector<32x256xbf16>, vector<256x64xbf16>, vector<32x64xf32> -> vector<32x64xf32>
    %c1_137 = arith.constant 1 : index
    %c0_138 = arith.constant 0 : index
    %c0_139 = arith.constant 0 : index
    %377 = vector.load %arg14[%c1_137, %c0_138, %c0_139] : memref<2x1x64xf32, #tpu.memory_space<vmem>>, vector<1x1x64xf32>
    %378 = vector.shape_cast %377 : vector<1x1x64xf32> to vector<1x64xf32>
    %379 = vector.broadcast %378 : vector<1x64xf32> to vector<32x64xf32>
    %380 = arith.addf %376, %379 : vector<32x64xf32>
    %381 = arith.addf %336, %380 : vector<32x64xf32>
    %c0_140 = arith.constant 0 : index
    %c0_141 = arith.constant 0 : index
    %382 = vector.load %arg15[%c0_140, %c0_141] : memref<1x64xf32, #tpu.memory_space<vmem>>, vector<1x64xf32>
    %c0_142 = arith.constant 0 : index
    %c0_143 = arith.constant 0 : index
    %383 = vector.load %arg16[%c0_142, %c0_143] : memref<1x64xf32, #tpu.memory_space<vmem>>, vector<1x64xf32>
    %cst_144 = arith.constant dense<0.000000e+00> : vector<32xf32>
    %384 = vector.multi_reduction <add>, %381, %cst_144 [1] : vector<32x64xf32> to vector<32xf32>
    %385 = vector.shape_cast %384 : vector<32xf32> to vector<32x1xf32>
    %cst_145 = arith.constant 6.400000e+01 : f32
    %386 = vector.broadcast %cst_145 : f32 to vector<32x1xf32>
    %387 = arith.divf %385, %386 : vector<32x1xf32>
    %388 = arith.mulf %381, %381 : vector<32x64xf32>
    %cst_146 = arith.constant dense<0.000000e+00> : vector<32xf32>
    %389 = vector.multi_reduction <add>, %388, %cst_146 [1] : vector<32x64xf32> to vector<32xf32>
    %390 = vector.shape_cast %389 : vector<32xf32> to vector<32x1xf32>
    %cst_147 = arith.constant 6.400000e+01 : f32
    %391 = vector.broadcast %cst_147 : f32 to vector<32x1xf32>
    %392 = arith.divf %390, %391 : vector<32x1xf32>
    %393 = arith.mulf %387, %387 : vector<32x1xf32>
    %394 = arith.subf %392, %393 : vector<32x1xf32>
    %395 = vector.broadcast %387 : vector<32x1xf32> to vector<32x64xf32>
    %396 = arith.subf %381, %395 : vector<32x64xf32>
    %cst_148 = arith.constant 9.99999974E-6 : f32
    %397 = vector.broadcast %cst_148 : f32 to vector<32x1xf32>
    %398 = arith.addf %394, %397 : vector<32x1xf32>
    %399 = math.rsqrt %398 : vector<32x1xf32>
    %400 = vector.broadcast %399 : vector<32x1xf32> to vector<32x64xf32>
    %401 = arith.mulf %396, %400 : vector<32x64xf32>
    %402 = vector.broadcast %382 : vector<1x64xf32> to vector<32x64xf32>
    %403 = arith.mulf %401, %402 : vector<32x64xf32>
    %404 = vector.broadcast %383 : vector<1x64xf32> to vector<32x64xf32>
    %405 = arith.addf %403, %404 : vector<32x64xf32>
    %406 = arith.truncf %405 : vector<32x64xf32> to vector<32x64xbf16>
    %c0_149 = arith.constant 0 : index
    %c0_150 = arith.constant 0 : index
    %407 = vector.load %arg17[%c0_149, %c0_150] : memref<64x128xbf16, #tpu.memory_space<vmem>>, vector<64x128xbf16>
    %cst_151 = arith.constant dense<0.000000e+00> : vector<32x128xf32>
    %408 = tpu.matmul %406, %407, %cst_151 {dimension_numbers = #tpu.dot_dimension_numbers<[1], [0], [0], [1], [0, 0, 1, 1], [], []>} : vector<32x64xbf16>, vector<64x128xbf16>, vector<32x128xf32> -> vector<32x128xf32>
    %c0_152 = arith.constant 0 : index
    %c0_153 = arith.constant 0 : index
    %409 = vector.load %arg18[%c0_152, %c0_153] : memref<1x128xf32, #tpu.memory_space<vmem>>, vector<1x128xf32>
    %410 = vector.broadcast %409 : vector<1x128xf32> to vector<32x128xf32>
    %411 = arith.addf %408, %410 : vector<32x128xf32>
    %c0_154 = arith.constant 0 : index
    %c0_155 = arith.constant 0 : index
    %412 = vector.load %arg19[%c0_154, %c0_155] : memref<32x128xf32, #tpu.memory_space<vmem>>, vector<32x128xf32>
    tpu.vector_store %arg19[%c0_154, %c0_155], %411 {strides = array<i32>} : memref<32x128xf32, #tpu.memory_space<vmem>>, vector<32x128xf32>,
    return
  }
  func.func @transform_0(%arg0: i32) -> (i32, i32) {
    %c0_i32 = arith.constant 0 : i32
    %c0_i32_0 = arith.constant 0 : i32
    %c0_i32_1 = arith.constant 0 : i32
    return %c0_i32, %c0_i32_0 : i32, i32
  }
  func.func @transform_1(%arg0: i32) -> (i32, i32) {
    %c0_i32 = arith.constant 0 : i32
    %c0_i32_0 = arith.constant 0 : i32
    %c0_i32_1 = arith.constant 0 : i32
    return %c0_i32, %c0_i32_0 : i32, i32
  }
  func.func @transform_2(%arg0: i32) -> (i32, i32) {
    %c0_i32 = arith.constant 0 : i32
    %c0_i32_0 = arith.constant 0 : i32
    %c0_i32_1 = arith.constant 0 : i32
    return %c0_i32, %c0_i32_0 : i32, i32
  }
  func.func @transform_3(%arg0: i32) -> (i32, i32, i32) {
    %c0_i32 = arith.constant 0 : i32
    %c0_i32_0 = arith.constant 0 : i32
    %c0_i32_1 = arith.constant 0 : i32
    %c0_i32_2 = arith.constant 0 : i32
    return %c0_i32, %c0_i32_0, %c0_i32_1 : i32, i32, i32
  }
  func.func @transform_4(%arg0: i32) -> (i32, i32, i32) {
    %c0_i32 = arith.constant 0 : i32
    %c0_i32_0 = arith.constant 0 : i32
    %c0_i32_1 = arith.constant 0 : i32
    %c0_i32_2 = arith.constant 0 : i32
    return %c0_i32, %c0_i32_0, %c0_i32_1 : i32, i32, i32
  }
  func.func @transform_5(%arg0: i32) -> (i32, i32, i32) {
    %c0_i32 = arith.constant 0 : i32
    %c0_i32_0 = arith.constant 0 : i32
    %c0_i32_1 = arith.constant 0 : i32
    %c0_i32_2 = arith.constant 0 : i32
    return %c0_i32, %c0_i32_0, %c0_i32_1 : i32, i32, i32
  }
  func.func @transform_6(%arg0: i32) -> (i32, i32, i32) {
    %c0_i32 = arith.constant 0 : i32
    %c0_i32_0 = arith.constant 0 : i32
    %c0_i32_1 = arith.constant 0 : i32
    %c0_i32_2 = arith.constant 0 : i32
    return %c0_i32, %c0_i32_0, %c0_i32_1 : i32, i32, i32
  }
  func.func @transform_7(%arg0: i32) -> (i32, i32, i32) {
    %c0_i32 = arith.constant 0 : i32
    %c0_i32_0 = arith.constant 0 : i32
    %c0_i32_1 = arith.constant 0 : i32
    %c0_i32_2 = arith.constant 0 : i32
    return %c0_i32, %c0_i32_0, %c0_i32_1 : i32, i32, i32
  }
  func.func @transform_8(%arg0: i32) -> (i32, i32, i32) {
    %c0_i32 = arith.constant 0 : i32
    %c0_i32_0 = arith.constant 0 : i32
    %c0_i32_1 = arith.constant 0 : i32
    %c0_i32_2 = arith.constant 0 : i32
    return %c0_i32, %c0_i32_0, %c0_i32_1 : i32, i32, i32
  }
  func.func @transform_9(%arg0: i32) -> (i32, i32, i32) {
    %c0_i32 = arith.constant 0 : i32
    %c0_i32_0 = arith.constant 0 : i32
    %c0_i32_1 = arith.constant 0 : i32
    %c0_i32_2 = arith.constant 0 : i32
    return %c0_i32, %c0_i32_0, %c0_i32_1 : i32, i32, i32
  }
  func.func @transform_10(%arg0: i32) -> (i32, i32, i32) {
    %c0_i32 = arith.constant 0 : i32
    %c0_i32_0 = arith.constant 0 : i32
    %c0_i32_1 = arith.constant 0 : i32
    %c0_i32_2 = arith.constant 0 : i32
    return %c0_i32, %c0_i32_0, %c0_i32_1 : i32, i32, i32
  }
  func.func @transform_11(%arg0: i32) -> (i32, i32, i32) {
    %c0_i32 = arith.constant 0 : i32
    %c0_i32_0 = arith.constant 0 : i32
    %c0_i32_1 = arith.constant 0 : i32
    %c0_i32_2 = arith.constant 0 : i32
    return %c0_i32, %c0_i32_0, %c0_i32_1 : i32, i32, i32
  }
  func.func @transform_12(%arg0: i32) -> (i32, i32, i32) {
    %c0_i32 = arith.constant 0 : i32
    %c0_i32_0 = arith.constant 0 : i32
    %c0_i32_1 = arith.constant 0 : i32
    %c0_i32_2 = arith.constant 0 : i32
    return %c0_i32, %c0_i32_0, %c0_i32_1 : i32, i32, i32
  }
  func.func @transform_13(%arg0: i32) -> (i32, i32, i32) {
    %c0_i32 = arith.constant 0 : i32
    %c0_i32_0 = arith.constant 0 : i32
    %c0_i32_1 = arith.constant 0 : i32
    %c0_i32_2 = arith.constant 0 : i32
    return %c0_i32, %c0_i32_0, %c0_i32_1 : i32, i32, i32
  }
  func.func @transform_14(%arg0: i32) -> (i32, i32) {
    %c0_i32 = arith.constant 0 : i32
    %c0_i32_0 = arith.constant 0 : i32
    %c0_i32_1 = arith.constant 0 : i32
    return %c0_i32, %c0_i32_0 : i32, i32
  }
  func.func @transform_15(%arg0: i32) -> (i32, i32) {
    %c0_i32 = arith.constant 0 : i32
    %c0_i32_0 = arith.constant 0 : i32
    %c0_i32_1 = arith.constant 0 : i32
    return %c0_i32, %c0_i32_0 : i32, i32
  }
  func.func @transform_16(%arg0: i32) -> (i32, i32) {
    %c0_i32 = arith.constant 0 : i32
    %c0_i32_0 = arith.constant 0 : i32
    %c0_i32_1 = arith.constant 0 : i32
    return %c0_i32, %c0_i32_0 : i32, i32
  }
  func.func @transform_17(%arg0: i32) -> (i32, i32) {
    %c0_i32 = arith.constant 0 : i32
    %c0_i32_0 = arith.constant 0 : i32
    %c0_i32_1 = arith.constant 0 : i32
    return %c0_i32, %c0_i32_0 : i32, i32
  }
  func.func @transform_18(%arg0: i32) -> (i32, i32) {
    %c0_i32 = arith.constant 0 : i32
    %c0_i32_0 = arith.constant 0 : i32
    %c0_i32_1 = arith.constant 0 : i32
    return %c0_i32, %c0_i32_0 : i32, i32
  }
}

</mosaic_0001>

<llo_original>
// kernel: gpt_forward.1
$region0: #{gpt_forward.1}
  #allocation0 [shape = 'u32[]', space=smem, size = 0x4, offset = 0x4, fixed_abs, tag = 'smem constant byte address 0x4 - core index']
  #allocation1 [shape = 'u32[72,128]{1,0:T(1,128)}', space=vmem, size = 0x9000, scoped, tag = 'internal scratch']
  %s0 = inlined_call_operand.vmem [shape: s32[32,1], index: 0, kind: input, shape index: {}]
  %s1 = inlined_call_operand.vmem [shape: f32[128,64], index: 1, kind: input, shape index: {}]
  %s2 = inlined_call_operand.vmem [shape: f32[32,64], index: 2, kind: input, shape index: {}]
  %s3 = inlined_call_operand.vmem [shape: f32[2,1,64], index: 3, kind: input, shape index: {}]
  %s4 = inlined_call_operand.vmem [shape: f32[2,1,64], index: 4, kind: input, shape index: {}]
  %s5 = inlined_call_operand.vmem [shape: bf16[2,64,192], index: 5, kind: input, shape index: {}]
  %s6 = inlined_call_operand.vmem [shape: bf16[2,64,64], index: 6, kind: input, shape index: {}]
  %s7 = inlined_call_operand.vmem [shape: f32[2,1,64], index: 7, kind: input, shape index: {}]
  %s8 = inlined_call_operand.vmem [shape: f32[2,1,64], index: 8, kind: input, shape index: {}]
  %s9 = inlined_call_operand.vmem [shape: f32[2,1,64], index: 9, kind: input, shape index: {}]
  %s10 = inlined_call_operand.vmem [shape: bf16[2,64,256], index: 10, kind: input, shape index: {}]
  %s11 = inlined_call_operand.vmem [shape: f32[2,1,256], index: 11, kind: input, shape index: {}]
  %s12 = inlined_call_operand.vmem [shape: bf16[2,256,64], index: 12, kind: input, shape index: {}]
  %s13 = inlined_call_operand.vmem [shape: f32[2,1,64], index: 13, kind: input, shape index: {}]
  %s14 = inlined_call_operand.vmem [shape: f32[1,64], index: 14, kind: input, shape index: {}]
  %s15 = inlined_call_operand.vmem [shape: f32[1,64], index: 15, kind: input, shape index: {}]
  %s16 = inlined_call_operand.vmem [shape: bf16[64,128], index: 16, kind: input, shape index: {}]
  %s17 = inlined_call_operand.vmem [shape: f32[1,128], index: 17, kind: input, shape index: {}]
  %s18 = inlined_call_operand.hbm [shape: f32[32,128], index: 18, kind: output, shape index: {}]
  %s19 = sld [smem:[#allocation0]]
  $region82: #{gpt_forward.1} parent=0
    _
  %s21 = ssub.s32 1, %s19
  %s22 = scalar_select 0, %s21, %s19
  $region1: #{gpt_forward.1} parent=0
    #allocation2 [shape = 'u8[16384]{0}', space=vmem, size = 0x4000, scoped, tag = 'output window, operand 0, single buffered']
    #allocation3 [shape = 's32[1]{0}', space=sflag, size = 0x4, scoped, tag = 'scoped memory for gpt_forward.1']
    %23 = vsyncpa [#allocation3], 0
    // Predicated region
    $region2: #{gpt_forward.1} parent=1 // pred_check
      _
    $region3: #{gpt_forward.1} parent=1 // pred_check_branch
      %25 = sbr.rel (0) target = $region5
    $region4: #{gpt_forward.1} parent=1 // pred_region
      _
    $region5: #{gpt_forward.1} parent=1 // pred_fallthru
      _
    // Predicated region
    $region6: #{gpt_forward.1} parent=1 // pred_check
      _
    $region7: #{gpt_forward.1} parent=1 // pred_check_branch
      %27 = sbr.rel (0) target = $region9
    $region8: #{gpt_forward.1} parent=1 // pred_region
      _
    $region9: #{gpt_forward.1} parent=1 // pred_fallthru
      _
    // Predicated region
    $region10: #{gpt_forward.1} parent=1 // pred_check
      _
    $region11: #{gpt_forward.1} parent=1 // pred_check_branch
      %29 = sbr.rel (0) target = $region13
    $region12: #{gpt_forward.1} parent=1 // pred_region
      _
    $region13: #{gpt_forward.1} parent=1 // pred_fallthru
      _
    // Predicated region
    $region14: #{gpt_forward.1} parent=1 // pred_check
      _
    $region15: #{gpt_forward.1} parent=1 // pred_check_branch
      %31 = sbr.rel (0) target = $region17
    $region16: #{gpt_forward.1} parent=1 // pred_region
      _
    $region17: #{gpt_forward.1} parent=1 // pred_fallthru
      _
    // Predicated region
    $region18: #{gpt_forward.1} parent=1 // pred_check
      _
    $region19: #{gpt_forward.1} parent=1 // pred_check_branch
      %33 = sbr.rel (0) target = $region21
    $region20: #{gpt_forward.1} parent=1 // pred_region
      _
    $region21: #{gpt_forward.1} parent=1 // pred_fallthru
      _
    // Predicated region
    $region22: #{gpt_forward.1} parent=1 // pred_check
      _
    $region23: #{gpt_forward.1} parent=1 // pred_check_branch
      %35 = sbr.rel (0) target = $region25
    $region24: #{gpt_forward.1} parent=1 // pred_region
      _
    $region25: #{gpt_forward.1} parent=1 // pred_fallthru
      _
    // Predicated region
    $region26: #{gpt_forward.1} parent=1 // pred_check
      _
    $region27: #{gpt_forward.1} parent=1 // pred_check_branch
      %37 = sbr.rel (0) target = $region29
    $region28: #{gpt_forward.1} parent=1 // pred_region
      _
    $region29: #{gpt_forward.1} parent=1 // pred_fallthru
      _
    // Predicated region
    $region30: #{gpt_forward.1} parent=1 // pred_check
      _
    $region31: #{gpt_forward.1} parent=1 // pred_check_branch
      %39 = sbr.rel (0) target = $region33
    $region32: #{gpt_forward.1} parent=1 // pred_region
      _
    $region33: #{gpt_forward.1} parent=1 // pred_fallthru
      _
    // Predicated region
    $region34: #{gpt_forward.1} parent=1 // pred_check
      _
    $region35: #{gpt_forward.1} parent=1 // pred_check_branch
      %41 = sbr.rel (0) target = $region37
    $region36: #{gpt_forward.1} parent=1 // pred_region
      _
    $region37: #{gpt_forward.1} parent=1 // pred_fallthru
      _
    // Predicated region
    $region38: #{gpt_forward.1} parent=1 // pred_check
      _
    $region39: #{gpt_forward.1} parent=1 // pred_check_branch
      %43 = sbr.rel (0) target = $region41
    $region40: #{gpt_forward.1} parent=1 // pred_region
      _
    $region41: #{gpt_forward.1} parent=1 // pred_fallthru
      _
    // Predicated region
    $region42: #{gpt_forward.1} parent=1 // pred_check
      _
    $region43: #{gpt_forward.1} parent=1 // pred_check_branch
      %45 = sbr.rel (0) target = $region45
    $region44: #{gpt_forward.1} parent=1 // pred_region
      _
    $region45: #{gpt_forward.1} parent=1 // pred_fallthru
      _
    // Predicated region
    $region46: #{gpt_forward.1} parent=1 // pred_check
      _
    $region47: #{gpt_forward.1} parent=1 // pred_check_branch
      %47 = sbr.rel (0) target = $region49
    $region48: #{gpt_forward.1} parent=1 // pred_region
      _
    $region49: #{gpt_forward.1} parent=1 // pred_fallthru
      _
    // Predicated region
    $region50: #{gpt_forward.1} parent=1 // pred_check
      _
    $region51: #{gpt_forward.1} parent=1 // pred_check_branch
      %49 = sbr.rel (0) target = $region53
    $region52: #{gpt_forward.1} parent=1 // pred_region
      _
    $region53: #{gpt_forward.1} parent=1 // pred_fallthru
      _
    // Predicated region
    $region54: #{gpt_forward.1} parent=1 // pred_check
      _
    $region55: #{gpt_forward.1} parent=1 // pred_check_branch
      %51 = sbr.rel (0) target = $region57
    $region56: #{gpt_forward.1} parent=1 // pred_region
      _
    $region57: #{gpt_forward.1} parent=1 // pred_fallthru
      _
    // Predicated region
    $region58: #{gpt_forward.1} parent=1 // pred_check
      _
    $region59: #{gpt_forward.1} parent=1 // pred_check_branch
      %53 = sbr.rel (0) target = $region61
    $region60: #{gpt_forward.1} parent=1 // pred_region
      _
    $region61: #{gpt_forward.1} parent=1 // pred_fallthru
      _
    // Predicated region
    $region62: #{gpt_forward.1} parent=1 // pred_check
      _
    $region63: #{gpt_forward.1} parent=1 // pred_check_branch
      %55 = sbr.rel (0) target = $region65
    $region64: #{gpt_forward.1} parent=1 // pred_region
      _
    $region65: #{gpt_forward.1} parent=1 // pred_fallthru
      _
    // Predicated region
    $region66: #{gpt_forward.1} parent=1 // pred_check
      _
    $region67: #{gpt_forward.1} parent=1 // pred_check_branch
      %57 = sbr.rel (0) target = $region69
    $region68: #{gpt_forward.1} parent=1 // pred_region
      _
    $region69: #{gpt_forward.1} parent=1 // pred_fallthru
      _
    // Predicated region
    $region70: #{gpt_forward.1} parent=1 // pred_check
      _
    $region71: #{gpt_forward.1} parent=1 // pred_check_branch
      %59 = sbr.rel (0) target = $region73
    $region72: #{gpt_forward.1} parent=1 // pred_region
      _
    $region73: #{gpt_forward.1} parent=1 // pred_fallthru
      _
    %v61 = vld [vmem:[%s0] sm:$0xff]
    %v62 = vld [vmem:[%s0 + $0x8] sm:$0xff]
    %v63 = vld [vmem:[%s0 + $0x10] sm:$0xff]
    %v64 = vld [vmem:[%s0 + $0x18] sm:$0xff]
    %v65 = vlaneseq
    %v66 = vand.u32 %v65, 127
    %67 = vset.pattern.permute.xlu0 0
    %68 = vperm.xlu0 %67, %v61
    %v69 = vpop.permute.xlu0 %68
    %70 = vset.pattern.permute.xlu0 0
    %71 = vperm.xlu0 %70, %v62
    %v72 = vpop.permute.xlu0 %71
    %73 = vset.pattern.permute.xlu0 0
    %74 = vperm.xlu0 %73, %v63
    %v75 = vpop.permute.xlu0 %74
    %76 = vset.pattern.permute.xlu0 0
    %77 = vperm.xlu0 %76, %v64
    %v78 = vpop.permute.xlu0 %77
    %vm79 = vcmp.eq.s32.totalorder %v66, %v69
    %vm80 = vcmp.eq.s32.totalorder %v66, %v72
    %vm81 = vcmp.eq.s32.totalorder %v66, %v75
    %vm82 = vcmp.eq.s32.totalorder %v66, %v78
    %v83 = vsel %vm79, 1, 0
    %v84 = vsel %vm80, 1, 0
    %v85 = vsel %vm81, 1, 0
    %v86 = vsel %vm82, 1, 0
    %v87 = vcvt.s32.f32 %v83
    %v88 = vcvt.s32.f32 %v84
    %v89 = vcvt.s32.f32 %v85
    %v90 = vcvt.s32.f32 %v86
    %v91 = vld [vmem:[%s1] sm:$0xff]
    %v92 = vld [vmem:[%s1 + $0x8] sm:$0xff]
    %v93 = vld [vmem:[%s1 + $0x10] sm:$0xff]
    %v94 = vld [vmem:[%s1 + $0x18] sm:$0xff]
    %v95 = vld [vmem:[%s1 + $0x20] sm:$0xff]
    %v96 = vld [vmem:[%s1 + $0x28] sm:$0xff]
    %v97 = vld [vmem:[%s1 + $0x30] sm:$0xff]
    %v98 = vld [vmem:[%s1 + $0x38] sm:$0xff]
    %v99 = vld [vmem:[%s1 + $0x40] sm:$0xff]
    %v100 = vld [vmem:[%s1 + $0x48] sm:$0xff]
    %v101 = vld [vmem:[%s1 + $0x50] sm:$0xff]
    %v102 = vld [vmem:[%s1 + $0x58] sm:$0xff]
    %v103 = vld [vmem:[%s1 + $0x60] sm:$0xff]
    %v104 = vld [vmem:[%s1 + $0x68] sm:$0xff]
    %v105 = vld [vmem:[%s1 + $0x70] sm:$0xff]
    %v106 = vld [vmem:[%s1 + $0x78] sm:$0xff]
    %107 = vmatpush.msra.mxu0 %v106
    %108 = vmatpush.msra.mxu0 %v105
    %109 = vmatpush.msra.mxu0 %v104
    %110 = vmatpush.msra.mxu0 %v103
    %111 = vmatpush.msra.mxu0 %v102
    %112 = vmatpush.msra.mxu0 %v101
    %113 = vmatpush.msra.mxu0 %v100
    %114 = vmatpush.msra.mxu0 %v99
    %115 = vmatpush.msra.mxu0 %v98
    %116 = vmatpush.msra.mxu0 %v97
    %117 = vmatpush.msra.mxu0 %v96
    %118 = vmatpush.msra.mxu0 %v95
    %119 = vmatpush.msra.mxu0 %v94
    %120 = vmatpush.msra.mxu0 %v93
    %121 = vmatpush.msra.mxu0 %v92
    %122 = vmatpush.msra.mxu0 %v91
    %123 = vmatmul.f32.gmra.mxu0 %v87
    %v124 = vpop.f32.mrf.mxu0
    %v125 = vadd.f32 0.0, %v124
    %126 = vmatmul.f32.gmra.mxu0 %v88
    %v127 = vpop.f32.mrf.mxu0
    %v128 = vadd.f32 0.0, %v127
    %129 = vmatmul.f32.gmra.mxu0 %v89
    %v130 = vpop.f32.mrf.mxu0
    %v131 = vadd.f32 0.0, %v130
    %132 = vmatmul.f32.gmra.mxu0 %v90
    %v133 = vpop.f32.mrf.mxu0
    %v134 = vadd.f32 0.0, %v133
    %135 = vdwg.mxu0
    %v136 = vld [vmem:[%s2] sm:$0xff]
    %v137 = vld [vmem:[%s2 + $0x8] sm:$0xff]
    %v138 = vadd.f32 %v125, %v136
    %v139 = vadd.f32 %v128, %v137
    %v140 = vadd.f32 %v131, %v136
    %v141 = vadd.f32 %v134, %v137
    %v142 = vlaneseq
    %v143 = vshrl.u32 %v142, 7
    %v144 = vadd.s32 %v143, 8
    %vm145 = vcmp.le.s32.totalorder %v66, %v143
    %vm146 = vcmp.le.s32.totalorder %v66, %v144
    %v147 = vld [vmem:[%s3] sm:$0x1]
    %v148 = vld [vmem:[%s4] sm:$0x1]
    %vm149 = vcmask 523264
    %v150 = vsel %vm149, %v138, 0.0
    %151 = vadd.xlane.f32.xlu0 %v150
    %v152 = vpop.xlane.xlu0 %151
    %v153 = vsel %vm149, %v139, 0.0
    %154 = vadd.xlane.f32.xlu0 %v153
    %v155 = vpop.xlane.xlu0 %154
    %v156 = vsel %vm149, %v140, 0.0
    %157 = vadd.xlane.f32.xlu0 %v156
    %v158 = vpop.xlane.xlu0 %157
    %v159 = vsel %vm149, %v141, 0.0
    %160 = vadd.xlane.f32.xlu0 %v159
    %v161 = vpop.xlane.xlu0 %160
    %v162 = vrcp.pop 64.0
    %v163 = vmul.f32 64.0, %v162
    %v164 = vsub.f32 1.0, %v163
    %v165 = vmul.f32 %v162, %v164
    %v166 = vadd.f32 %v162, %v165
    %vm167 = vweird.f32 %v162
    %v168 = vsel %vm167, %v162, %v166
    %v169 = vmul.f32 %v152, %v168
    %v170 = vmul.f32 %v155, %v168
    %v171 = vmul.f32 %v158, %v168
    %v172 = vmul.f32 %v161, %v168
    %v173 = vmul.f32 %v138, %v138
    %v174 = vmul.f32 %v139, %v139
    %v175 = vmul.f32 %v140, %v140
    %v176 = vmul.f32 %v141, %v141
    %v177 = vsel %vm149, %v173, 0.0
    %178 = vadd.xlane.f32.xlu0 %v177
    %v179 = vpop.xlane.xlu0 %178
    %v180 = vsel %vm149, %v174, 0.0
    %181 = vadd.xlane.f32.xlu0 %v180
    %v182 = vpop.xlane.xlu0 %181
    %v183 = vsel %vm149, %v175, 0.0
    %184 = vadd.xlane.f32.xlu0 %v183
    %v185 = vpop.xlane.xlu0 %184
    %v186 = vsel %vm149, %v176, 0.0
    %187 = vadd.xlane.f32.xlu0 %v186
    %v188 = vpop.xlane.xlu0 %187
    %v189 = vmul.f32 %v179, %v168
    %v190 = vmul.f32 %v182, %v168
    %v191 = vmul.f32 %v185, %v168
    %v192 = vmul.f32 %v188, %v168
    %v193 = vmul.f32 %v169, %v169
    %v194 = vmul.f32 %v170, %v170
    %v195 = vmul.f32 %v171, %v171
    %v196 = vmul.f32 %v172, %v172
    %v197 = vsub.f32 %v189, %v193
    %v198 = vsub.f32 %v190, %v194
    %v199 = vsub.f32 %v191, %v195
    %v200 = vsub.f32 %v192, %v196
    %v201 = vsub.f32 %v138, %v169
    %v202 = vsub.f32 %v139, %v170
    %v203 = vsub.f32 %v140, %v171
    %v204 = vsub.f32 %v141, %v172
    %v205 = vadd.f32 %v197, 1e-05
    %v206 = vadd.f32 %v198, 1e-05
    %v207 = vadd.f32 %v199, 1e-05
    %v208 = vadd.f32 %v200, 1e-05
    %v209 = vrsqrt.pop %v205
    %v210 = vmul.f32 %v209, %v205
    %v211 = vmul.f32 %v210, %v209
    %v212 = vmul.f32 0.5, %v211
    %v213 = vsub.f32 1.5, %v212
    %v214 = vmul.f32 %v209, %v213
    %vm215 = vweird.f32 %v205
    %vm216 = vweird.f32 %v209
    %vm217 = vmor %vm215, %vm216
    %v218 = vsel %vm217, %v209, %v214
    %v219 = vrsqrt.pop %v206
    %v220 = vmul.f32 %v219, %v206
    %v221 = vmul.f32 %v220, %v219
    %v222 = vmul.f32 0.5, %v221
    %v223 = vsub.f32 1.5, %v222
    %v224 = vmul.f32 %v219, %v223
    %vm225 = vweird.f32 %v206
    %vm226 = vweird.f32 %v219
    %vm227 = vmor %vm225, %vm226
    %v228 = vsel %vm227, %v219, %v224
    %v229 = vrsqrt.pop %v207
    %v230 = vmul.f32 %v229, %v207
    %v231 = vmul.f32 %v230, %v229
    %v232 = vmul.f32 0.5, %v231
    %v233 = vsub.f32 1.5, %v232
    %v234 = vmul.f32 %v229, %v233
    %vm235 = vweird.f32 %v207
    %vm236 = vweird.f32 %v229
    %vm237 = vmor %vm235, %vm236
    %v238 = vsel %vm237, %v229, %v234
    %v239 = vrsqrt.pop %v208
    %v240 = vmul.f32 %v239, %v208
    %v241 = vmul.f32 %v240, %v239
    %v242 = vmul.f32 0.5, %v241
    %v243 = vsub.f32 1.5, %v242
    %v244 = vmul.f32 %v239, %v243
    %vm245 = vweird.f32 %v208
    %vm246 = vweird.f32 %v239
    %vm247 = vmor %vm245, %vm246
    %v248 = vsel %vm247, %v239, %v244
    %v249 = vmul.f32 %v201, %v218
    %v250 = vmul.f32 %v202, %v228
    %v251 = vmul.f32 %v203, %v238
    %v252 = vmul.f32 %v204, %v248
    %v254 = vperm.slane %v147, 0
    %v256 = vmul.f32 %v249, %v254
    %v257 = vmul.f32 %v250, %v254
    %v258 = vmul.f32 %v251, %v254
    %v259 = vmul.f32 %v252, %v254
    %v261 = vperm.slane %v148, 0
    %v263 = vadd.f32 %v256, %v261
    %v264 = vadd.f32 %v257, %v261
    %v265 = vadd.f32 %v258, %v261
    %v266 = vadd.f32 %v259, %v261
    %v267 = vpack.c.bf16 %v264, %v263
    %v268 = vpack.c.bf16 %v266, %v265
    %v269 = vld [vmem:[%s5] sm:$0xff]
    %v270 = vld [vmem:[%s5 + $0x8] sm:$0xff]
    %v271 = vld [vmem:[%s5 + $0x10] sm:$0xff]
    %v272 = vld [vmem:[%s5 + $0x18] sm:$0xff]
    %v273 = vld [vmem:[%s5 + $0x20] sm:$0xff]
    %v274 = vld [vmem:[%s5 + $0x28] sm:$0xff]
    %v275 = vld [vmem:[%s5 + $0x30] sm:$0xff]
    %v276 = vld [vmem:[%s5 + $0x38] sm:$0xff]
    %v285 = vunpack.c.l.b16 %v269
    %v286 = vunpack.c.h.b16 %v269
    %v287 = vunpack.c.l.b16 %v270
    %v288 = vunpack.c.h.b16 %v270
    %v289 = vunpack.c.l.b16 %v271
    %v290 = vunpack.c.h.b16 %v271
    %v291 = vunpack.c.l.b16 %v272
    %v292 = vunpack.c.h.b16 %v272
    %v293 = vunpack.c.l.b16 %v273
    %v294 = vunpack.c.h.b16 %v273
    %v295 = vunpack.c.l.b16 %v274
    %v296 = vunpack.c.h.b16 %v274
    %v297 = vunpack.c.l.b16 %v275
    %v298 = vunpack.c.h.b16 %v275
    %v299 = vunpack.c.l.b16 %v276
    %v300 = vunpack.c.h.b16 %v276
    %v301 = vpack.c.b16 %v287, %v285
    %v302 = vpack.c.b16 %v288, %v286
    %v303 = vpack.c.b16 %v291, %v289
    %v304 = vpack.c.b16 %v292, %v290
    %v305 = vpack.c.b16 %v295, %v293
    %v306 = vpack.c.b16 %v296, %v294
    %v307 = vpack.c.b16 %v299, %v297
    %v308 = vpack.c.b16 %v300, %v298
    %v318 = vsel %vm149, %v267, 0
    %v321 = vsel %vm149, %v268, 0
    %323 = vmatpush.bf16.msra.mxu0 0
    %324 = vmatpush.bf16.msra.mxu0 0
    %325 = vmatpush.bf16.msra.mxu0 0
    %326 = vmatpush.bf16.msra.mxu0 0
    %327 = vmatpush.bf16.msra.mxu0 %v307
    %328 = vmatpush.bf16.msra.mxu0 %v305
    %329 = vmatpush.bf16.msra.mxu0 %v303
    %330 = vmatpush.bf16.msra.mxu0 %v301
    %331 = vmatmul.bf16.gmra.mxu0 %v318
    %v332 = vpop.f32.mrf.mxu0
    %v333 = vadd.f32 0.0, %v332
    %v334 = vpop.f32.mrf.mxu0
    %v335 = vadd.f32 0.0, %v334
    %336 = vmatmul.bf16.gmra.mxu0 %v321
    %v337 = vpop.f32.mrf.mxu0
    %v338 = vadd.f32 0.0, %v337
    %v339 = vpop.f32.mrf.mxu0
    %v340 = vadd.f32 0.0, %v339
    %341 = vdwg.mxu0
    %342 = vmatpush.bf16.msra.mxu0 0
    %343 = vmatpush.bf16.msra.mxu0 0
    %344 = vmatpush.bf16.msra.mxu0 0
    %345 = vmatpush.bf16.msra.mxu0 0
    %346 = vmatpush.bf16.msra.mxu0 %v308
    %347 = vmatpush.bf16.msra.mxu0 %v306
    %348 = vmatpush.bf16.msra.mxu0 %v304
    %349 = vmatpush.bf16.msra.mxu0 %v302
    %350 = vmatmul.bf16.gmra.mxu0 %v318
    %v351 = vpop.f32.mrf.mxu0
    %v352 = vadd.f32 0.0, %v351
    %v353 = vpop.f32.mrf.mxu0
    %v354 = vadd.f32 0.0, %v353
    %355 = vmatmul.bf16.gmra.mxu0 %v321
    %v356 = vpop.f32.mrf.mxu0
    %v357 = vadd.f32 0.0, %v356
    %v358 = vpop.f32.mrf.mxu0
    %v359 = vadd.f32 0.0, %v358
    %360 = vdwg.mxu0
    %v361 = vpack.c.bf16 %v333, %v333
    %v362 = vpack.c.bf16 %v335, %v335
    %v363 = vpack.c.bf16 %v338, %v338
    %v364 = vpack.c.bf16 %v340, %v340
    %v365 = vpack.c.bf16 %v352, %v352
    %v366 = vpack.c.bf16 %v354, %v354
    %v367 = vpack.c.bf16 %v357, %v357
    %v368 = vpack.c.bf16 %v359, %v359
    %v371 = vunpack.c.l.b16 %v361
    %v372 = vunpack.c.l.b16 %v362
    %v373 = vpack.c.b16 %v372, %v371
    %374 = vrot.lane.b32.xlu0 %v373, 64
    %v375 = vpop.permute.xlu0 %374
    %vm376 = vcmask 130048
    %v378 = vsel %vm376, %v373, 0
    %v381 = vsel %vm376, %v375, 0
    %383 = vmatpush.bf16.xpose.msra.mxu0 0
    %384 = vmatpush.bf16.xpose.msra.mxu0 0
    %385 = vmatpush.bf16.xpose.msra.mxu0 0
    %386 = vmatpush.bf16.xpose.msra.mxu0 0
    %387 = vmatpush.bf16.xpose.msra.mxu0 0
    %388 = vmatpush.bf16.xpose.msra.mxu0 0
    %389 = vmatpush.bf16.xpose.msra.mxu0 0
    %390 = vmatpush.bf16.xpose.msra.mxu0 %v381
    %391 = vmatmul.bf16.gmra.mxu0 %v378
    %v392 = vpop.f32.mrf.mxu0
    %v393 = vadd.f32 0.0, %v392
    %v394 = vpop.f32.mrf.mxu0
    %v395 = vadd.f32 0.0, %v394
    %396 = vdwg.mxu0
    %v399 = vunpack.c.l.b16 %v363
    %v400 = vunpack.c.l.b16 %v364
    %v401 = vpack.c.b16 %v400, %v399
    %402 = vrot.lane.b32.xlu0 %v401, 64
    %v403 = vpop.permute.xlu0 %402
    %v405 = vsel %vm376, %v401, 0
    %v408 = vsel %vm376, %v403, 0
    %410 = vmatpush.bf16.xpose.msra.mxu0 0
    %411 = vmatpush.bf16.xpose.msra.mxu0 0
    %412 = vmatpush.bf16.xpose.msra.mxu0 0
    %413 = vmatpush.bf16.xpose.msra.mxu0 0
    %414 = vmatpush.bf16.xpose.msra.mxu0 0
    %415 = vmatpush.bf16.xpose.msra.mxu0 0
    %416 = vmatpush.bf16.xpose.msra.mxu0 0
    %417 = vmatpush.bf16.xpose.msra.mxu0 %v408
    %418 = vmatmul.bf16.gmra.mxu0 %v405
    %v419 = vpop.f32.mrf.mxu0
    %v420 = vadd.f32 0.0, %v419
    %v421 = vpop.f32.mrf.mxu0
    %v422 = vadd.f32 0.0, %v421
    %423 = vdwg.mxu0
    %v424 = vsel %vm145, 1, 0
    %v425 = vsel %vm146, 1, 0
    %vm426 = vcmp.eq.s32.totalorder %v424, 1
    %vm427 = vcmp.eq.s32.totalorder %v425, 1
    %v428 = vsel %vm426, %v393, -1e+30
    %v429 = vsel %vm427, %v395, -1e+30
    %v430 = vsel %vm426, %v420, -1e+30
    %v431 = vsel %vm427, %v422, -1e+30
    %v432 = vsel %vm376, %v428, -inf
    %433 = vmax.xlane.f32.xlu0 %v432
    %v434 = vpop.xlane.xlu0 %433
    %v435 = vsel %vm376, %v429, -inf
    %436 = vmax.xlane.f32.xlu0 %v435
    %v437 = vpop.xlane.xlu0 %436
    %v438 = vsel %vm376, %v430, -inf
    %439 = vmax.xlane.f32.xlu0 %v438
    %v440 = vpop.xlane.xlu0 %439
    %v441 = vsel %vm376, %v431, -inf
    %442 = vmax.xlane.f32.xlu0 %v441
    %v443 = vpop.xlane.xlu0 %442
    %v444 = vsub.f32 %v428, %v434
    %v445 = vsub.f32 %v429, %v437
    %v446 = vsub.f32 %v430, %v440
    %v447 = vsub.f32 %v431, %v443
    %v448 = vmul.f32 %v444, 1.442695
    %v449 = vpow.pop %v448
    %v450 = vmul.f32 %v445, 1.442695
    %v451 = vpow.pop %v450
    %v452 = vmul.f32 %v446, 1.442695
    %v453 = vpow.pop %v452
    %v454 = vmul.f32 %v447, 1.442695
    %v455 = vpow.pop %v454
    %v456 = vsel %vm376, %v449, 0.0
    %457 = vadd.xlane.f32.xlu0 %v456
    %v458 = vpop.xlane.xlu0 %457
    %v459 = vsel %vm376, %v451, 0.0
    %460 = vadd.xlane.f32.xlu0 %v459
    %v461 = vpop.xlane.xlu0 %460
    %v462 = vsel %vm376, %v453, 0.0
    %463 = vadd.xlane.f32.xlu0 %v462
    %v464 = vpop.xlane.xlu0 %463
    %v465 = vsel %vm376, %v455, 0.0
    %466 = vadd.xlane.f32.xlu0 %v465
    %v467 = vpop.xlane.xlu0 %466
    %v468 = vrcp.pop %v458
    %v469 = vrcp.pop %v461
    %v470 = vrcp.pop %v464
    %v471 = vrcp.pop %v467
    %v472 = vmul.f32 %v449, %v468
    %v473 = vmul.f32 %v451, %v469
    %v474 = vmul.f32 %v453, %v470
    %v475 = vmul.f32 %v455, %v471
    %v476 = vpack.c.bf16 %v472, %v472
    %v477 = vpack.c.bf16 %v473, %v473
    %v478 = vpack.c.bf16 %v474, %v474
    %v479 = vpack.c.bf16 %v475, %v475
    %v482 = vunpack.c.l.b16 %v476
    %v483 = vunpack.c.l.b16 %v477
    %v484 = vpack.c.b16 %v483, %v482
    %v487 = vunpack.c.l.b16 %v365
    %v488 = vunpack.c.l.b16 %v366
    %v489 = vpack.c.b16 %v488, %v487
    %v492 = vsel %vm376, %v484, 0
    %494 = vmatpush.bf16.msra.mxu0 0
    %495 = vmatpush.bf16.msra.mxu0 0
    %496 = vmatpush.bf16.msra.mxu0 0
    %497 = vmatpush.bf16.msra.mxu0 0
    %498 = vmatpush.bf16.msra.mxu0 0
    %499 = vmatpush.bf16.msra.mxu0 0
    %500 = vmatpush.bf16.msra.mxu0 0
    %501 = vmatpush.bf16.msra.mxu0 %v489
    %502 = vmatmul.bf16.gmra.mxu0 %v492
    %v503 = vpop.f32.mrf.mxu0
    %v504 = vadd.f32 0.0, %v503
    %v505 = vpop.f32.mrf.mxu0
    %v506 = vadd.f32 0.0, %v505
    %507 = vdwg.mxu0
    %v510 = vunpack.c.l.b16 %v478
    %v511 = vunpack.c.l.b16 %v479
    %v512 = vpack.c.b16 %v511, %v510
    %v515 = vunpack.c.l.b16 %v367
    %v516 = vunpack.c.l.b16 %v368
    %v517 = vpack.c.b16 %v516, %v515
    %v520 = vsel %vm376, %v512, 0
    %522 = vmatpush.bf16.msra.mxu0 0
    %523 = vmatpush.bf16.msra.mxu0 0
    %524 = vmatpush.bf16.msra.mxu0 0
    %525 = vmatpush.bf16.msra.mxu0 0
    %526 = vmatpush.bf16.msra.mxu0 0
    %527 = vmatpush.bf16.msra.mxu0 0
    %528 = vmatpush.bf16.msra.mxu0 0
    %529 = vmatpush.bf16.msra.mxu0 %v517
    %530 = vmatmul.bf16.gmra.mxu0 %v520
    %v531 = vpop.f32.mrf.mxu0
    %v532 = vadd.f32 0.0, %v531
    %v533 = vpop.f32.mrf.mxu0
    %v534 = vadd.f32 0.0, %v533
    %535 = vdwg.mxu0
    %536 = vrot.lane.b32.xlu0 %v373, 112
    %v537 = vpop.permute.xlu0 %536
    %538 = vrot.lane.b32.xlu0 %v373, 48
    %v539 = vpop.permute.xlu0 %538
    %v541 = vsel %vm376, %v537, 0
    %v544 = vsel %vm376, %v539, 0
    %546 = vmatpush.bf16.xpose.msra.mxu0 0
    %547 = vmatpush.bf16.xpose.msra.mxu0 0
    %548 = vmatpush.bf16.xpose.msra.mxu0 0
    %549 = vmatpush.bf16.xpose.msra.mxu0 0
    %550 = vmatpush.bf16.xpose.msra.mxu0 0
    %551 = vmatpush.bf16.xpose.msra.mxu0 0
    %552 = vmatpush.bf16.xpose.msra.mxu0 0
    %553 = vmatpush.bf16.xpose.msra.mxu0 %v544
    %554 = vmatmul.bf16.gmra.mxu0 %v541
    %v555 = vpop.f32.mrf.mxu0
    %v556 = vadd.f32 0.0, %v555
    %v557 = vpop.f32.mrf.mxu0
    %v558 = vadd.f32 0.0, %v557
    %559 = vdwg.mxu0
    %560 = vrot.lane.b32.xlu0 %v401, 112
    %v561 = vpop.permute.xlu0 %560
    %562 = vrot.lane.b32.xlu0 %v401, 48
    %v563 = vpop.permute.xlu0 %562
    %v565 = vsel %vm376, %v561, 0
    %v568 = vsel %vm376, %v563, 0
    %570 = vmatpush.bf16.xpose.msra.mxu0 0
    %571 = vmatpush.bf16.xpose.msra.mxu0 0
    %572 = vmatpush.bf16.xpose.msra.mxu0 0
    %573 = vmatpush.bf16.xpose.msra.mxu0 0
    %574 = vmatpush.bf16.xpose.msra.mxu0 0
    %575 = vmatpush.bf16.xpose.msra.mxu0 0
    %576 = vmatpush.bf16.xpose.msra.mxu0 0
    %577 = vmatpush.bf16.xpose.msra.mxu0 %v568
    %578 = vmatmul.bf16.gmra.mxu0 %v565
    %v579 = vpop.f32.mrf.mxu0
    %v580 = vadd.f32 0.0, %v579
    %v581 = vpop.f32.mrf.mxu0
    %v582 = vadd.f32 0.0, %v581
    %583 = vdwg.mxu0
    %v584 = vsel %vm426, %v556, -1e+30
    %v585 = vsel %vm427, %v558, -1e+30
    %v586 = vsel %vm426, %v580, -1e+30
    %v587 = vsel %vm427, %v582, -1e+30
    %v588 = vsel %vm376, %v584, -inf
    %589 = vmax.xlane.f32.xlu0 %v588
    %v590 = vpop.xlane.xlu0 %589
    %v591 = vsel %vm376, %v585, -inf
    %592 = vmax.xlane.f32.xlu0 %v591
    %v593 = vpop.xlane.xlu0 %592
    %v594 = vsel %vm376, %v586, -inf
    %595 = vmax.xlane.f32.xlu0 %v594
    %v596 = vpop.xlane.xlu0 %595
    %v597 = vsel %vm376, %v587, -inf
    %598 = vmax.xlane.f32.xlu0 %v597
    %v599 = vpop.xlane.xlu0 %598
    %v600 = vsub.f32 %v584, %v590
    %v601 = vsub.f32 %v585, %v593
    %v602 = vsub.f32 %v586, %v596
    %v603 = vsub.f32 %v587, %v599
    %v604 = vmul.f32 %v600, 1.442695
    %v605 = vpow.pop %v604
    %v606 = vmul.f32 %v601, 1.442695
    %v607 = vpow.pop %v606
    %v608 = vmul.f32 %v602, 1.442695
    %v609 = vpow.pop %v608
    %v610 = vmul.f32 %v603, 1.442695
    %v611 = vpow.pop %v610
    %v612 = vsel %vm376, %v605, 0.0
    %613 = vadd.xlane.f32.xlu0 %v612
    %v614 = vpop.xlane.xlu0 %613
    %v615 = vsel %vm376, %v607, 0.0
    %616 = vadd.xlane.f32.xlu0 %v615
    %v617 = vpop.xlane.xlu0 %616
    %v618 = vsel %vm376, %v609, 0.0
    %619 = vadd.xlane.f32.xlu0 %v618
    %v620 = vpop.xlane.xlu0 %619
    %v621 = vsel %vm376, %v611, 0.0
    %622 = vadd.xlane.f32.xlu0 %v621
    %v623 = vpop.xlane.xlu0 %622
    %v624 = vrcp.pop %v614
    %v625 = vrcp.pop %v617
    %v626 = vrcp.pop %v620
    %v627 = vrcp.pop %v623
    %v628 = vmul.f32 %v605, %v624
    %v629 = vmul.f32 %v607, %v625
    %v630 = vmul.f32 %v609, %v626
    %v631 = vmul.f32 %v611, %v627
    %v632 = vpack.c.bf16 %v628, %v628
    %v633 = vpack.c.bf16 %v629, %v629
    %v634 = vpack.c.bf16 %v630, %v630
    %v635 = vpack.c.bf16 %v631, %v631
    %v638 = vunpack.c.l.b16 %v632
    %v639 = vunpack.c.l.b16 %v633
    %v640 = vpack.c.b16 %v639, %v638
    %641 = vrot.lane.b32.xlu0 %v489, 112
    %v642 = vpop.permute.xlu0 %641
    %v645 = vsel %vm376, %v640, 0
    %647 = vmatpush.bf16.msra.mxu0 0
    %648 = vmatpush.bf16.msra.mxu0 0
    %649 = vmatpush.bf16.msra.mxu0 0
    %650 = vmatpush.bf16.msra.mxu0 0
    %651 = vmatpush.bf16.msra.mxu0 0
    %652 = vmatpush.bf16.msra.mxu0 0
    %653 = vmatpush.bf16.msra.mxu0 0
    %654 = vmatpush.bf16.msra.mxu0 %v642
    %655 = vmatmul.bf16.gmra.mxu0 %v645
    %v656 = vpop.f32.mrf.mxu0
    %v657 = vadd.f32 0.0, %v656
    %v658 = vpop.f32.mrf.mxu0
    %v659 = vadd.f32 0.0, %v658
    %660 = vdwg.mxu0
    %v663 = vunpack.c.l.b16 %v634
    %v664 = vunpack.c.l.b16 %v635
    %v665 = vpack.c.b16 %v664, %v663
    %666 = vrot.lane.b32.xlu0 %v517, 112
    %v667 = vpop.permute.xlu0 %666
    %v670 = vsel %vm376, %v665, 0
    %672 = vmatpush.bf16.msra.mxu0 0
    %673 = vmatpush.bf16.msra.mxu0 0
    %674 = vmatpush.bf16.msra.mxu0 0
    %675 = vmatpush.bf16.msra.mxu0 0
    %676 = vmatpush.bf16.msra.mxu0 0
    %677 = vmatpush.bf16.msra.mxu0 0
    %678 = vmatpush.bf16.msra.mxu0 0
    %679 = vmatpush.bf16.msra.mxu0 %v667
    %680 = vmatmul.bf16.gmra.mxu0 %v670
    %v681 = vpop.f32.mrf.mxu0
    %v682 = vadd.f32 0.0, %v681
    %v683 = vpop.f32.mrf.mxu0
    %v684 = vadd.f32 0.0, %v683
    %685 = vdwg.mxu0
    %686 = vrot.lane.b32.xlu0 %v373, 96
    %v687 = vpop.permute.xlu0 %686
    %688 = vrot.lane.b32.xlu0 %v373, 32
    %v689 = vpop.permute.xlu0 %688
    %v691 = vsel %vm376, %v687, 0
    %v694 = vsel %vm376, %v689, 0
    %696 = vmatpush.bf16.xpose.msra.mxu0 0
    %697 = vmatpush.bf16.xpose.msra.mxu0 0
    %698 = vmatpush.bf16.xpose.msra.mxu0 0
    %699 = vmatpush.bf16.xpose.msra.mxu0 0
    %700 = vmatpush.bf16.xpose.msra.mxu0 0
    %701 = vmatpush.bf16.xpose.msra.mxu0 0
    %702 = vmatpush.bf16.xpose.msra.mxu0 0
    %703 = vmatpush.bf16.xpose.msra.mxu0 %v694
    %704 = vmatmul.bf16.gmra.mxu0 %v691
    %v705 = vpop.f32.mrf.mxu0
    %v706 = vadd.f32 0.0, %v705
    %v707 = vpop.f32.mrf.mxu0
    %v708 = vadd.f32 0.0, %v707
    %709 = vdwg.mxu0
    %710 = vrot.lane.b32.xlu0 %v401, 96
    %v711 = vpop.permute.xlu0 %710
    %712 = vrot.lane.b32.xlu0 %v401, 32
    %v713 = vpop.permute.xlu0 %712
    %v715 = vsel %vm376, %v711, 0
    %v718 = vsel %vm376, %v713, 0
    %720 = vmatpush.bf16.xpose.msra.mxu0 0
    %721 = vmatpush.bf16.xpose.msra.mxu0 0
    %722 = vmatpush.bf16.xpose.msra.mxu0 0
    %723 = vmatpush.bf16.xpose.msra.mxu0 0
    %724 = vmatpush.bf16.xpose.msra.mxu0 0
    %725 = vmatpush.bf16.xpose.msra.mxu0 0
    %726 = vmatpush.bf16.xpose.msra.mxu0 0
    %727 = vmatpush.bf16.xpose.msra.mxu0 %v718
    %728 = vmatmul.bf16.gmra.mxu0 %v715
    %v729 = vpop.f32.mrf.mxu0
    %v730 = vadd.f32 0.0, %v729
    %v731 = vpop.f32.mrf.mxu0
    %v732 = vadd.f32 0.0, %v731
    %733 = vdwg.mxu0
    %v734 = vsel %vm426, %v706, -1e+30
    %v735 = vsel %vm427, %v708, -1e+30
    %v736 = vsel %vm426, %v730, -1e+30
    %v737 = vsel %vm427, %v732, -1e+30
    %v738 = vsel %vm376, %v734, -inf
    %739 = vmax.xlane.f32.xlu0 %v738
    %v740 = vpop.xlane.xlu0 %739
    %v741 = vsel %vm376, %v735, -inf
    %742 = vmax.xlane.f32.xlu0 %v741
    %v743 = vpop.xlane.xlu0 %742
    %v744 = vsel %vm376, %v736, -inf
    %745 = vmax.xlane.f32.xlu0 %v744
    %v746 = vpop.xlane.xlu0 %745
    %v747 = vsel %vm376, %v737, -inf
    %748 = vmax.xlane.f32.xlu0 %v747
    %v749 = vpop.xlane.xlu0 %748
    %v750 = vsub.f32 %v734, %v740
    %v751 = vsub.f32 %v735, %v743
    %v752 = vsub.f32 %v736, %v746
    %v753 = vsub.f32 %v737, %v749
    %v754 = vmul.f32 %v750, 1.442695
    %v755 = vpow.pop %v754
    %v756 = vmul.f32 %v751, 1.442695
    %v757 = vpow.pop %v756
    %v758 = vmul.f32 %v752, 1.442695
    %v759 = vpow.pop %v758
    %v760 = vmul.f32 %v753, 1.442695
    %v761 = vpow.pop %v760
    %v762 = vsel %vm376, %v755, 0.0
    %763 = vadd.xlane.f32.xlu0 %v762
    %v764 = vpop.xlane.xlu0 %763
    %v765 = vsel %vm376, %v757, 0.0
    %766 = vadd.xlane.f32.xlu0 %v765
    %v767 = vpop.xlane.xlu0 %766
    %v768 = vsel %vm376, %v759, 0.0
    %769 = vadd.xlane.f32.xlu0 %v768
    %v770 = vpop.xlane.xlu0 %769
    %v771 = vsel %vm376, %v761, 0.0
    %772 = vadd.xlane.f32.xlu0 %v771
    %v773 = vpop.xlane.xlu0 %772
    %v774 = vrcp.pop %v764
    %v775 = vrcp.pop %v767
    %v776 = vrcp.pop %v770
    %v777 = vrcp.pop %v773
    %v778 = vmul.f32 %v755, %v774
    %v779 = vmul.f32 %v757, %v775
    %v780 = vmul.f32 %v759, %v776
    %v781 = vmul.f32 %v761, %v777
    %v782 = vpack.c.bf16 %v778, %v778
    %v783 = vpack.c.bf16 %v779, %v779
    %v784 = vpack.c.bf16 %v780, %v780
    %v785 = vpack.c.bf16 %v781, %v781
    %v788 = vunpack.c.l.b16 %v782
    %v789 = vunpack.c.l.b16 %v783
    %v790 = vpack.c.b16 %v789, %v788
    %791 = vrot.lane.b32.xlu0 %v489, 96
    %v792 = vpop.permute.xlu0 %791
    %v795 = vsel %vm376, %v790, 0
    %797 = vmatpush.bf16.msra.mxu0 0
    %798 = vmatpush.bf16.msra.mxu0 0
    %799 = vmatpush.bf16.msra.mxu0 0
    %800 = vmatpush.bf16.msra.mxu0 0
    %801 = vmatpush.bf16.msra.mxu0 0
    %802 = vmatpush.bf16.msra.mxu0 0
    %803 = vmatpush.bf16.msra.mxu0 0
    %804 = vmatpush.bf16.msra.mxu0 %v792
    %805 = vmatmul.bf16.gmra.mxu0 %v795
    %v806 = vpop.f32.mrf.mxu0
    %v807 = vadd.f32 0.0, %v806
    %v808 = vpop.f32.mrf.mxu0
    %v809 = vadd.f32 0.0, %v808
    %810 = vdwg.mxu0
    %v813 = vunpack.c.l.b16 %v784
    %v814 = vunpack.c.l.b16 %v785
    %v815 = vpack.c.b16 %v814, %v813
    %816 = vrot.lane.b32.xlu0 %v517, 96
    %v817 = vpop.permute.xlu0 %816
    %v820 = vsel %vm376, %v815, 0
    %822 = vmatpush.bf16.msra.mxu0 0
    %823 = vmatpush.bf16.msra.mxu0 0
    %824 = vmatpush.bf16.msra.mxu0 0
    %825 = vmatpush.bf16.msra.mxu0 0
    %826 = vmatpush.bf16.msra.mxu0 0
    %827 = vmatpush.bf16.msra.mxu0 0
    %828 = vmatpush.bf16.msra.mxu0 0
    %829 = vmatpush.bf16.msra.mxu0 %v817
    %830 = vmatmul.bf16.gmra.mxu0 %v820
    %v831 = vpop.f32.mrf.mxu0
    %v832 = vadd.f32 0.0, %v831
    %v833 = vpop.f32.mrf.mxu0
    %v834 = vadd.f32 0.0, %v833
    %835 = vdwg.mxu0
    %836 = vrot.lane.b32.xlu0 %v373, 80
    %v837 = vpop.permute.xlu0 %836
    %838 = vrot.lane.b32.xlu0 %v373, 16
    %v839 = vpop.permute.xlu0 %838
    %v841 = vsel %vm376, %v837, 0
    %v844 = vsel %vm376, %v839, 0
    %846 = vmatpush.bf16.xpose.msra.mxu0 0
    %847 = vmatpush.bf16.xpose.msra.mxu0 0
    %848 = vmatpush.bf16.xpose.msra.mxu0 0
    %849 = vmatpush.bf16.xpose.msra.mxu0 0
    %850 = vmatpush.bf16.xpose.msra.mxu0 0
    %851 = vmatpush.bf16.xpose.msra.mxu0 0
    %852 = vmatpush.bf16.xpose.msra.mxu0 0
    %853 = vmatpush.bf16.xpose.msra.mxu0 %v844
    %854 = vmatmul.bf16.gmra.mxu0 %v841
    %v855 = vpop.f32.mrf.mxu0
    %v856 = vadd.f32 0.0, %v855
    %v857 = vpop.f32.mrf.mxu0
    %v858 = vadd.f32 0.0, %v857
    %859 = vdwg.mxu0
    %860 = vrot.lane.b32.xlu0 %v401, 80
    %v861 = vpop.permute.xlu0 %860
    %862 = vrot.lane.b32.xlu0 %v401, 16
    %v863 = vpop.permute.xlu0 %862
    %v865 = vsel %vm376, %v861, 0
    %v868 = vsel %vm376, %v863, 0
    %870 = vmatpush.bf16.xpose.msra.mxu0 0
    %871 = vmatpush.bf16.xpose.msra.mxu0 0
    %872 = vmatpush.bf16.xpose.msra.mxu0 0
    %873 = vmatpush.bf16.xpose.msra.mxu0 0
    %874 = vmatpush.bf16.xpose.msra.mxu0 0
    %875 = vmatpush.bf16.xpose.msra.mxu0 0
    %876 = vmatpush.bf16.xpose.msra.mxu0 0
    %877 = vmatpush.bf16.xpose.msra.mxu0 %v868
    %878 = vmatmul.bf16.gmra.mxu0 %v865
    %v879 = vpop.f32.mrf.mxu0
    %v880 = vadd.f32 0.0, %v879
    %v881 = vpop.f32.mrf.mxu0
    %v882 = vadd.f32 0.0, %v881
    %883 = vdwg.mxu0
    %v884 = vsel %vm426, %v856, -1e+30
    %v885 = vsel %vm427, %v858, -1e+30
    %v886 = vsel %vm426, %v880, -1e+30
    %v887 = vsel %vm427, %v882, -1e+30
    %v888 = vsel %vm376, %v884, -inf
    %889 = vmax.xlane.f32.xlu0 %v888
    %v890 = vpop.xlane.xlu0 %889
    %v891 = vsel %vm376, %v885, -inf
    %892 = vmax.xlane.f32.xlu0 %v891
    %v893 = vpop.xlane.xlu0 %892
    %v894 = vsel %vm376, %v886, -inf
    %895 = vmax.xlane.f32.xlu0 %v894
    %v896 = vpop.xlane.xlu0 %895
    %v897 = vsel %vm376, %v887, -inf
    %898 = vmax.xlane.f32.xlu0 %v897
    %v899 = vpop.xlane.xlu0 %898
    %v900 = vsub.f32 %v884, %v890
    %v901 = vsub.f32 %v885, %v893
    %v902 = vsub.f32 %v886, %v896
    %v903 = vsub.f32 %v887, %v899
    %v904 = vmul.f32 %v900, 1.442695
    %v905 = vpow.pop %v904
    %v906 = vmul.f32 %v901, 1.442695
    %v907 = vpow.pop %v906
    %v908 = vmul.f32 %v902, 1.442695
    %v909 = vpow.pop %v908
    %v910 = vmul.f32 %v903, 1.442695
    %v911 = vpow.pop %v910
    %v912 = vsel %vm376, %v905, 0.0
    %913 = vadd.xlane.f32.xlu0 %v912
    %v914 = vpop.xlane.xlu0 %913
    %v915 = vsel %vm376, %v907, 0.0
    %916 = vadd.xlane.f32.xlu0 %v915
    %v917 = vpop.xlane.xlu0 %916
    %v918 = vsel %vm376, %v909, 0.0
    %919 = vadd.xlane.f32.xlu0 %v918
    %v920 = vpop.xlane.xlu0 %919
    %v921 = vsel %vm376, %v911, 0.0
    %922 = vadd.xlane.f32.xlu0 %v921
    %v923 = vpop.xlane.xlu0 %922
    %v924 = vrcp.pop %v914
    %v925 = vrcp.pop %v917
    %v926 = vrcp.pop %v920
    %v927 = vrcp.pop %v923
    %v928 = vmul.f32 %v905, %v924
    %v929 = vmul.f32 %v907, %v925
    %v930 = vmul.f32 %v909, %v926
    %v931 = vmul.f32 %v911, %v927
    %v932 = vpack.c.bf16 %v928, %v928
    %v933 = vpack.c.bf16 %v929, %v929
    %v934 = vpack.c.bf16 %v930, %v930
    %v935 = vpack.c.bf16 %v931, %v931
    %v938 = vunpack.c.l.b16 %v932
    %v939 = vunpack.c.l.b16 %v933
    %v940 = vpack.c.b16 %v939, %v938
    %941 = vrot.lane.b32.xlu0 %v489, 80
    %v942 = vpop.permute.xlu0 %941
    %v945 = vsel %vm376, %v940, 0
    %947 = vmatpush.bf16.msra.mxu0 0
    %948 = vmatpush.bf16.msra.mxu0 0
    %949 = vmatpush.bf16.msra.mxu0 0
    %950 = vmatpush.bf16.msra.mxu0 0
    %951 = vmatpush.bf16.msra.mxu0 0
    %952 = vmatpush.bf16.msra.mxu0 0
    %953 = vmatpush.bf16.msra.mxu0 0
    %954 = vmatpush.bf16.msra.mxu0 %v942
    %955 = vmatmul.bf16.gmra.mxu0 %v945
    %v956 = vpop.f32.mrf.mxu0
    %v957 = vadd.f32 0.0, %v956
    %v958 = vpop.f32.mrf.mxu0
    %v959 = vadd.f32 0.0, %v958
    %960 = vdwg.mxu0
    %v963 = vunpack.c.l.b16 %v934
    %v964 = vunpack.c.l.b16 %v935
    %v965 = vpack.c.b16 %v964, %v963
    %966 = vrot.lane.b32.xlu0 %v517, 80
    %v967 = vpop.permute.xlu0 %966
    %v970 = vsel %vm376, %v965, 0
    %972 = vmatpush.bf16.msra.mxu0 0
    %973 = vmatpush.bf16.msra.mxu0 0
    %974 = vmatpush.bf16.msra.mxu0 0
    %975 = vmatpush.bf16.msra.mxu0 0
    %976 = vmatpush.bf16.msra.mxu0 0
    %977 = vmatpush.bf16.msra.mxu0 0
    %978 = vmatpush.bf16.msra.mxu0 0
    %979 = vmatpush.bf16.msra.mxu0 %v967
    %980 = vmatmul.bf16.gmra.mxu0 %v970
    %v981 = vpop.f32.mrf.mxu0
    %v982 = vadd.f32 0.0, %v981
    %v983 = vpop.f32.mrf.mxu0
    %v984 = vadd.f32 0.0, %v983
    %985 = vdwg.mxu0
    %990 = vrot.lane.b32.xlu0 %v657, 16
    %v991 = vpop.permute.xlu0 %990
    %992 = vrot.lane.b32.xlu0 %v659, 16
    %v993 = vpop.permute.xlu0 %992
    %994 = vrot.lane.b32.xlu0 %v682, 16
    %v995 = vpop.permute.xlu0 %994
    %996 = vrot.lane.b32.xlu0 %v684, 16
    %v997 = vpop.permute.xlu0 %996
    %1006 = vrot.lane.b32.xlu0 %v807, 32
    %v1007 = vpop.permute.xlu0 %1006
    %1008 = vrot.lane.b32.xlu0 %v809, 32
    %v1009 = vpop.permute.xlu0 %1008
    %1010 = vrot.lane.b32.xlu0 %v832, 32
    %v1011 = vpop.permute.xlu0 %1010
    %1012 = vrot.lane.b32.xlu0 %v834, 32
    %v1013 = vpop.permute.xlu0 %1012
    %1022 = vrot.lane.b32.xlu0 %v957, 48
    %v1023 = vpop.permute.xlu0 %1022
    %1024 = vrot.lane.b32.xlu0 %v959, 48
    %v1025 = vpop.permute.xlu0 %1024
    %1026 = vrot.lane.b32.xlu0 %v982, 48
    %v1027 = vpop.permute.xlu0 %1026
    %1028 = vrot.lane.b32.xlu0 %v984, 48
    %v1029 = vpop.permute.xlu0 %1028
    %v1034 = vsel %vm376, %v504, %v991
    %v1035 = vsel %vm376, %v506, %v993
    %v1036 = vsel %vm376, %v532, %v995
    %v1037 = vsel %vm376, %v534, %v997
    %vm1038 = vcmask 261120
    %v1039 = vsel %vm1038, %v1034, %v1007
    %v1040 = vsel %vm1038, %v1035, %v1009
    %v1041 = vsel %vm1038, %v1036, %v1011
    %v1042 = vsel %vm1038, %v1037, %v1013
    %vm1043 = vcmask 392192
    %v1044 = vsel %vm1043, %v1039, %v1023
    %v1045 = vsel %vm1043, %v1040, %v1025
    %v1046 = vsel %vm1043, %v1041, %v1027
    %v1047 = vsel %vm1043, %v1042, %v1029
    %v1048 = vpack.c.bf16 %v1045, %v1044
    %v1049 = vpack.c.bf16 %v1047, %v1046
    %v1050 = vld [vmem:[%s6] sm:$0xf]
    %v1051 = vld [vmem:[%s6 + $0x4] sm:$0xf]
    %v1052 = vld [vmem:[%s6 + $0x8] sm:$0xf]
    %v1053 = vld [vmem:[%s6 + $0xc] sm:$0xf]
    %v1054 = vld [vmem:[%s6 + $0x10] sm:$0xf]
    %v1055 = vld [vmem:[%s6 + $0x14] sm:$0xf]
    %v1056 = vld [vmem:[%s6 + $0x18] sm:$0xf]
    %v1057 = vld [vmem:[%s6 + $0x1c] sm:$0xf]
    %v1058 = vld [vmem:[%s7] sm:$0x1]
    %v1060 = vperm.slane %v1058, 0
    %v1070 = vunpack.c.l.b16 %v1050
    %v1071 = vunpack.c.l.b16 %v1051
    %v1072 = vunpack.c.l.b16 %v1052
    %v1073 = vunpack.c.l.b16 %v1053
    %v1074 = vunpack.c.l.b16 %v1054
    %v1075 = vunpack.c.l.b16 %v1055
    %v1076 = vunpack.c.l.b16 %v1056
    %v1077 = vunpack.c.l.b16 %v1057
    %v1078 = vpack.c.b16 %v1071, %v1070
    %v1079 = vpack.c.b16 %v1073, %v1072
    %v1080 = vpack.c.b16 %v1075, %v1074
    %v1081 = vpack.c.b16 %v1077, %v1076
    %v1087 = vsel %vm149, %v1048, 0
    %v1090 = vsel %vm149, %v1049, 0
    %1092 = vmatpush.bf16.msra.mxu0 0
    %1093 = vmatpush.bf16.msra.mxu0 0
    %1094 = vmatpush.bf16.msra.mxu0 0
    %1095 = vmatpush.bf16.msra.mxu0 0
    %1096 = vmatpush.bf16.msra.mxu0 %v1081
    %1097 = vmatpush.bf16.msra.mxu0 %v1080
    %1098 = vmatpush.bf16.msra.mxu0 %v1079
    %1099 = vmatpush.bf16.msra.mxu0 %v1078
    %1100 = vmatmul.bf16.gmra.mxu0 %v1087
    %v1101 = vpop.f32.mrf.mxu0
    %v1102 = vadd.f32 %v1060, %v1101
    %v1103 = vpop.f32.mrf.mxu0
    %v1104 = vadd.f32 %v1060, %v1103
    %1105 = vmatmul.bf16.gmra.mxu0 %v1090
    %v1106 = vpop.f32.mrf.mxu0
    %v1107 = vadd.f32 %v1060, %v1106
    %v1108 = vpop.f32.mrf.mxu0
    %v1109 = vadd.f32 %v1060, %v1108
    %1110 = vdwg.mxu0
    %v1111 = vadd.f32 %v138, %v1102
    %v1112 = vadd.f32 %v139, %v1104
    %v1113 = vadd.f32 %v140, %v1107
    %v1114 = vadd.f32 %v141, %v1109
    %v1115 = vld [vmem:[%s8] sm:$0x1]
    %v1116 = vld [vmem:[%s9] sm:$0x1]
    %v1117 = vsel %vm149, %v1111, 0.0
    %1118 = vadd.xlane.f32.xlu0 %v1117
    %v1119 = vpop.xlane.xlu0 %1118
    %v1120 = vsel %vm149, %v1112, 0.0
    %1121 = vadd.xlane.f32.xlu0 %v1120
    %v1122 = vpop.xlane.xlu0 %1121
    %v1123 = vsel %vm149, %v1113, 0.0
    %1124 = vadd.xlane.f32.xlu0 %v1123
    %v1125 = vpop.xlane.xlu0 %1124
    %v1126 = vsel %vm149, %v1114, 0.0
    %1127 = vadd.xlane.f32.xlu0 %v1126
    %v1128 = vpop.xlane.xlu0 %1127
    %v1129 = vmul.f32 %v1119, %v168
    %v1130 = vmul.f32 %v1122, %v168
    %v1131 = vmul.f32 %v1125, %v168
    %v1132 = vmul.f32 %v1128, %v168
    %v1133 = vmul.f32 %v1111, %v1111
    %v1134 = vmul.f32 %v1112, %v1112
    %v1135 = vmul.f32 %v1113, %v1113
    %v1136 = vmul.f32 %v1114, %v1114
    %v1137 = vsel %vm149, %v1133, 0.0
    %1138 = vadd.xlane.f32.xlu0 %v1137
    %v1139 = vpop.xlane.xlu0 %1138
    %v1140 = vsel %vm149, %v1134, 0.0
    %1141 = vadd.xlane.f32.xlu0 %v1140
    %v1142 = vpop.xlane.xlu0 %1141
    %v1143 = vsel %vm149, %v1135, 0.0
    %1144 = vadd.xlane.f32.xlu0 %v1143
    %v1145 = vpop.xlane.xlu0 %1144
    %v1146 = vsel %vm149, %v1136, 0.0
    %1147 = vadd.xlane.f32.xlu0 %v1146
    %v1148 = vpop.xlane.xlu0 %1147
    %v1149 = vmul.f32 %v1139, %v168
    %v1150 = vmul.f32 %v1142, %v168
    %v1151 = vmul.f32 %v1145, %v168
    %v1152 = vmul.f32 %v1148, %v168
    %v1153 = vmul.f32 %v1129, %v1129
    %v1154 = vmul.f32 %v1130, %v1130
    %v1155 = vmul.f32 %v1131, %v1131
    %v1156 = vmul.f32 %v1132, %v1132
    %v1157 = vsub.f32 %v1149, %v1153
    %v1158 = vsub.f32 %v1150, %v1154
    %v1159 = vsub.f32 %v1151, %v1155
    %v1160 = vsub.f32 %v1152, %v1156
    %v1161 = vsub.f32 %v1111, %v1129
    %v1162 = vsub.f32 %v1112, %v1130
    %v1163 = vsub.f32 %v1113, %v1131
    %v1164 = vsub.f32 %v1114, %v1132
    %v1165 = vadd.f32 %v1157, 1e-05
    %v1166 = vadd.f32 %v1158, 1e-05
    %v1167 = vadd.f32 %v1159, 1e-05
    %v1168 = vadd.f32 %v1160, 1e-05
    %v1169 = vrsqrt.pop %v1165
    %v1170 = vmul.f32 %v1169, %v1165
    %v1171 = vmul.f32 %v1170, %v1169
    %v1172 = vmul.f32 0.5, %v1171
    %v1173 = vsub.f32 1.5, %v1172
    %v1174 = vmul.f32 %v1169, %v1173
    %vm1175 = vweird.f32 %v1165
    %vm1176 = vweird.f32 %v1169
    %vm1177 = vmor %vm1175, %vm1176
    %v1178 = vsel %vm1177, %v1169, %v1174
    %v1179 = vrsqrt.pop %v1166
    %v1180 = vmul.f32 %v1179, %v1166
    %v1181 = vmul.f32 %v1180, %v1179
    %v1182 = vmul.f32 0.5, %v1181
    %v1183 = vsub.f32 1.5, %v1182
    %v1184 = vmul.f32 %v1179, %v1183
    %vm1185 = vweird.f32 %v1166
    %vm1186 = vweird.f32 %v1179
    %vm1187 = vmor %vm1185, %vm1186
    %v1188 = vsel %vm1187, %v1179, %v1184
    %v1189 = vrsqrt.pop %v1167
    %v1190 = vmul.f32 %v1189, %v1167
    %v1191 = vmul.f32 %v1190, %v1189
    %v1192 = vmul.f32 0.5, %v1191
    %v1193 = vsub.f32 1.5, %v1192
    %v1194 = vmul.f32 %v1189, %v1193
    %vm1195 = vweird.f32 %v1167
    %vm1196 = vweird.f32 %v1189
    %vm1197 = vmor %vm1195, %vm1196
    %v1198 = vsel %vm1197, %v1189, %v1194
    %v1199 = vrsqrt.pop %v1168
    %v1200 = vmul.f32 %v1199, %v1168
    %v1201 = vmul.f32 %v1200, %v1199
    %v1202 = vmul.f32 0.5, %v1201
    %v1203 = vsub.f32 1.5, %v1202
    %v1204 = vmul.f32 %v1199, %v1203
    %vm1205 = vweird.f32 %v1168
    %vm1206 = vweird.f32 %v1199
    %vm1207 = vmor %vm1205, %vm1206
    %v1208 = vsel %vm1207, %v1199, %v1204
    %v1209 = vmul.f32 %v1161, %v1178
    %v1210 = vmul.f32 %v1162, %v1188
    %v1211 = vmul.f32 %v1163, %v1198
    %v1212 = vmul.f32 %v1164, %v1208
    %v1214 = vperm.slane %v1115, 0
    %v1216 = vmul.f32 %v1209, %v1214
    %v1217 = vmul.f32 %v1210, %v1214
    %v1218 = vmul.f32 %v1211, %v1214
    %v1219 = vmul.f32 %v1212, %v1214
    %v1221 = vperm.slane %v1116, 0
    %v1223 = vadd.f32 %v1216, %v1221
    %v1224 = vadd.f32 %v1217, %v1221
    %v1225 = vadd.f32 %v1218, %v1221
    %v1226 = vadd.f32 %v1219, %v1221
    %v1227 = vpack.c.bf16 %v1224, %v1223
    %v1228 = vpack.c.bf16 %v1226, %v1225
    %v1229 = vld [vmem:[%s10] sm:$0xff]
    %v1230 = vld [vmem:[%s10 + $0x8] sm:$0xff]
    %v1231 = vld [vmem:[%s10 + $0x10] sm:$0xff]
    %v1232 = vld [vmem:[%s10 + $0x18] sm:$0xff]
    %v1233 = vld [vmem:[%s10 + $0x20] sm:$0xff]
    %v1234 = vld [vmem:[%s10 + $0x28] sm:$0xff]
    %v1235 = vld [vmem:[%s10 + $0x30] sm:$0xff]
    %v1236 = vld [vmem:[%s10 + $0x38] sm:$0xff]
    %v1237 = vld [vmem:[%s11] sm:$0x3]
    %v1239 = vperm.slane %v1237, 0
    %v1240 = vperm.slane %v1237, 1
    %v1251 = vunpack.c.l.b16 %v1229
    %v1252 = vunpack.c.h.b16 %v1229
    %v1253 = vunpack.c.l.b16 %v1230
    %v1254 = vunpack.c.h.b16 %v1230
    %v1255 = vunpack.c.l.b16 %v1231
    %v1256 = vunpack.c.h.b16 %v1231
    %v1257 = vunpack.c.l.b16 %v1232
    %v1258 = vunpack.c.h.b16 %v1232
    %v1259 = vunpack.c.l.b16 %v1233
    %v1260 = vunpack.c.h.b16 %v1233
    %v1261 = vunpack.c.l.b16 %v1234
    %v1262 = vunpack.c.h.b16 %v1234
    %v1263 = vunpack.c.l.b16 %v1235
    %v1264 = vunpack.c.h.b16 %v1235
    %v1265 = vunpack.c.l.b16 %v1236
    %v1266 = vunpack.c.h.b16 %v1236
    %v1267 = vpack.c.b16 %v1253, %v1251
    %v1268 = vpack.c.b16 %v1254, %v1252
    %v1269 = vpack.c.b16 %v1257, %v1255
    %v1270 = vpack.c.b16 %v1258, %v1256
    %v1271 = vpack.c.b16 %v1261, %v1259
    %v1272 = vpack.c.b16 %v1262, %v1260
    %v1273 = vpack.c.b16 %v1265, %v1263
    %v1274 = vpack.c.b16 %v1266, %v1264
    %v1284 = vsel %vm149, %v1227, 0
    %v1287 = vsel %vm149, %v1228, 0
    %1289 = vmatpush.bf16.msra.mxu0 0
    %1290 = vmatpush.bf16.msra.mxu0 0
    %1291 = vmatpush.bf16.msra.mxu0 0
    %1292 = vmatpush.bf16.msra.mxu0 0
    %1293 = vmatpush.bf16.msra.mxu0 %v1273
    %1294 = vmatpush.bf16.msra.mxu0 %v1271
    %1295 = vmatpush.bf16.msra.mxu0 %v1269
    %1296 = vmatpush.bf16.msra.mxu0 %v1267
    %1297 = vmatmul.bf16.gmra.mxu0 %v1284
    %v1298 = vpop.f32.mrf.mxu0
    %v1299 = vadd.f32 %v1239, %v1298
    %v1300 = vpop.f32.mrf.mxu0
    %v1301 = vadd.f32 %v1239, %v1300
    %1302 = vmatmul.bf16.gmra.mxu0 %v1287
    %v1303 = vpop.f32.mrf.mxu0
    %v1304 = vadd.f32 %v1239, %v1303
    %v1305 = vpop.f32.mrf.mxu0
    %v1306 = vadd.f32 %v1239, %v1305
    %1307 = vdwg.mxu0
    %1308 = vmatpush.bf16.msra.mxu0 0
    %1309 = vmatpush.bf16.msra.mxu0 0
    %1310 = vmatpush.bf16.msra.mxu0 0
    %1311 = vmatpush.bf16.msra.mxu0 0
    %1312 = vmatpush.bf16.msra.mxu0 %v1274
    %1313 = vmatpush.bf16.msra.mxu0 %v1272
    %1314 = vmatpush.bf16.msra.mxu0 %v1270
    %1315 = vmatpush.bf16.msra.mxu0 %v1268
    %1316 = vmatmul.bf16.gmra.mxu0 %v1284
    %v1317 = vpop.f32.mrf.mxu0
    %v1318 = vadd.f32 %v1240, %v1317
    %v1319 = vpop.f32.mrf.mxu0
    %v1320 = vadd.f32 %v1240, %v1319
    %1321 = vmatmul.bf16.gmra.mxu0 %v1287
    %v1322 = vpop.f32.mrf.mxu0
    %v1323 = vadd.f32 %v1240, %v1322
    %v1324 = vpop.f32.mrf.mxu0
    %v1325 = vadd.f32 %v1240, %v1324
    %1326 = vdwg.mxu0
    %v1327 = vmax.f32 %v1299, 0.0
    %v1328 = vmax.f32 %v1318, 0.0
    %v1329 = vmax.f32 %v1301, 0.0
    %v1330 = vmax.f32 %v1320, 0.0
    %v1331 = vmax.f32 %v1304, 0.0
    %v1332 = vmax.f32 %v1323, 0.0
    %v1333 = vmax.f32 %v1306, 0.0
    %v1334 = vmax.f32 %v1325, 0.0
    %v1335 = vpack.c.bf16 %v1329, %v1327
    %v1336 = vpack.c.bf16 %v1330, %v1328
    %v1337 = vpack.c.bf16 %v1333, %v1331
    %v1338 = vpack.c.bf16 %v1334, %v1332
    %v1339 = vld [vmem:[%s12] sm:$0xf]
    %v1340 = vld [vmem:[%s12 + $0x4] sm:$0xf]
    %v1341 = vld [vmem:[%s12 + $0x8] sm:$0xf]
    %v1342 = vld [vmem:[%s12 + $0xc] sm:$0xf]
    %v1343 = vld [vmem:[%s12 + $0x10] sm:$0xf]
    %v1344 = vld [vmem:[%s12 + $0x14] sm:$0xf]
    %v1345 = vld [vmem:[%s12 + $0x18] sm:$0xf]
    %v1346 = vld [vmem:[%s12 + $0x1c] sm:$0xf]
    %v1347 = vld [vmem:[%s12 + $0x20] sm:$0xf]
    %v1348 = vld [vmem:[%s12 + $0x24] sm:$0xf]
    %v1349 = vld [vmem:[%s12 + $0x28] sm:$0xf]
    %v1350 = vld [vmem:[%s12 + $0x2c] sm:$0xf]
    %v1351 = vld [vmem:[%s12 + $0x30] sm:$0xf]
    %v1352 = vld [vmem:[%s12 + $0x34] sm:$0xf]
    %v1353 = vld [vmem:[%s12 + $0x38] sm:$0xf]
    %v1354 = vld [vmem:[%s12 + $0x3c] sm:$0xf]
    %v1355 = vld [vmem:[%s12 + $0x40] sm:$0xf]
    %v1356 = vld [vmem:[%s12 + $0x44] sm:$0xf]
    %v1357 = vld [vmem:[%s12 + $0x48] sm:$0xf]
    %v1358 = vld [vmem:[%s12 + $0x4c] sm:$0xf]
    %v1359 = vld [vmem:[%s12 + $0x50] sm:$0xf]
    %v1360 = vld [vmem:[%s12 + $0x54] sm:$0xf]
    %v1361 = vld [vmem:[%s12 + $0x58] sm:$0xf]
    %v1362 = vld [vmem:[%s12 + $0x5c] sm:$0xf]
    %v1363 = vld [vmem:[%s12 + $0x60] sm:$0xf]
    %v1364 = vld [vmem:[%s12 + $0x64] sm:$0xf]
    %v1365 = vld [vmem:[%s12 + $0x68] sm:$0xf]
    %v1366 = vld [vmem:[%s12 + $0x6c] sm:$0xf]
    %v1367 = vld [vmem:[%s12 + $0x70] sm:$0xf]
    %v1368 = vld [vmem:[%s12 + $0x74] sm:$0xf]
    %v1369 = vld [vmem:[%s12 + $0x78] sm:$0xf]
    %v1370 = vld [vmem:[%s12 + $0x7c] sm:$0xf]
    %v1371 = vld [vmem:[%s13] sm:$0x1]
    %v1373 = vperm.slane %v1371, 0
    %v1407 = vunpack.c.l.b16 %v1339
    %v1408 = vunpack.c.l.b16 %v1340
    %v1409 = vunpack.c.l.b16 %v1341
    %v1410 = vunpack.c.l.b16 %v1342
    %v1411 = vunpack.c.l.b16 %v1343
    %v1412 = vunpack.c.l.b16 %v1344
    %v1413 = vunpack.c.l.b16 %v1345
    %v1414 = vunpack.c.l.b16 %v1346
    %v1415 = vunpack.c.l.b16 %v1347
    %v1416 = vunpack.c.l.b16 %v1348
    %v1417 = vunpack.c.l.b16 %v1349
    %v1418 = vunpack.c.l.b16 %v1350
    %v1419 = vunpack.c.l.b16 %v1351
    %v1420 = vunpack.c.l.b16 %v1352
    %v1421 = vunpack.c.l.b16 %v1353
    %v1422 = vunpack.c.l.b16 %v1354
    %v1423 = vunpack.c.l.b16 %v1355
    %v1424 = vunpack.c.l.b16 %v1356
    %v1425 = vunpack.c.l.b16 %v1357
    %v1426 = vunpack.c.l.b16 %v1358
    %v1427 = vunpack.c.l.b16 %v1359
    %v1428 = vunpack.c.l.b16 %v1360
    %v1429 = vunpack.c.l.b16 %v1361
    %v1430 = vunpack.c.l.b16 %v1362
    %v1431 = vunpack.c.l.b16 %v1363
    %v1432 = vunpack.c.l.b16 %v1364
    %v1433 = vunpack.c.l.b16 %v1365
    %v1434 = vunpack.c.l.b16 %v1366
    %v1435 = vunpack.c.l.b16 %v1367
    %v1436 = vunpack.c.l.b16 %v1368
    %v1437 = vunpack.c.l.b16 %v1369
    %v1438 = vunpack.c.l.b16 %v1370
    %v1439 = vpack.c.b16 %v1408, %v1407
    %v1440 = vpack.c.b16 %v1410, %v1409
    %v1441 = vpack.c.b16 %v1412, %v1411
    %v1442 = vpack.c.b16 %v1414, %v1413
    %v1443 = vpack.c.b16 %v1416, %v1415
    %v1444 = vpack.c.b16 %v1418, %v1417
    %v1445 = vpack.c.b16 %v1420, %v1419
    %v1446 = vpack.c.b16 %v1422, %v1421
    %v1447 = vpack.c.b16 %v1424, %v1423
    %v1448 = vpack.c.b16 %v1426, %v1425
    %v1449 = vpack.c.b16 %v1428, %v1427
    %v1450 = vpack.c.b16 %v1430, %v1429
    %v1451 = vpack.c.b16 %v1432, %v1431
    %v1452 = vpack.c.b16 %v1434, %v1433
    %v1453 = vpack.c.b16 %v1436, %v1435
    %v1454 = vpack.c.b16 %v1438, %v1437
    %1471 = vmatpush.bf16.msra.mxu0 %v1446
    %1472 = vmatpush.bf16.msra.mxu0 %v1445
    %1473 = vmatpush.bf16.msra.mxu0 %v1444
    %1474 = vmatpush.bf16.msra.mxu0 %v1443
    %1475 = vmatpush.bf16.msra.mxu0 %v1442
    %1476 = vmatpush.bf16.msra.mxu0 %v1441
    %1477 = vmatpush.bf16.msra.mxu0 %v1440
    %1478 = vmatpush.bf16.msra.mxu0 %v1439
    %1479 = vmatmul.bf16.gmra.mxu0 %v1335
    %v1480 = vpop.f32.mrf.mxu0
    %v1481 = vadd.f32 %v1373, %v1480
    %v1482 = vpop.f32.mrf.mxu0
    %v1483 = vadd.f32 %v1373, %v1482
    %1484 = vmatmul.bf16.gmra.mxu0 %v1337
    %v1485 = vpop.f32.mrf.mxu0
    %v1486 = vadd.f32 %v1373, %v1485
    %v1487 = vpop.f32.mrf.mxu0
    %v1488 = vadd.f32 %v1373, %v1487
    %1489 = vdwg.mxu0
    %1490 = vmatpush.bf16.msra.mxu0 %v1454
    %1491 = vmatpush.bf16.msra.mxu0 %v1453
    %1492 = vmatpush.bf16.msra.mxu0 %v1452
    %1493 = vmatpush.bf16.msra.mxu0 %v1451
    %1494 = vmatpush.bf16.msra.mxu0 %v1450
    %1495 = vmatpush.bf16.msra.mxu0 %v1449
    %1496 = vmatpush.bf16.msra.mxu0 %v1448
    %1497 = vmatpush.bf16.msra.mxu0 %v1447
    %1498 = vmatmul.bf16.gmra.mxu0 %v1336
    %v1499 = vpop.f32.mrf.mxu0
    %v1500 = vadd.f32 %v1481, %v1499
    %v1501 = vpop.f32.mrf.mxu0
    %v1502 = vadd.f32 %v1483, %v1501
    %1503 = vmatmul.bf16.gmra.mxu0 %v1338
    %v1504 = vpop.f32.mrf.mxu0
    %v1505 = vadd.f32 %v1486, %v1504
    %v1506 = vpop.f32.mrf.mxu0
    %v1507 = vadd.f32 %v1488, %v1506
    %1508 = vdwg.mxu0
    %v1509 = vadd.f32 %v1111, %v1500
    %v1510 = vadd.f32 %v1112, %v1502
    %v1511 = vadd.f32 %v1113, %v1505
    %v1512 = vadd.f32 %v1114, %v1507
    %s1513 = scalar_lea.vmem %s3, 1
    %v1514 = vld [vmem:[%s1513] sm:$0x1]
    %s1515 = scalar_lea.vmem %s4, 1
    %v1516 = vld [vmem:[%s1515] sm:$0x1]
    %v1517 = vsel %vm149, %v1509, 0.0
    %1518 = vadd.xlane.f32.xlu0 %v1517
    %v1519 = vpop.xlane.xlu0 %1518
    %v1520 = vsel %vm149, %v1510, 0.0
    %1521 = vadd.xlane.f32.xlu0 %v1520
    %v1522 = vpop.xlane.xlu0 %1521
    %v1523 = vsel %vm149, %v1511, 0.0
    %1524 = vadd.xlane.f32.xlu0 %v1523
    %v1525 = vpop.xlane.xlu0 %1524
    %v1526 = vsel %vm149, %v1512, 0.0
    %1527 = vadd.xlane.f32.xlu0 %v1526
    %v1528 = vpop.xlane.xlu0 %1527
    %v1529 = vmul.f32 %v1519, %v168
    %v1530 = vmul.f32 %v1522, %v168
    %v1531 = vmul.f32 %v1525, %v168
    %v1532 = vmul.f32 %v1528, %v168
    %v1533 = vmul.f32 %v1509, %v1509
    %v1534 = vmul.f32 %v1510, %v1510
    %v1535 = vmul.f32 %v1511, %v1511
    %v1536 = vmul.f32 %v1512, %v1512
    %v1537 = vsel %vm149, %v1533, 0.0
    %1538 = vadd.xlane.f32.xlu0 %v1537
    %v1539 = vpop.xlane.xlu0 %1538
    %v1540 = vsel %vm149, %v1534, 0.0
    %1541 = vadd.xlane.f32.xlu0 %v1540
    %v1542 = vpop.xlane.xlu0 %1541
    %v1543 = vsel %vm149, %v1535, 0.0
    %1544 = vadd.xlane.f32.xlu0 %v1543
    %v1545 = vpop.xlane.xlu0 %1544
    %v1546 = vsel %vm149, %v1536, 0.0
    %1547 = vadd.xlane.f32.xlu0 %v1546
    %v1548 = vpop.xlane.xlu0 %1547
    %v1549 = vmul.f32 %v1539, %v168
    %v1550 = vmul.f32 %v1542, %v168
    %v1551 = vmul.f32 %v1545, %v168
    %v1552 = vmul.f32 %v1548, %v168
    %v1553 = vmul.f32 %v1529, %v1529
    %v1554 = vmul.f32 %v1530, %v1530
    %v1555 = vmul.f32 %v1531, %v1531
    %v1556 = vmul.f32 %v1532, %v1532
    %v1557 = vsub.f32 %v1549, %v1553
    %v1558 = vsub.f32 %v1550, %v1554
    %v1559 = vsub.f32 %v1551, %v1555
    %v1560 = vsub.f32 %v1552, %v1556
    %v1561 = vsub.f32 %v1509, %v1529
    %v1562 = vsub.f32 %v1510, %v1530
    %v1563 = vsub.f32 %v1511, %v1531
    %v1564 = vsub.f32 %v1512, %v1532
    %v1565 = vadd.f32 %v1557, 1e-05
    %v1566 = vadd.f32 %v1558, 1e-05
    %v1567 = vadd.f32 %v1559, 1e-05
    %v1568 = vadd.f32 %v1560, 1e-05
    %v1569 = vrsqrt.pop %v1565
    %v1570 = vmul.f32 %v1569, %v1565
    %v1571 = vmul.f32 %v1570, %v1569
    %v1572 = vmul.f32 0.5, %v1571
    %v1573 = vsub.f32 1.5, %v1572
    %v1574 = vmul.f32 %v1569, %v1573
    %vm1575 = vweird.f32 %v1565
    %vm1576 = vweird.f32 %v1569
    %vm1577 = vmor %vm1575, %vm1576
    %v1578 = vsel %vm1577, %v1569, %v1574
    %v1579 = vrsqrt.pop %v1566
    %v1580 = vmul.f32 %v1579, %v1566
    %v1581 = vmul.f32 %v1580, %v1579
    %v1582 = vmul.f32 0.5, %v1581
    %v1583 = vsub.f32 1.5, %v1582
    %v1584 = vmul.f32 %v1579, %v1583
    %vm1585 = vweird.f32 %v1566
    %vm1586 = vweird.f32 %v1579
    %vm1587 = vmor %vm1585, %vm1586
    %v1588 = vsel %vm1587, %v1579, %v1584
    %v1589 = vrsqrt.pop %v1567
    %v1590 = vmul.f32 %v1589, %v1567
    %v1591 = vmul.f32 %v1590, %v1589
    %v1592 = vmul.f32 0.5, %v1591
    %v1593 = vsub.f32 1.5, %v1592
    %v1594 = vmul.f32 %v1589, %v1593
    %vm1595 = vweird.f32 %v1567
    %vm1596 = vweird.f32 %v1589
    %vm1597 = vmor %vm1595, %vm1596
    %v1598 = vsel %vm1597, %v1589, %v1594
    %v1599 = vrsqrt.pop %v1568
    %v1600 = vmul.f32 %v1599, %v1568
    %v1601 = vmul.f32 %v1600, %v1599
    %v1602 = vmul.f32 0.5, %v1601
    %v1603 = vsub.f32 1.5, %v1602
    %v1604 = vmul.f32 %v1599, %v1603
    %vm1605 = vweird.f32 %v1568
    %vm1606 = vweird.f32 %v1599
    %vm1607 = vmor %vm1605, %vm1606
    %v1608 = vsel %vm1607, %v1599, %v1604
    %v1609 = vmul.f32 %v1561, %v1578
    %v1610 = vmul.f32 %v1562, %v1588
    %v1611 = vmul.f32 %v1563, %v1598
    %v1612 = vmul.f32 %v1564, %v1608
    %v1614 = vperm.slane %v1514, 0
    %v1616 = vmul.f32 %v1609, %v1614
    %v1617 = vmul.f32 %v1610, %v1614
    %v1618 = vmul.f32 %v1611, %v1614
    %v1619 = vmul.f32 %v1612, %v1614
    %v1621 = vperm.slane %v1516, 0
    %v1623 = vadd.f32 %v1616, %v1621
    %v1624 = vadd.f32 %v1617, %v1621
    %v1625 = vadd.f32 %v1618, %v1621
    %v1626 = vadd.f32 %v1619, %v1621
    %v1627 = vpack.c.bf16 %v1624, %v1623
    %v1628 = vpack.c.bf16 %v1626, %v1625
    %s1629 = scalar_lea.vmem %s5, 64
    %v1630 = vld [vmem:[%s1629] sm:$0xff]
    %v1631 = vld [vmem:[%s1629 + $0x8] sm:$0xff]
    %v1632 = vld [vmem:[%s1629 + $0x10] sm:$0xff]
    %v1633 = vld [vmem:[%s1629 + $0x18] sm:$0xff]
    %v1634 = vld [vmem:[%s1629 + $0x20] sm:$0xff]
    %v1635 = vld [vmem:[%s1629 + $0x28] sm:$0xff]
    %v1636 = vld [vmem:[%s1629 + $0x30] sm:$0xff]
    %v1637 = vld [vmem:[%s1629 + $0x38] sm:$0xff]
    %v1646 = vunpack.c.l.b16 %v1630
    %v1647 = vunpack.c.h.b16 %v1630
    %v1648 = vunpack.c.l.b16 %v1631
    %v1649 = vunpack.c.h.b16 %v1631
    %v1650 = vunpack.c.l.b16 %v1632
    %v1651 = vunpack.c.h.b16 %v1632
    %v1652 = vunpack.c.l.b16 %v1633
    %v1653 = vunpack.c.h.b16 %v1633
    %v1654 = vunpack.c.l.b16 %v1634
    %v1655 = vunpack.c.h.b16 %v1634
    %v1656 = vunpack.c.l.b16 %v1635
    %v1657 = vunpack.c.h.b16 %v1635
    %v1658 = vunpack.c.l.b16 %v1636
    %v1659 = vunpack.c.h.b16 %v1636
    %v1660 = vunpack.c.l.b16 %v1637
    %v1661 = vunpack.c.h.b16 %v1637
    %v1662 = vpack.c.b16 %v1648, %v1646
    %v1663 = vpack.c.b16 %v1649, %v1647
    %v1664 = vpack.c.b16 %v1652, %v1650
    %v1665 = vpack.c.b16 %v1653, %v1651
    %v1666 = vpack.c.b16 %v1656, %v1654
    %v1667 = vpack.c.b16 %v1657, %v1655
    %v1668 = vpack.c.b16 %v1660, %v1658
    %v1669 = vpack.c.b16 %v1661, %v1659
    %v1679 = vsel %vm149, %v1627, 0
    %v1682 = vsel %vm149, %v1628, 0
    %1684 = vmatpush.bf16.msra.mxu0 0
    %1685 = vmatpush.bf16.msra.mxu0 0
    %1686 = vmatpush.bf16.msra.mxu0 0
    %1687 = vmatpush.bf16.msra.mxu0 0
    %1688 = vmatpush.bf16.msra.mxu0 %v1668
    %1689 = vmatpush.bf16.msra.mxu0 %v1666
    %1690 = vmatpush.bf16.msra.mxu0 %v1664
    %1691 = vmatpush.bf16.msra.mxu0 %v1662
    %1692 = vmatmul.bf16.gmra.mxu0 %v1679
    %v1693 = vpop.f32.mrf.mxu0
    %v1694 = vadd.f32 0.0, %v1693
    %v1695 = vpop.f32.mrf.mxu0
    %v1696 = vadd.f32 0.0, %v1695
    %1697 = vmatmul.bf16.gmra.mxu0 %v1682
    %v1698 = vpop.f32.mrf.mxu0
    %v1699 = vadd.f32 0.0, %v1698
    %v1700 = vpop.f32.mrf.mxu0
    %v1701 = vadd.f32 0.0, %v1700
    %1702 = vdwg.mxu0
    %1703 = vmatpush.bf16.msra.mxu0 0
    %1704 = vmatpush.bf16.msra.mxu0 0
    %1705 = vmatpush.bf16.msra.mxu0 0
    %1706 = vmatpush.bf16.msra.mxu0 0
    %1707 = vmatpush.bf16.msra.mxu0 %v1669
    %1708 = vmatpush.bf16.msra.mxu0 %v1667
    %1709 = vmatpush.bf16.msra.mxu0 %v1665
    %1710 = vmatpush.bf16.msra.mxu0 %v1663
    %1711 = vmatmul.bf16.gmra.mxu0 %v1679
    %v1712 = vpop.f32.mrf.mxu0
    %v1713 = vadd.f32 0.0, %v1712
    %v1714 = vpop.f32.mrf.mxu0
    %v1715 = vadd.f32 0.0, %v1714
    %1716 = vmatmul.bf16.gmra.mxu0 %v1682
    %v1717 = vpop.f32.mrf.mxu0
    %v1718 = vadd.f32 0.0, %v1717
    %v1719 = vpop.f32.mrf.mxu0
    %v1720 = vadd.f32 0.0, %v1719
    %1721 = vdwg.mxu0
    %v1722 = vpack.c.bf16 %v1694, %v1694
    %v1723 = vpack.c.bf16 %v1696, %v1696
    %v1724 = vpack.c.bf16 %v1699, %v1699
    %v1725 = vpack.c.bf16 %v1701, %v1701
    %v1726 = vpack.c.bf16 %v1713, %v1713
    %v1727 = vpack.c.bf16 %v1715, %v1715
    %v1728 = vpack.c.bf16 %v1718, %v1718
    %v1729 = vpack.c.bf16 %v1720, %v1720
    %v1732 = vunpack.c.l.b16 %v1722
    %v1733 = vunpack.c.l.b16 %v1723
    %v1734 = vpack.c.b16 %v1733, %v1732
    %1735 = vrot.lane.b32.xlu0 %v1734, 64
    %v1736 = vpop.permute.xlu0 %1735
    %v1738 = vsel %vm376, %v1734, 0
    %v1741 = vsel %vm376, %v1736, 0
    %1743 = vmatpush.bf16.xpose.msra.mxu0 0
    %1744 = vmatpush.bf16.xpose.msra.mxu0 0
    %1745 = vmatpush.bf16.xpose.msra.mxu0 0
    %1746 = vmatpush.bf16.xpose.msra.mxu0 0
    %1747 = vmatpush.bf16.xpose.msra.mxu0 0
    %1748 = vmatpush.bf16.xpose.msra.mxu0 0
    %1749 = vmatpush.bf16.xpose.msra.mxu0 0
    %1750 = vmatpush.bf16.xpose.msra.mxu0 %v1741
    %1751 = vmatmul.bf16.gmra.mxu0 %v1738
    %v1752 = vpop.f32.mrf.mxu0
    %v1753 = vadd.f32 0.0, %v1752
    %v1754 = vpop.f32.mrf.mxu0
    %v1755 = vadd.f32 0.0, %v1754
    %1756 = vdwg.mxu0
    %v1759 = vunpack.c.l.b16 %v1724
    %v1760 = vunpack.c.l.b16 %v1725
    %v1761 = vpack.c.b16 %v1760, %v1759
    %1762 = vrot.lane.b32.xlu0 %v1761, 64
    %v1763 = vpop.permute.xlu0 %1762
    %v1765 = vsel %vm376, %v1761, 0
    %v1768 = vsel %vm376, %v1763, 0
    %1770 = vmatpush.bf16.xpose.msra.mxu0 0
    %1771 = vmatpush.bf16.xpose.msra.mxu0 0
    %1772 = vmatpush.bf16.xpose.msra.mxu0 0
    %1773 = vmatpush.bf16.xpose.msra.mxu0 0
    %1774 = vmatpush.bf16.xpose.msra.mxu0 0
    %1775 = vmatpush.bf16.xpose.msra.mxu0 0
    %1776 = vmatpush.bf16.xpose.msra.mxu0 0
    %1777 = vmatpush.bf16.xpose.msra.mxu0 %v1768
    %1778 = vmatmul.bf16.gmra.mxu0 %v1765
    %v1779 = vpop.f32.mrf.mxu0
    %v1780 = vadd.f32 0.0, %v1779
    %v1781 = vpop.f32.mrf.mxu0
    %v1782 = vadd.f32 0.0, %v1781
    %1783 = vdwg.mxu0
    %v1784 = vsel %vm426, %v1753, -1e+30
    %v1785 = vsel %vm427, %v1755, -1e+30
    %v1786 = vsel %vm426, %v1780, -1e+30
    %v1787 = vsel %vm427, %v1782, -1e+30
    %v1788 = vsel %vm376, %v1784, -inf
    %1789 = vmax.xlane.f32.xlu0 %v1788
    %v1790 = vpop.xlane.xlu0 %1789
    %v1791 = vsel %vm376, %v1785, -inf
    %1792 = vmax.xlane.f32.xlu0 %v1791
    %v1793 = vpop.xlane.xlu0 %1792
    %v1794 = vsel %vm376, %v1786, -inf
    %1795 = vmax.xlane.f32.xlu0 %v1794
    %v1796 = vpop.xlane.xlu0 %1795
    %v1797 = vsel %vm376, %v1787, -inf
    %1798 = vmax.xlane.f32.xlu0 %v1797
    %v1799 = vpop.xlane.xlu0 %1798
    %v1800 = vsub.f32 %v1784, %v1790
    %v1801 = vsub.f32 %v1785, %v1793
    %v1802 = vsub.f32 %v1786, %v1796
    %v1803 = vsub.f32 %v1787, %v1799
    %v1804 = vmul.f32 %v1800, 1.442695
    %v1805 = vpow.pop %v1804
    %v1806 = vmul.f32 %v1801, 1.442695
    %v1807 = vpow.pop %v1806
    %v1808 = vmul.f32 %v1802, 1.442695
    %v1809 = vpow.pop %v1808
    %v1810 = vmul.f32 %v1803, 1.442695
    %v1811 = vpow.pop %v1810
    %v1812 = vsel %vm376, %v1805, 0.0
    %1813 = vadd.xlane.f32.xlu0 %v1812
    %v1814 = vpop.xlane.xlu0 %1813
    %v1815 = vsel %vm376, %v1807, 0.0
    %1816 = vadd.xlane.f32.xlu0 %v1815
    %v1817 = vpop.xlane.xlu0 %1816
    %v1818 = vsel %vm376, %v1809, 0.0
    %1819 = vadd.xlane.f32.xlu0 %v1818
    %v1820 = vpop.xlane.xlu0 %1819
    %v1821 = vsel %vm376, %v1811, 0.0
    %1822 = vadd.xlane.f32.xlu0 %v1821
    %v1823 = vpop.xlane.xlu0 %1822
    %v1824 = vrcp.pop %v1814
    %v1825 = vrcp.pop %v1817
    %v1826 = vrcp.pop %v1820
    %v1827 = vrcp.pop %v1823
    %v1828 = vmul.f32 %v1805, %v1824
    %v1829 = vmul.f32 %v1807, %v1825
    %v1830 = vmul.f32 %v1809, %v1826
    %v1831 = vmul.f32 %v1811, %v1827
    %v1832 = vpack.c.bf16 %v1828, %v1828
    %v1833 = vpack.c.bf16 %v1829, %v1829
    %v1834 = vpack.c.bf16 %v1830, %v1830
    %v1835 = vpack.c.bf16 %v1831, %v1831
    %v1838 = vunpack.c.l.b16 %v1832
    %v1839 = vunpack.c.l.b16 %v1833
    %v1840 = vpack.c.b16 %v1839, %v1838
    %v1843 = vunpack.c.l.b16 %v1726
    %v1844 = vunpack.c.l.b16 %v1727
    %v1845 = vpack.c.b16 %v1844, %v1843
    %v1848 = vsel %vm376, %v1840, 0
    %1850 = vmatpush.bf16.msra.mxu0 0
    %1851 = vmatpush.bf16.msra.mxu0 0
    %1852 = vmatpush.bf16.msra.mxu0 0
    %1853 = vmatpush.bf16.msra.mxu0 0
    %1854 = vmatpush.bf16.msra.mxu0 0
    %1855 = vmatpush.bf16.msra.mxu0 0
    %1856 = vmatpush.bf16.msra.mxu0 0
    %1857 = vmatpush.bf16.msra.mxu0 %v1845
    %1858 = vmatmul.bf16.gmra.mxu0 %v1848
    %v1859 = vpop.f32.mrf.mxu0
    %v1860 = vadd.f32 0.0, %v1859
    %v1861 = vpop.f32.mrf.mxu0
    %v1862 = vadd.f32 0.0, %v1861
    %1863 = vdwg.mxu0
    %v1866 = vunpack.c.l.b16 %v1834
    %v1867 = vunpack.c.l.b16 %v1835
    %v1868 = vpack.c.b16 %v1867, %v1866
    %v1871 = vunpack.c.l.b16 %v1728
    %v1872 = vunpack.c.l.b16 %v1729
    %v1873 = vpack.c.b16 %v1872, %v1871
    %v1876 = vsel %vm376, %v1868, 0
    %1878 = vmatpush.bf16.msra.mxu0 0
    %1879 = vmatpush.bf16.msra.mxu0 0
    %1880 = vmatpush.bf16.msra.mxu0 0
    %1881 = vmatpush.bf16.msra.mxu0 0
    %1882 = vmatpush.bf16.msra.mxu0 0
    %1883 = vmatpush.bf16.msra.mxu0 0
    %1884 = vmatpush.bf16.msra.mxu0 0
    %1885 = vmatpush.bf16.msra.mxu0 %v1873
    %1886 = vmatmul.bf16.gmra.mxu0 %v1876
    %v1887 = vpop.f32.mrf.mxu0
    %v1888 = vadd.f32 0.0, %v1887
    %v1889 = vpop.f32.mrf.mxu0
    %v1890 = vadd.f32 0.0, %v1889
    %1891 = vdwg.mxu0
    %1892 = vrot.lane.b32.xlu0 %v1734, 112
    %v1893 = vpop.permute.xlu0 %1892
    %1894 = vrot.lane.b32.xlu0 %v1734, 48
    %v1895 = vpop.permute.xlu0 %1894
    %v1897 = vsel %vm376, %v1893, 0
    %v1900 = vsel %vm376, %v1895, 0
    %1902 = vmatpush.bf16.xpose.msra.mxu0 0
    %1903 = vmatpush.bf16.xpose.msra.mxu0 0
    %1904 = vmatpush.bf16.xpose.msra.mxu0 0
    %1905 = vmatpush.bf16.xpose.msra.mxu0 0
    %1906 = vmatpush.bf16.xpose.msra.mxu0 0
    %1907 = vmatpush.bf16.xpose.msra.mxu0 0
    %1908 = vmatpush.bf16.xpose.msra.mxu0 0
    %1909 = vmatpush.bf16.xpose.msra.mxu0 %v1900
    %1910 = vmatmul.bf16.gmra.mxu0 %v1897
    %v1911 = vpop.f32.mrf.mxu0
    %v1912 = vadd.f32 0.0, %v1911
    %v1913 = vpop.f32.mrf.mxu0
    %v1914 = vadd.f32 0.0, %v1913
    %1915 = vdwg.mxu0
    %1916 = vrot.lane.b32.xlu0 %v1761, 112
    %v1917 = vpop.permute.xlu0 %1916
    %1918 = vrot.lane.b32.xlu0 %v1761, 48
    %v1919 = vpop.permute.xlu0 %1918
    %v1921 = vsel %vm376, %v1917, 0
    %v1924 = vsel %vm376, %v1919, 0
    %1926 = vmatpush.bf16.xpose.msra.mxu0 0
    %1927 = vmatpush.bf16.xpose.msra.mxu0 0
    %1928 = vmatpush.bf16.xpose.msra.mxu0 0
    %1929 = vmatpush.bf16.xpose.msra.mxu0 0
    %1930 = vmatpush.bf16.xpose.msra.mxu0 0
    %1931 = vmatpush.bf16.xpose.msra.mxu0 0
    %1932 = vmatpush.bf16.xpose.msra.mxu0 0
    %1933 = vmatpush.bf16.xpose.msra.mxu0 %v1924
    %1934 = vmatmul.bf16.gmra.mxu0 %v1921
    %v1935 = vpop.f32.mrf.mxu0
    %v1936 = vadd.f32 0.0, %v1935
    %v1937 = vpop.f32.mrf.mxu0
    %v1938 = vadd.f32 0.0, %v1937
    %1939 = vdwg.mxu0
    %v1940 = vsel %vm426, %v1912, -1e+30
    %v1941 = vsel %vm427, %v1914, -1e+30
    %v1942 = vsel %vm426, %v1936, -1e+30
    %v1943 = vsel %vm427, %v1938, -1e+30
    %v1944 = vsel %vm376, %v1940, -inf
    %1945 = vmax.xlane.f32.xlu0 %v1944
    %v1946 = vpop.xlane.xlu0 %1945
    %v1947 = vsel %vm376, %v1941, -inf
    %1948 = vmax.xlane.f32.xlu0 %v1947
    %v1949 = vpop.xlane.xlu0 %1948
    %v1950 = vsel %vm376, %v1942, -inf
    %1951 = vmax.xlane.f32.xlu0 %v1950
    %v1952 = vpop.xlane.xlu0 %1951
    %v1953 = vsel %vm376, %v1943, -inf
    %1954 = vmax.xlane.f32.xlu0 %v1953
    %v1955 = vpop.xlane.xlu0 %1954
    %v1956 = vsub.f32 %v1940, %v1946
    %v1957 = vsub.f32 %v1941, %v1949
    %v1958 = vsub.f32 %v1942, %v1952
    %v1959 = vsub.f32 %v1943, %v1955
    %v1960 = vmul.f32 %v1956, 1.442695
    %v1961 = vpow.pop %v1960
    %v1962 = vmul.f32 %v1957, 1.442695
    %v1963 = vpow.pop %v1962
    %v1964 = vmul.f32 %v1958, 1.442695
    %v1965 = vpow.pop %v1964
    %v1966 = vmul.f32 %v1959, 1.442695
    %v1967 = vpow.pop %v1966
    %v1968 = vsel %vm376, %v1961, 0.0
    %1969 = vadd.xlane.f32.xlu0 %v1968
    %v1970 = vpop.xlane.xlu0 %1969
    %v1971 = vsel %vm376, %v1963, 0.0
    %1972 = vadd.xlane.f32.xlu0 %v1971
    %v1973 = vpop.xlane.xlu0 %1972
    %v1974 = vsel %vm376, %v1965, 0.0
    %1975 = vadd.xlane.f32.xlu0 %v1974
    %v1976 = vpop.xlane.xlu0 %1975
    %v1977 = vsel %vm376, %v1967, 0.0
    %1978 = vadd.xlane.f32.xlu0 %v1977
    %v1979 = vpop.xlane.xlu0 %1978
    %v1980 = vrcp.pop %v1970
    %v1981 = vrcp.pop %v1973
    %v1982 = vrcp.pop %v1976
    %v1983 = vrcp.pop %v1979
    %v1984 = vmul.f32 %v1961, %v1980
    %v1985 = vmul.f32 %v1963, %v1981
    %v1986 = vmul.f32 %v1965, %v1982
    %v1987 = vmul.f32 %v1967, %v1983
    %v1988 = vpack.c.bf16 %v1984, %v1984
    %v1989 = vpack.c.bf16 %v1985, %v1985
    %v1990 = vpack.c.bf16 %v1986, %v1986
    %v1991 = vpack.c.bf16 %v1987, %v1987
    %v1994 = vunpack.c.l.b16 %v1988
    %v1995 = vunpack.c.l.b16 %v1989
    %v1996 = vpack.c.b16 %v1995, %v1994
    %1997 = vrot.lane.b32.xlu0 %v1845, 112
    %v1998 = vpop.permute.xlu0 %1997
    %v2001 = vsel %vm376, %v1996, 0
    %2003 = vmatpush.bf16.msra.mxu0 0
    %2004 = vmatpush.bf16.msra.mxu0 0
    %2005 = vmatpush.bf16.msra.mxu0 0
    %2006 = vmatpush.bf16.msra.mxu0 0
    %2007 = vmatpush.bf16.msra.mxu0 0
    %2008 = vmatpush.bf16.msra.mxu0 0
    %2009 = vmatpush.bf16.msra.mxu0 0
    %2010 = vmatpush.bf16.msra.mxu0 %v1998
    %2011 = vmatmul.bf16.gmra.mxu0 %v2001
    %v2012 = vpop.f32.mrf.mxu0
    %v2013 = vadd.f32 0.0, %v2012
    %v2014 = vpop.f32.mrf.mxu0
    %v2015 = vadd.f32 0.0, %v2014
    %2016 = vdwg.mxu0
    %v2019 = vunpack.c.l.b16 %v1990
    %v2020 = vunpack.c.l.b16 %v1991
    %v2021 = vpack.c.b16 %v2020, %v2019
    %2022 = vrot.lane.b32.xlu0 %v1873, 112
    %v2023 = vpop.permute.xlu0 %2022
    %v2026 = vsel %vm376, %v2021, 0
    %2028 = vmatpush.bf16.msra.mxu0 0
    %2029 = vmatpush.bf16.msra.mxu0 0
    %2030 = vmatpush.bf16.msra.mxu0 0
    %2031 = vmatpush.bf16.msra.mxu0 0
    %2032 = vmatpush.bf16.msra.mxu0 0
    %2033 = vmatpush.bf16.msra.mxu0 0
    %2034 = vmatpush.bf16.msra.mxu0 0
    %2035 = vmatpush.bf16.msra.mxu0 %v2023
    %2036 = vmatmul.bf16.gmra.mxu0 %v2026
    %v2037 = vpop.f32.mrf.mxu0
    %v2038 = vadd.f32 0.0, %v2037
    %v2039 = vpop.f32.mrf.mxu0
    %v2040 = vadd.f32 0.0, %v2039
    %2041 = vdwg.mxu0
    %2042 = vrot.lane.b32.xlu0 %v1734, 96
    %v2043 = vpop.permute.xlu0 %2042
    %2044 = vrot.lane.b32.xlu0 %v1734, 32
    %v2045 = vpop.permute.xlu0 %2044
    %v2047 = vsel %vm376, %v2043, 0
    %v2050 = vsel %vm376, %v2045, 0
    %2052 = vmatpush.bf16.xpose.msra.mxu0 0
    %2053 = vmatpush.bf16.xpose.msra.mxu0 0
    %2054 = vmatpush.bf16.xpose.msra.mxu0 0
    %2055 = vmatpush.bf16.xpose.msra.mxu0 0
    %2056 = vmatpush.bf16.xpose.msra.mxu0 0
    %2057 = vmatpush.bf16.xpose.msra.mxu0 0
    %2058 = vmatpush.bf16.xpose.msra.mxu0 0
    %2059 = vmatpush.bf16.xpose.msra.mxu0 %v2050
    %2060 = vmatmul.bf16.gmra.mxu0 %v2047
    %v2061 = vpop.f32.mrf.mxu0
    %v2062 = vadd.f32 0.0, %v2061
    %v2063 = vpop.f32.mrf.mxu0
    %v2064 = vadd.f32 0.0, %v2063
    %2065 = vdwg.mxu0
    %2066 = vrot.lane.b32.xlu0 %v1761, 96
    %v2067 = vpop.permute.xlu0 %2066
    %2068 = vrot.lane.b32.xlu0 %v1761, 32
    %v2069 = vpop.permute.xlu0 %2068
    %v2071 = vsel %vm376, %v2067, 0
    %v2074 = vsel %vm376, %v2069, 0
    %2076 = vmatpush.bf16.xpose.msra.mxu0 0
    %2077 = vmatpush.bf16.xpose.msra.mxu0 0
    %2078 = vmatpush.bf16.xpose.msra.mxu0 0
    %2079 = vmatpush.bf16.xpose.msra.mxu0 0
    %2080 = vmatpush.bf16.xpose.msra.mxu0 0
    %2081 = vmatpush.bf16.xpose.msra.mxu0 0
    %2082 = vmatpush.bf16.xpose.msra.mxu0 0
    %2083 = vmatpush.bf16.xpose.msra.mxu0 %v2074
    %2084 = vmatmul.bf16.gmra.mxu0 %v2071
    %v2085 = vpop.f32.mrf.mxu0
    %v2086 = vadd.f32 0.0, %v2085
    %v2087 = vpop.f32.mrf.mxu0
    %v2088 = vadd.f32 0.0, %v2087
    %2089 = vdwg.mxu0
    %v2090 = vsel %vm426, %v2062, -1e+30
    %v2091 = vsel %vm427, %v2064, -1e+30
    %v2092 = vsel %vm426, %v2086, -1e+30
    %v2093 = vsel %vm427, %v2088, -1e+30
    %v2094 = vsel %vm376, %v2090, -inf
    %2095 = vmax.xlane.f32.xlu0 %v2094
    %v2096 = vpop.xlane.xlu0 %2095
    %v2097 = vsel %vm376, %v2091, -inf
    %2098 = vmax.xlane.f32.xlu0 %v2097
    %v2099 = vpop.xlane.xlu0 %2098
    %v2100 = vsel %vm376, %v2092, -inf
    %2101 = vmax.xlane.f32.xlu0 %v2100
    %v2102 = vpop.xlane.xlu0 %2101
    %v2103 = vsel %vm376, %v2093, -inf
    %2104 = vmax.xlane.f32.xlu0 %v2103
    %v2105 = vpop.xlane.xlu0 %2104
    %v2106 = vsub.f32 %v2090, %v2096
    %v2107 = vsub.f32 %v2091, %v2099
    %v2108 = vsub.f32 %v2092, %v2102
    %v2109 = vsub.f32 %v2093, %v2105
    %v2110 = vmul.f32 %v2106, 1.442695
    %v2111 = vpow.pop %v2110
    %v2112 = vmul.f32 %v2107, 1.442695
    %v2113 = vpow.pop %v2112
    %v2114 = vmul.f32 %v2108, 1.442695
    %v2115 = vpow.pop %v2114
    %v2116 = vmul.f32 %v2109, 1.442695
    %v2117 = vpow.pop %v2116
    %v2118 = vsel %vm376, %v2111, 0.0
    %2119 = vadd.xlane.f32.xlu0 %v2118
    %v2120 = vpop.xlane.xlu0 %2119
    %v2121 = vsel %vm376, %v2113, 0.0
    %2122 = vadd.xlane.f32.xlu0 %v2121
    %v2123 = vpop.xlane.xlu0 %2122
    %v2124 = vsel %vm376, %v2115, 0.0
    %2125 = vadd.xlane.f32.xlu0 %v2124
    %v2126 = vpop.xlane.xlu0 %2125
    %v2127 = vsel %vm376, %v2117, 0.0
    %2128 = vadd.xlane.f32.xlu0 %v2127
    %v2129 = vpop.xlane.xlu0 %2128
    %v2130 = vrcp.pop %v2120
    %v2131 = vrcp.pop %v2123
    %v2132 = vrcp.pop %v2126
    %v2133 = vrcp.pop %v2129
    %v2134 = vmul.f32 %v2111, %v2130
    %v2135 = vmul.f32 %v2113, %v2131
    %v2136 = vmul.f32 %v2115, %v2132
    %v2137 = vmul.f32 %v2117, %v2133
    %v2138 = vpack.c.bf16 %v2134, %v2134
    %v2139 = vpack.c.bf16 %v2135, %v2135
    %v2140 = vpack.c.bf16 %v2136, %v2136
    %v2141 = vpack.c.bf16 %v2137, %v2137
    %v2144 = vunpack.c.l.b16 %v2138
    %v2145 = vunpack.c.l.b16 %v2139
    %v2146 = vpack.c.b16 %v2145, %v2144
    %2147 = vrot.lane.b32.xlu0 %v1845, 96
    %v2148 = vpop.permute.xlu0 %2147
    %v2151 = vsel %vm376, %v2146, 0
    %2153 = vmatpush.bf16.msra.mxu0 0
    %2154 = vmatpush.bf16.msra.mxu0 0
    %2155 = vmatpush.bf16.msra.mxu0 0
    %2156 = vmatpush.bf16.msra.mxu0 0
    %2157 = vmatpush.bf16.msra.mxu0 0
    %2158 = vmatpush.bf16.msra.mxu0 0
    %2159 = vmatpush.bf16.msra.mxu0 0
    %2160 = vmatpush.bf16.msra.mxu0 %v2148
    %2161 = vmatmul.bf16.gmra.mxu0 %v2151
    %v2162 = vpop.f32.mrf.mxu0
    %v2163 = vadd.f32 0.0, %v2162
    %v2164 = vpop.f32.mrf.mxu0
    %v2165 = vadd.f32 0.0, %v2164
    %2166 = vdwg.mxu0
    %v2169 = vunpack.c.l.b16 %v2140
    %v2170 = vunpack.c.l.b16 %v2141
    %v2171 = vpack.c.b16 %v2170, %v2169
    %2172 = vrot.lane.b32.xlu0 %v1873, 96
    %v2173 = vpop.permute.xlu0 %2172
    %v2176 = vsel %vm376, %v2171, 0
    %2178 = vmatpush.bf16.msra.mxu0 0
    %2179 = vmatpush.bf16.msra.mxu0 0
    %2180 = vmatpush.bf16.msra.mxu0 0
    %2181 = vmatpush.bf16.msra.mxu0 0
    %2182 = vmatpush.bf16.msra.mxu0 0
    %2183 = vmatpush.bf16.msra.mxu0 0
    %2184 = vmatpush.bf16.msra.mxu0 0
    %2185 = vmatpush.bf16.msra.mxu0 %v2173
    %2186 = vmatmul.bf16.gmra.mxu0 %v2176
    %v2187 = vpop.f32.mrf.mxu0
    %v2188 = vadd.f32 0.0, %v2187
    %v2189 = vpop.f32.mrf.mxu0
    %v2190 = vadd.f32 0.0, %v2189
    %2191 = vdwg.mxu0
    %2192 = vrot.lane.b32.xlu0 %v1734, 80
    %v2193 = vpop.permute.xlu0 %2192
    %2194 = vrot.lane.b32.xlu0 %v1734, 16
    %v2195 = vpop.permute.xlu0 %2194
    %v2197 = vsel %vm376, %v2193, 0
    %v2200 = vsel %vm376, %v2195, 0
    %2202 = vmatpush.bf16.xpose.msra.mxu0 0
    %2203 = vmatpush.bf16.xpose.msra.mxu0 0
    %2204 = vmatpush.bf16.xpose.msra.mxu0 0
    %2205 = vmatpush.bf16.xpose.msra.mxu0 0
    %2206 = vmatpush.bf16.xpose.msra.mxu0 0
    %2207 = vmatpush.bf16.xpose.msra.mxu0 0
    %2208 = vmatpush.bf16.xpose.msra.mxu0 0
    %2209 = vmatpush.bf16.xpose.msra.mxu0 %v2200
    %2210 = vmatmul.bf16.gmra.mxu0 %v2197
    %v2211 = vpop.f32.mrf.mxu0
    %v2212 = vadd.f32 0.0, %v2211
    %v2213 = vpop.f32.mrf.mxu0
    %v2214 = vadd.f32 0.0, %v2213
    %2215 = vdwg.mxu0
    %2216 = vrot.lane.b32.xlu0 %v1761, 80
    %v2217 = vpop.permute.xlu0 %2216
    %2218 = vrot.lane.b32.xlu0 %v1761, 16
    %v2219 = vpop.permute.xlu0 %2218
    %v2221 = vsel %vm376, %v2217, 0
    %v2224 = vsel %vm376, %v2219, 0
    %2226 = vmatpush.bf16.xpose.msra.mxu0 0
    %2227 = vmatpush.bf16.xpose.msra.mxu0 0
    %2228 = vmatpush.bf16.xpose.msra.mxu0 0
    %2229 = vmatpush.bf16.xpose.msra.mxu0 0
    %2230 = vmatpush.bf16.xpose.msra.mxu0 0
    %2231 = vmatpush.bf16.xpose.msra.mxu0 0
    %2232 = vmatpush.bf16.xpose.msra.mxu0 0
    %2233 = vmatpush.bf16.xpose.msra.mxu0 %v2224
    %2234 = vmatmul.bf16.gmra.mxu0 %v2221
    %v2235 = vpop.f32.mrf.mxu0
    %v2236 = vadd.f32 0.0, %v2235
    %v2237 = vpop.f32.mrf.mxu0
    %v2238 = vadd.f32 0.0, %v2237
    %2239 = vdwg.mxu0
    %v2240 = vsel %vm426, %v2212, -1e+30
    %v2241 = vsel %vm427, %v2214, -1e+30
    %v2242 = vsel %vm426, %v2236, -1e+30
    %v2243 = vsel %vm427, %v2238, -1e+30
    %v2244 = vsel %vm376, %v2240, -inf
    %2245 = vmax.xlane.f32.xlu0 %v2244
    %v2246 = vpop.xlane.xlu0 %2245
    %v2247 = vsel %vm376, %v2241, -inf
    %2248 = vmax.xlane.f32.xlu0 %v2247
    %v2249 = vpop.xlane.xlu0 %2248
    %v2250 = vsel %vm376, %v2242, -inf
    %2251 = vmax.xlane.f32.xlu0 %v2250
    %v2252 = vpop.xlane.xlu0 %2251
    %v2253 = vsel %vm376, %v2243, -inf
    %2254 = vmax.xlane.f32.xlu0 %v2253
    %v2255 = vpop.xlane.xlu0 %2254
    %v2256 = vsub.f32 %v2240, %v2246
    %v2257 = vsub.f32 %v2241, %v2249
    %v2258 = vsub.f32 %v2242, %v2252
    %v2259 = vsub.f32 %v2243, %v2255
    %v2260 = vmul.f32 %v2256, 1.442695
    %v2261 = vpow.pop %v2260
    %v2262 = vmul.f32 %v2257, 1.442695
    %v2263 = vpow.pop %v2262
    %v2264 = vmul.f32 %v2258, 1.442695
    %v2265 = vpow.pop %v2264
    %v2266 = vmul.f32 %v2259, 1.442695
    %v2267 = vpow.pop %v2266
    %v2268 = vsel %vm376, %v2261, 0.0
    %2269 = vadd.xlane.f32.xlu0 %v2268
    %v2270 = vpop.xlane.xlu0 %2269
    %v2271 = vsel %vm376, %v2263, 0.0
    %2272 = vadd.xlane.f32.xlu0 %v2271
    %v2273 = vpop.xlane.xlu0 %2272
    %v2274 = vsel %vm376, %v2265, 0.0
    %2275 = vadd.xlane.f32.xlu0 %v2274
    %v2276 = vpop.xlane.xlu0 %2275
    %v2277 = vsel %vm376, %v2267, 0.0
    %2278 = vadd.xlane.f32.xlu0 %v2277
    %v2279 = vpop.xlane.xlu0 %2278
    %v2280 = vrcp.pop %v2270
    %v2281 = vrcp.pop %v2273
    %v2282 = vrcp.pop %v2276
    %v2283 = vrcp.pop %v2279
    %v2284 = vmul.f32 %v2261, %v2280
    %v2285 = vmul.f32 %v2263, %v2281
    %v2286 = vmul.f32 %v2265, %v2282
    %v2287 = vmul.f32 %v2267, %v2283
    %v2288 = vpack.c.bf16 %v2284, %v2284
    %v2289 = vpack.c.bf16 %v2285, %v2285
    %v2290 = vpack.c.bf16 %v2286, %v2286
    %v2291 = vpack.c.bf16 %v2287, %v2287
    %v2294 = vunpack.c.l.b16 %v2288
    %v2295 = vunpack.c.l.b16 %v2289
    %v2296 = vpack.c.b16 %v2295, %v2294
    %2297 = vrot.lane.b32.xlu0 %v1845, 80
    %v2298 = vpop.permute.xlu0 %2297
    %v2301 = vsel %vm376, %v2296, 0
    %2303 = vmatpush.bf16.msra.mxu0 0
    %2304 = vmatpush.bf16.msra.mxu0 0
    %2305 = vmatpush.bf16.msra.mxu0 0
    %2306 = vmatpush.bf16.msra.mxu0 0
    %2307 = vmatpush.bf16.msra.mxu0 0
    %2308 = vmatpush.bf16.msra.mxu0 0
    %2309 = vmatpush.bf16.msra.mxu0 0
    %2310 = vmatpush.bf16.msra.mxu0 %v2298
    %2311 = vmatmul.bf16.gmra.mxu0 %v2301
    %v2312 = vpop.f32.mrf.mxu0
    %v2313 = vadd.f32 0.0, %v2312
    %v2314 = vpop.f32.mrf.mxu0
    %v2315 = vadd.f32 0.0, %v2314
    %2316 = vdwg.mxu0
    %v2319 = vunpack.c.l.b16 %v2290
    %v2320 = vunpack.c.l.b16 %v2291
    %v2321 = vpack.c.b16 %v2320, %v2319
    %2322 = vrot.lane.b32.xlu0 %v1873, 80
    %v2323 = vpop.permute.xlu0 %2322
    %v2326 = vsel %vm376, %v2321, 0
    %2328 = vmatpush.bf16.msra.mxu0 0
    %2329 = vmatpush.bf16.msra.mxu0 0
    %2330 = vmatpush.bf16.msra.mxu0 0
    %2331 = vmatpush.bf16.msra.mxu0 0
    %2332 = vmatpush.bf16.msra.mxu0 0
    %2333 = vmatpush.bf16.msra.mxu0 0
    %2334 = vmatpush.bf16.msra.mxu0 0
    %2335 = vmatpush.bf16.msra.mxu0 %v2323
    %2336 = vmatmul.bf16.gmra.mxu0 %v2326
    %v2337 = vpop.f32.mrf.mxu0
    %v2338 = vadd.f32 0.0, %v2337
    %v2339 = vpop.f32.mrf.mxu0
    %v2340 = vadd.f32 0.0, %v2339
    %2341 = vdwg.mxu0
    %2346 = vrot.lane.b32.xlu0 %v2013, 16
    %v2347 = vpop.permute.xlu0 %2346
    %2348 = vrot.lane.b32.xlu0 %v2015, 16
    %v2349 = vpop.permute.xlu0 %2348
    %2350 = vrot.lane.b32.xlu0 %v2038, 16
    %v2351 = vpop.permute.xlu0 %2350
    %2352 = vrot.lane.b32.xlu0 %v2040, 16
    %v2353 = vpop.permute.xlu0 %2352
    %2362 = vrot.lane.b32.xlu0 %v2163, 32
    %v2363 = vpop.permute.xlu0 %2362
    %2364 = vrot.lane.b32.xlu0 %v2165, 32
    %v2365 = vpop.permute.xlu0 %2364
    %2366 = vrot.lane.b32.xlu0 %v2188, 32
    %v2367 = vpop.permute.xlu0 %2366
    %2368 = vrot.lane.b32.xlu0 %v2190, 32
    %v2369 = vpop.permute.xlu0 %2368
    %2378 = vrot.lane.b32.xlu0 %v2313, 48
    %v2379 = vpop.permute.xlu0 %2378
    %2380 = vrot.lane.b32.xlu0 %v2315, 48
    %v2381 = vpop.permute.xlu0 %2380
    %2382 = vrot.lane.b32.xlu0 %v2338, 48
    %v2383 = vpop.permute.xlu0 %2382
    %2384 = vrot.lane.b32.xlu0 %v2340, 48
    %v2385 = vpop.permute.xlu0 %2384
    %v2390 = vsel %vm376, %v1860, %v2347
    %v2391 = vsel %vm376, %v1862, %v2349
    %v2392 = vsel %vm376, %v1888, %v2351
    %v2393 = vsel %vm376, %v1890, %v2353
    %v2394 = vsel %vm1038, %v2390, %v2363
    %v2395 = vsel %vm1038, %v2391, %v2365
    %v2396 = vsel %vm1038, %v2392, %v2367
    %v2397 = vsel %vm1038, %v2393, %v2369
    %v2398 = vsel %vm1043, %v2394, %v2379
    %v2399 = vsel %vm1043, %v2395, %v2381
    %v2400 = vsel %vm1043, %v2396, %v2383
    %v2401 = vsel %vm1043, %v2397, %v2385
    %v2402 = vpack.c.bf16 %v2399, %v2398
    %v2403 = vpack.c.bf16 %v2401, %v2400
    %s2404 = scalar_lea.vmem %s6, 32
    %v2405 = vld [vmem:[%s2404] sm:$0xf]
    %v2406 = vld [vmem:[%s2404 + $0x4] sm:$0xf]
    %v2407 = vld [vmem:[%s2404 + $0x8] sm:$0xf]
    %v2408 = vld [vmem:[%s2404 + $0xc] sm:$0xf]
    %v2409 = vld [vmem:[%s2404 + $0x10] sm:$0xf]
    %v2410 = vld [vmem:[%s2404 + $0x14] sm:$0xf]
    %v2411 = vld [vmem:[%s2404 + $0x18] sm:$0xf]
    %v2412 = vld [vmem:[%s2404 + $0x1c] sm:$0xf]
    %s2413 = scalar_lea.vmem %s7, 1
    %v2414 = vld [vmem:[%s2413] sm:$0x1]
    %v2416 = vperm.slane %v2414, 0
    %v2426 = vunpack.c.l.b16 %v2405
    %v2427 = vunpack.c.l.b16 %v2406
    %v2428 = vunpack.c.l.b16 %v2407
    %v2429 = vunpack.c.l.b16 %v2408
    %v2430 = vunpack.c.l.b16 %v2409
    %v2431 = vunpack.c.l.b16 %v2410
    %v2432 = vunpack.c.l.b16 %v2411
    %v2433 = vunpack.c.l.b16 %v2412
    %v2434 = vpack.c.b16 %v2427, %v2426
    %v2435 = vpack.c.b16 %v2429, %v2428
    %v2436 = vpack.c.b16 %v2431, %v2430
    %v2437 = vpack.c.b16 %v2433, %v2432
    %v2443 = vsel %vm149, %v2402, 0
    %v2446 = vsel %vm149, %v2403, 0
    %2448 = vmatpush.bf16.msra.mxu0 0
    %2449 = vmatpush.bf16.msra.mxu0 0
    %2450 = vmatpush.bf16.msra.mxu0 0
    %2451 = vmatpush.bf16.msra.mxu0 0
    %2452 = vmatpush.bf16.msra.mxu0 %v2437
    %2453 = vmatpush.bf16.msra.mxu0 %v2436
    %2454 = vmatpush.bf16.msra.mxu0 %v2435
    %2455 = vmatpush.bf16.msra.mxu0 %v2434
    %2456 = vmatmul.bf16.gmra.mxu0 %v2443
    %v2457 = vpop.f32.mrf.mxu0
    %v2458 = vadd.f32 %v2416, %v2457
    %v2459 = vpop.f32.mrf.mxu0
    %v2460 = vadd.f32 %v2416, %v2459
    %2461 = vmatmul.bf16.gmra.mxu0 %v2446
    %v2462 = vpop.f32.mrf.mxu0
    %v2463 = vadd.f32 %v2416, %v2462
    %v2464 = vpop.f32.mrf.mxu0
    %v2465 = vadd.f32 %v2416, %v2464
    %2466 = vdwg.mxu0
    %v2467 = vadd.f32 %v1509, %v2458
    %v2468 = vadd.f32 %v1510, %v2460
    %v2469 = vadd.f32 %v1511, %v2463
    %v2470 = vadd.f32 %v1512, %v2465
    %s2471 = scalar_lea.vmem %s8, 1
    %v2472 = vld [vmem:[%s2471] sm:$0x1]
    %s2473 = scalar_lea.vmem %s9, 1
    %v2474 = vld [vmem:[%s2473] sm:$0x1]
    %v2475 = vsel %vm149, %v2467, 0.0
    %2476 = vadd.xlane.f32.xlu0 %v2475
    %v2477 = vpop.xlane.xlu0 %2476
    %v2478 = vsel %vm149, %v2468, 0.0
    %2479 = vadd.xlane.f32.xlu0 %v2478
    %v2480 = vpop.xlane.xlu0 %2479
    %v2481 = vsel %vm149, %v2469, 0.0
    %2482 = vadd.xlane.f32.xlu0 %v2481
    %v2483 = vpop.xlane.xlu0 %2482
    %v2484 = vsel %vm149, %v2470, 0.0
    %2485 = vadd.xlane.f32.xlu0 %v2484
    %v2486 = vpop.xlane.xlu0 %2485
    %v2487 = vmul.f32 %v2477, %v168
    %v2488 = vmul.f32 %v2480, %v168
    %v2489 = vmul.f32 %v2483, %v168
    %v2490 = vmul.f32 %v2486, %v168
    %v2491 = vmul.f32 %v2467, %v2467
    %v2492 = vmul.f32 %v2468, %v2468
    %v2493 = vmul.f32 %v2469, %v2469
    %v2494 = vmul.f32 %v2470, %v2470
    %v2495 = vsel %vm149, %v2491, 0.0
    %2496 = vadd.xlane.f32.xlu0 %v2495
    %v2497 = vpop.xlane.xlu0 %2496
    %v2498 = vsel %vm149, %v2492, 0.0
    %2499 = vadd.xlane.f32.xlu0 %v2498
    %v2500 = vpop.xlane.xlu0 %2499
    %v2501 = vsel %vm149, %v2493, 0.0
    %2502 = vadd.xlane.f32.xlu0 %v2501
    %v2503 = vpop.xlane.xlu0 %2502
    %v2504 = vsel %vm149, %v2494, 0.0
    %2505 = vadd.xlane.f32.xlu0 %v2504
    %v2506 = vpop.xlane.xlu0 %2505
    %v2507 = vmul.f32 %v2497, %v168
    %v2508 = vmul.f32 %v2500, %v168
    %v2509 = vmul.f32 %v2503, %v168
    %v2510 = vmul.f32 %v2506, %v168
    %v2511 = vmul.f32 %v2487, %v2487
    %v2512 = vmul.f32 %v2488, %v2488
    %v2513 = vmul.f32 %v2489, %v2489
    %v2514 = vmul.f32 %v2490, %v2490
    %v2515 = vsub.f32 %v2507, %v2511
    %v2516 = vsub.f32 %v2508, %v2512
    %v2517 = vsub.f32 %v2509, %v2513
    %v2518 = vsub.f32 %v2510, %v2514
    %v2519 = vsub.f32 %v2467, %v2487
    %v2520 = vsub.f32 %v2468, %v2488
    %v2521 = vsub.f32 %v2469, %v2489
    %v2522 = vsub.f32 %v2470, %v2490
    %v2523 = vadd.f32 %v2515, 1e-05
    %v2524 = vadd.f32 %v2516, 1e-05
    %v2525 = vadd.f32 %v2517, 1e-05
    %v2526 = vadd.f32 %v2518, 1e-05
    %v2527 = vrsqrt.pop %v2523
    %v2528 = vmul.f32 %v2527, %v2523
    %v2529 = vmul.f32 %v2528, %v2527
    %v2530 = vmul.f32 0.5, %v2529
    %v2531 = vsub.f32 1.5, %v2530
    %v2532 = vmul.f32 %v2527, %v2531
    %vm2533 = vweird.f32 %v2523
    %vm2534 = vweird.f32 %v2527
    %vm2535 = vmor %vm2533, %vm2534
    %v2536 = vsel %vm2535, %v2527, %v2532
    %v2537 = vrsqrt.pop %v2524
    %v2538 = vmul.f32 %v2537, %v2524
    %v2539 = vmul.f32 %v2538, %v2537
    %v2540 = vmul.f32 0.5, %v2539
    %v2541 = vsub.f32 1.5, %v2540
    %v2542 = vmul.f32 %v2537, %v2541
    %vm2543 = vweird.f32 %v2524
    %vm2544 = vweird.f32 %v2537
    %vm2545 = vmor %vm2543, %vm2544
    %v2546 = vsel %vm2545, %v2537, %v2542
    %v2547 = vrsqrt.pop %v2525
    %v2548 = vmul.f32 %v2547, %v2525
    %v2549 = vmul.f32 %v2548, %v2547
    %v2550 = vmul.f32 0.5, %v2549
    %v2551 = vsub.f32 1.5, %v2550
    %v2552 = vmul.f32 %v2547, %v2551
    %vm2553 = vweird.f32 %v2525
    %vm2554 = vweird.f32 %v2547
    %vm2555 = vmor %vm2553, %vm2554
    %v2556 = vsel %vm2555, %v2547, %v2552
    %v2557 = vrsqrt.pop %v2526
    %v2558 = vmul.f32 %v2557, %v2526
    %v2559 = vmul.f32 %v2558, %v2557
    %v2560 = vmul.f32 0.5, %v2559
    %v2561 = vsub.f32 1.5, %v2560
    %v2562 = vmul.f32 %v2557, %v2561
    %vm2563 = vweird.f32 %v2526
    %vm2564 = vweird.f32 %v2557
    %vm2565 = vmor %vm2563, %vm2564
    %v2566 = vsel %vm2565, %v2557, %v2562
    %v2567 = vmul.f32 %v2519, %v2536
    %v2568 = vmul.f32 %v2520, %v2546
    %v2569 = vmul.f32 %v2521, %v2556
    %v2570 = vmul.f32 %v2522, %v2566
    %v2572 = vperm.slane %v2472, 0
    %v2574 = vmul.f32 %v2567, %v2572
    %v2575 = vmul.f32 %v2568, %v2572
    %v2576 = vmul.f32 %v2569, %v2572
    %v2577 = vmul.f32 %v2570, %v2572
    %v2579 = vperm.slane %v2474, 0
    %v2581 = vadd.f32 %v2574, %v2579
    %v2582 = vadd.f32 %v2575, %v2579
    %v2583 = vadd.f32 %v2576, %v2579
    %v2584 = vadd.f32 %v2577, %v2579
    %v2585 = vpack.c.bf16 %v2582, %v2581
    %v2586 = vpack.c.bf16 %v2584, %v2583
    %s2587 = scalar_lea.vmem %s10, 64
    %v2588 = vld [vmem:[%s2587] sm:$0xff]
    %v2589 = vld [vmem:[%s2587 + $0x8] sm:$0xff]
    %v2590 = vld [vmem:[%s2587 + $0x10] sm:$0xff]
    %v2591 = vld [vmem:[%s2587 + $0x18] sm:$0xff]
    %v2592 = vld [vmem:[%s2587 + $0x20] sm:$0xff]
    %v2593 = vld [vmem:[%s2587 + $0x28] sm:$0xff]
    %v2594 = vld [vmem:[%s2587 + $0x30] sm:$0xff]
    %v2595 = vld [vmem:[%s2587 + $0x38] sm:$0xff]
    %s2596 = scalar_lea.vmem %s11, 2
    %v2597 = vld [vmem:[%s2596] sm:$0x3]
    %v2599 = vperm.slane %v2597, 0
    %v2600 = vperm.slane %v2597, 1
    %v2611 = vunpack.c.l.b16 %v2588
    %v2612 = vunpack.c.h.b16 %v2588
    %v2613 = vunpack.c.l.b16 %v2589
    %v2614 = vunpack.c.h.b16 %v2589
    %v2615 = vunpack.c.l.b16 %v2590
    %v2616 = vunpack.c.h.b16 %v2590
    %v2617 = vunpack.c.l.b16 %v2591
    %v2618 = vunpack.c.h.b16 %v2591
    %v2619 = vunpack.c.l.b16 %v2592
    %v2620 = vunpack.c.h.b16 %v2592
    %v2621 = vunpack.c.l.b16 %v2593
    %v2622 = vunpack.c.h.b16 %v2593
    %v2623 = vunpack.c.l.b16 %v2594
    %v2624 = vunpack.c.h.b16 %v2594
    %v2625 = vunpack.c.l.b16 %v2595
    %v2626 = vunpack.c.h.b16 %v2595
    %v2627 = vpack.c.b16 %v2613, %v2611
    %v2628 = vpack.c.b16 %v2614, %v2612
    %v2629 = vpack.c.b16 %v2617, %v2615
    %v2630 = vpack.c.b16 %v2618, %v2616
    %v2631 = vpack.c.b16 %v2621, %v2619
    %v2632 = vpack.c.b16 %v2622, %v2620
    %v2633 = vpack.c.b16 %v2625, %v2623
    %v2634 = vpack.c.b16 %v2626, %v2624
    %v2644 = vsel %vm149, %v2585, 0
    %v2647 = vsel %vm149, %v2586, 0
    %2649 = vmatpush.bf16.msra.mxu0 0
    %2650 = vmatpush.bf16.msra.mxu0 0
    %2651 = vmatpush.bf16.msra.mxu0 0
    %2652 = vmatpush.bf16.msra.mxu0 0
    %2653 = vmatpush.bf16.msra.mxu0 %v2633
    %2654 = vmatpush.bf16.msra.mxu0 %v2631
    %2655 = vmatpush.bf16.msra.mxu0 %v2629
    %2656 = vmatpush.bf16.msra.mxu0 %v2627
    %2657 = vmatmul.bf16.gmra.mxu0 %v2644
    %v2658 = vpop.f32.mrf.mxu0
    %v2659 = vadd.f32 %v2599, %v2658
    %v2660 = vpop.f32.mrf.mxu0
    %v2661 = vadd.f32 %v2599, %v2660
    %2662 = vmatmul.bf16.gmra.mxu0 %v2647
    %v2663 = vpop.f32.mrf.mxu0
    %v2664 = vadd.f32 %v2599, %v2663
    %v2665 = vpop.f32.mrf.mxu0
    %v2666 = vadd.f32 %v2599, %v2665
    %2667 = vdwg.mxu0
    %2668 = vmatpush.bf16.msra.mxu0 0
    %2669 = vmatpush.bf16.msra.mxu0 0
    %2670 = vmatpush.bf16.msra.mxu0 0
    %2671 = vmatpush.bf16.msra.mxu0 0
    %2672 = vmatpush.bf16.msra.mxu0 %v2634
    %2673 = vmatpush.bf16.msra.mxu0 %v2632
    %2674 = vmatpush.bf16.msra.mxu0 %v2630
    %2675 = vmatpush.bf16.msra.mxu0 %v2628
    %2676 = vmatmul.bf16.gmra.mxu0 %v2644
    %v2677 = vpop.f32.mrf.mxu0
    %v2678 = vadd.f32 %v2600, %v2677
    %v2679 = vpop.f32.mrf.mxu0
    %v2680 = vadd.f32 %v2600, %v2679
    %2681 = vmatmul.bf16.gmra.mxu0 %v2647
    %v2682 = vpop.f32.mrf.mxu0
    %v2683 = vadd.f32 %v2600, %v2682
    %v2684 = vpop.f32.mrf.mxu0
    %v2685 = vadd.f32 %v2600, %v2684
    %2686 = vdwg.mxu0
    %v2687 = vmax.f32 %v2659, 0.0
    %v2688 = vmax.f32 %v2678, 0.0
    %v2689 = vmax.f32 %v2661, 0.0
    %v2690 = vmax.f32 %v2680, 0.0
    %v2691 = vmax.f32 %v2664, 0.0
    %v2692 = vmax.f32 %v2683, 0.0
    %v2693 = vmax.f32 %v2666, 0.0
    %v2694 = vmax.f32 %v2685, 0.0
    %v2695 = vpack.c.bf16 %v2689, %v2687
    %v2696 = vpack.c.bf16 %v2690, %v2688
    %v2697 = vpack.c.bf16 %v2693, %v2691
    %v2698 = vpack.c.bf16 %v2694, %v2692
    %s2699 = scalar_lea.vmem %s12, 128
    %v2700 = vld [vmem:[%s2699] sm:$0xf]
    %v2701 = vld [vmem:[%s2699 + $0x4] sm:$0xf]
    %v2702 = vld [vmem:[%s2699 + $0x8] sm:$0xf]
    %v2703 = vld [vmem:[%s2699 + $0xc] sm:$0xf]
    %v2704 = vld [vmem:[%s2699 + $0x10] sm:$0xf]
    %v2705 = vld [vmem:[%s2699 + $0x14] sm:$0xf]
    %v2706 = vld [vmem:[%s2699 + $0x18] sm:$0xf]
    %v2707 = vld [vmem:[%s2699 + $0x1c] sm:$0xf]
    %v2708 = vld [vmem:[%s2699 + $0x20] sm:$0xf]
    %v2709 = vld [vmem:[%s2699 + $0x24] sm:$0xf]
    %v2710 = vld [vmem:[%s2699 + $0x28] sm:$0xf]
    %v2711 = vld [vmem:[%s2699 + $0x2c] sm:$0xf]
    %v2712 = vld [vmem:[%s2699 + $0x30] sm:$0xf]
    %v2713 = vld [vmem:[%s2699 + $0x34] sm:$0xf]
    %v2714 = vld [vmem:[%s2699 + $0x38] sm:$0xf]
    %v2715 = vld [vmem:[%s2699 + $0x3c] sm:$0xf]
    %v2716 = vld [vmem:[%s2699 + $0x40] sm:$0xf]
    %v2717 = vld [vmem:[%s2699 + $0x44] sm:$0xf]
    %v2718 = vld [vmem:[%s2699 + $0x48] sm:$0xf]
    %v2719 = vld [vmem:[%s2699 + $0x4c] sm:$0xf]
    %v2720 = vld [vmem:[%s2699 + $0x50] sm:$0xf]
    %v2721 = vld [vmem:[%s2699 + $0x54] sm:$0xf]
    %v2722 = vld [vmem:[%s2699 + $0x58] sm:$0xf]
    %v2723 = vld [vmem:[%s2699 + $0x5c] sm:$0xf]
    %v2724 = vld [vmem:[%s2699 + $0x60] sm:$0xf]
    %v2725 = vld [vmem:[%s2699 + $0x64] sm:$0xf]
    %v2726 = vld [vmem:[%s2699 + $0x68] sm:$0xf]
    %v2727 = vld [vmem:[%s2699 + $0x6c] sm:$0xf]
    %v2728 = vld [vmem:[%s2699 + $0x70] sm:$0xf]
    %v2729 = vld [vmem:[%s2699 + $0x74] sm:$0xf]
    %v2730 = vld [vmem:[%s2699 + $0x78] sm:$0xf]
    %v2731 = vld [vmem:[%s2699 + $0x7c] sm:$0xf]
    %s2732 = scalar_lea.vmem %s13, 1
    %v2733 = vld [vmem:[%s2732] sm:$0x1]
    %v2735 = vperm.slane %v2733, 0
    %v2769 = vunpack.c.l.b16 %v2700
    %v2770 = vunpack.c.l.b16 %v2701
    %v2771 = vunpack.c.l.b16 %v2702
    %v2772 = vunpack.c.l.b16 %v2703
    %v2773 = vunpack.c.l.b16 %v2704
    %v2774 = vunpack.c.l.b16 %v2705
    %v2775 = vunpack.c.l.b16 %v2706
    %v2776 = vunpack.c.l.b16 %v2707
    %v2777 = vunpack.c.l.b16 %v2708
    %v2778 = vunpack.c.l.b16 %v2709
    %v2779 = vunpack.c.l.b16 %v2710
    %v2780 = vunpack.c.l.b16 %v2711
    %v2781 = vunpack.c.l.b16 %v2712
    %v2782 = vunpack.c.l.b16 %v2713
    %v2783 = vunpack.c.l.b16 %v2714
    %v2784 = vunpack.c.l.b16 %v2715
    %v2785 = vunpack.c.l.b16 %v2716
    %v2786 = vunpack.c.l.b16 %v2717
    %v2787 = vunpack.c.l.b16 %v2718
    %v2788 = vunpack.c.l.b16 %v2719
    %v2789 = vunpack.c.l.b16 %v2720
    %v2790 = vunpack.c.l.b16 %v2721
    %v2791 = vunpack.c.l.b16 %v2722
    %v2792 = vunpack.c.l.b16 %v2723
    %v2793 = vunpack.c.l.b16 %v2724
    %v2794 = vunpack.c.l.b16 %v2725
    %v2795 = vunpack.c.l.b16 %v2726
    %v2796 = vunpack.c.l.b16 %v2727
    %v2797 = vunpack.c.l.b16 %v2728
    %v2798 = vunpack.c.l.b16 %v2729
    %v2799 = vunpack.c.l.b16 %v2730
    %v2800 = vunpack.c.l.b16 %v2731
    %v2801 = vpack.c.b16 %v2770, %v2769
    %v2802 = vpack.c.b16 %v2772, %v2771
    %v2803 = vpack.c.b16 %v2774, %v2773
    %v2804 = vpack.c.b16 %v2776, %v2775
    %v2805 = vpack.c.b16 %v2778, %v2777
    %v2806 = vpack.c.b16 %v2780, %v2779
    %v2807 = vpack.c.b16 %v2782, %v2781
    %v2808 = vpack.c.b16 %v2784, %v2783
    %v2809 = vpack.c.b16 %v2786, %v2785
    %v2810 = vpack.c.b16 %v2788, %v2787
    %v2811 = vpack.c.b16 %v2790, %v2789
    %v2812 = vpack.c.b16 %v2792, %v2791
    %v2813 = vpack.c.b16 %v2794, %v2793
    %v2814 = vpack.c.b16 %v2796, %v2795
    %v2815 = vpack.c.b16 %v2798, %v2797
    %v2816 = vpack.c.b16 %v2800, %v2799
    %2833 = vmatpush.bf16.msra.mxu0 %v2808
    %2834 = vmatpush.bf16.msra.mxu0 %v2807
    %2835 = vmatpush.bf16.msra.mxu0 %v2806
    %2836 = vmatpush.bf16.msra.mxu0 %v2805
    %2837 = vmatpush.bf16.msra.mxu0 %v2804
    %2838 = vmatpush.bf16.msra.mxu0 %v2803
    %2839 = vmatpush.bf16.msra.mxu0 %v2802
    %2840 = vmatpush.bf16.msra.mxu0 %v2801
    %2841 = vmatmul.bf16.gmra.mxu0 %v2695
    %v2842 = vpop.f32.mrf.mxu0
    %v2843 = vadd.f32 %v2735, %v2842
    %v2844 = vpop.f32.mrf.mxu0
    %v2845 = vadd.f32 %v2735, %v2844
    %2846 = vmatmul.bf16.gmra.mxu0 %v2697
    %v2847 = vpop.f32.mrf.mxu0
    %v2848 = vadd.f32 %v2735, %v2847
    %v2849 = vpop.f32.mrf.mxu0
    %v2850 = vadd.f32 %v2735, %v2849
    %2851 = vdwg.mxu0
    %2852 = vmatpush.bf16.msra.mxu0 %v2816
    %2853 = vmatpush.bf16.msra.mxu0 %v2815
    %2854 = vmatpush.bf16.msra.mxu0 %v2814
    %2855 = vmatpush.bf16.msra.mxu0 %v2813
    %2856 = vmatpush.bf16.msra.mxu0 %v2812
    %2857 = vmatpush.bf16.msra.mxu0 %v2811
    %2858 = vmatpush.bf16.msra.mxu0 %v2810
    %2859 = vmatpush.bf16.msra.mxu0 %v2809
    %2860 = vmatmul.bf16.gmra.mxu0 %v2696
    %v2861 = vpop.f32.mrf.mxu0
    %v2862 = vadd.f32 %v2843, %v2861
    %v2863 = vpop.f32.mrf.mxu0
    %v2864 = vadd.f32 %v2845, %v2863
    %2865 = vmatmul.bf16.gmra.mxu0 %v2698
    %v2866 = vpop.f32.mrf.mxu0
    %v2867 = vadd.f32 %v2848, %v2866
    %v2868 = vpop.f32.mrf.mxu0
    %v2869 = vadd.f32 %v2850, %v2868
    %2870 = vdwg.mxu0
    %v2871 = vadd.f32 %v2467, %v2862
    %v2872 = vadd.f32 %v2468, %v2864
    %v2873 = vadd.f32 %v2469, %v2867
    %v2874 = vadd.f32 %v2470, %v2869
    %v2875 = vld [vmem:[%s14] sm:$0x1]
    %v2876 = vld [vmem:[%s15] sm:$0x1]
    %v2877 = vsel %vm149, %v2871, 0.0
    %2878 = vadd.xlane.f32.xlu0 %v2877
    %v2879 = vpop.xlane.xlu0 %2878
    %v2880 = vsel %vm149, %v2872, 0.0
    %2881 = vadd.xlane.f32.xlu0 %v2880
    %v2882 = vpop.xlane.xlu0 %2881
    %v2883 = vsel %vm149, %v2873, 0.0
    %2884 = vadd.xlane.f32.xlu0 %v2883
    %v2885 = vpop.xlane.xlu0 %2884
    %v2886 = vsel %vm149, %v2874, 0.0
    %2887 = vadd.xlane.f32.xlu0 %v2886
    %v2888 = vpop.xlane.xlu0 %2887
    %v2889 = vmul.f32 %v2879, %v168
    %v2890 = vmul.f32 %v2882, %v168
    %v2891 = vmul.f32 %v2885, %v168
    %v2892 = vmul.f32 %v2888, %v168
    %v2893 = vmul.f32 %v2871, %v2871
    %v2894 = vmul.f32 %v2872, %v2872
    %v2895 = vmul.f32 %v2873, %v2873
    %v2896 = vmul.f32 %v2874, %v2874
    %v2897 = vsel %vm149, %v2893, 0.0
    %2898 = vadd.xlane.f32.xlu0 %v2897
    %v2899 = vpop.xlane.xlu0 %2898
    %v2900 = vsel %vm149, %v2894, 0.0
    %2901 = vadd.xlane.f32.xlu0 %v2900
    %v2902 = vpop.xlane.xlu0 %2901
    %v2903 = vsel %vm149, %v2895, 0.0
    %2904 = vadd.xlane.f32.xlu0 %v2903
    %v2905 = vpop.xlane.xlu0 %2904
    %v2906 = vsel %vm149, %v2896, 0.0
    %2907 = vadd.xlane.f32.xlu0 %v2906
    %v2908 = vpop.xlane.xlu0 %2907
    %v2909 = vmul.f32 %v2899, %v168
    %v2910 = vmul.f32 %v2902, %v168
    %v2911 = vmul.f32 %v2905, %v168
    %v2912 = vmul.f32 %v2908, %v168
    %v2913 = vmul.f32 %v2889, %v2889
    %v2914 = vmul.f32 %v2890, %v2890
    %v2915 = vmul.f32 %v2891, %v2891
    %v2916 = vmul.f32 %v2892, %v2892
    %v2917 = vsub.f32 %v2909, %v2913
    %v2918 = vsub.f32 %v2910, %v2914
    %v2919 = vsub.f32 %v2911, %v2915
    %v2920 = vsub.f32 %v2912, %v2916
    %v2921 = vsub.f32 %v2871, %v2889
    %v2922 = vsub.f32 %v2872, %v2890
    %v2923 = vsub.f32 %v2873, %v2891
    %v2924 = vsub.f32 %v2874, %v2892
    %v2925 = vadd.f32 %v2917, 1e-05
    %v2926 = vadd.f32 %v2918, 1e-05
    %v2927 = vadd.f32 %v2919, 1e-05
    %v2928 = vadd.f32 %v2920, 1e-05
    %v2929 = vrsqrt.pop %v2925
    %v2930 = vmul.f32 %v2929, %v2925
    %v2931 = vmul.f32 %v2930, %v2929
    %v2932 = vmul.f32 0.5, %v2931
    %v2933 = vsub.f32 1.5, %v2932
    %v2934 = vmul.f32 %v2929, %v2933
    %vm2935 = vweird.f32 %v2925
    %vm2936 = vweird.f32 %v2929
    %vm2937 = vmor %vm2935, %vm2936
    %v2938 = vsel %vm2937, %v2929, %v2934
    %v2939 = vrsqrt.pop %v2926
    %v2940 = vmul.f32 %v2939, %v2926
    %v2941 = vmul.f32 %v2940, %v2939
    %v2942 = vmul.f32 0.5, %v2941
    %v2943 = vsub.f32 1.5, %v2942
    %v2944 = vmul.f32 %v2939, %v2943
    %vm2945 = vweird.f32 %v2926
    %vm2946 = vweird.f32 %v2939
    %vm2947 = vmor %vm2945, %vm2946
    %v2948 = vsel %vm2947, %v2939, %v2944
    %v2949 = vrsqrt.pop %v2927
    %v2950 = vmul.f32 %v2949, %v2927
    %v2951 = vmul.f32 %v2950, %v2949
    %v2952 = vmul.f32 0.5, %v2951
    %v2953 = vsub.f32 1.5, %v2952
    %v2954 = vmul.f32 %v2949, %v2953
    %vm2955 = vweird.f32 %v2927
    %vm2956 = vweird.f32 %v2949
    %vm2957 = vmor %vm2955, %vm2956
    %v2958 = vsel %vm2957, %v2949, %v2954
    %v2959 = vrsqrt.pop %v2928
    %v2960 = vmul.f32 %v2959, %v2928
    %v2961 = vmul.f32 %v2960, %v2959
    %v2962 = vmul.f32 0.5, %v2961
    %v2963 = vsub.f32 1.5, %v2962
    %v2964 = vmul.f32 %v2959, %v2963
    %vm2965 = vweird.f32 %v2928
    %vm2966 = vweird.f32 %v2959
    %vm2967 = vmor %vm2965, %vm2966
    %v2968 = vsel %vm2967, %v2959, %v2964
    %v2969 = vmul.f32 %v2921, %v2938
    %v2970 = vmul.f32 %v2922, %v2948
    %v2971 = vmul.f32 %v2923, %v2958
    %v2972 = vmul.f32 %v2924, %v2968
    %v2974 = vperm.slane %v2875, 0
    %v2976 = vmul.f32 %v2969, %v2974
    %v2977 = vmul.f32 %v2970, %v2974
    %v2978 = vmul.f32 %v2971, %v2974
    %v2979 = vmul.f32 %v2972, %v2974
    %v2981 = vperm.slane %v2876, 0
    %v2983 = vadd.f32 %v2976, %v2981
    %v2984 = vadd.f32 %v2977, %v2981
    %v2985 = vadd.f32 %v2978, %v2981
    %v2986 = vadd.f32 %v2979, %v2981
    %v2987 = vpack.c.bf16 %v2984, %v2983
    %v2988 = vpack.c.bf16 %v2986, %v2985
    %v2989 = vld [vmem:[%s16] sm:$0xf]
    %v2990 = vld [vmem:[%s16 + $0x4] sm:$0xf]
    %v2991 = vld [vmem:[%s16 + $0x8] sm:$0xf]
    %v2992 = vld [vmem:[%s16 + $0xc] sm:$0xf]
    %v2993 = vld [vmem:[%s16 + $0x10] sm:$0xf]
    %v2994 = vld [vmem:[%s16 + $0x14] sm:$0xf]
    %v2995 = vld [vmem:[%s16 + $0x18] sm:$0xf]
    %v2996 = vld [vmem:[%s16 + $0x1c] sm:$0xf]
    %v2997 = vld [vmem:[%s17] sm:$0x1]
    %v2999 = vperm.slane %v2997, 0
    %v3009 = vunpack.c.l.b16 %v2989
    %v3010 = vunpack.c.l.b16 %v2990
    %v3011 = vunpack.c.l.b16 %v2991
    %v3012 = vunpack.c.l.b16 %v2992
    %v3013 = vunpack.c.l.b16 %v2993
    %v3014 = vunpack.c.l.b16 %v2994
    %v3015 = vunpack.c.l.b16 %v2995
    %v3016 = vunpack.c.l.b16 %v2996
    %v3017 = vpack.c.b16 %v3010, %v3009
    %v3018 = vpack.c.b16 %v3012, %v3011
    %v3019 = vpack.c.b16 %v3014, %v3013
    %v3020 = vpack.c.b16 %v3016, %v3015
    %v3026 = vsel %vm149, %v2987, 0
    %v3029 = vsel %vm149, %v2988, 0
    %3031 = vmatpush.bf16.msra.mxu0 0
    %3032 = vmatpush.bf16.msra.mxu0 0
    %3033 = vmatpush.bf16.msra.mxu0 0
    %3034 = vmatpush.bf16.msra.mxu0 0
    %3035 = vmatpush.bf16.msra.mxu0 %v3020
    %3036 = vmatpush.bf16.msra.mxu0 %v3019
    %3037 = vmatpush.bf16.msra.mxu0 %v3018
    %3038 = vmatpush.bf16.msra.mxu0 %v3017
    %3039 = vmatmul.bf16.gmra.mxu0 %v3026
    %v3040 = vpop.f32.mrf.mxu0
    %v3041 = vadd.f32 %v2999, %v3040
    %v3042 = vpop.f32.mrf.mxu0
    %v3043 = vadd.f32 %v2999, %v3042
    %3044 = vmatmul.bf16.gmra.mxu0 %v3029
    %v3045 = vpop.f32.mrf.mxu0
    %v3046 = vadd.f32 %v2999, %v3045
    %v3047 = vpop.f32.mrf.mxu0
    %v3048 = vadd.f32 %v2999, %v3047
    %3049 = vdwg.mxu0
    %3050 = vst [vmem:[#allocation2] sm:$0xff] %v3041
    %3051 = vst [vmem:[#allocation2 + $0x8] sm:$0xff] %v3043
    %3052 = vst [vmem:[#allocation2 + $0x10] sm:$0xff] %v3046
    %3053 = vst [vmem:[#allocation2 + $0x18] sm:$0xff] %v3048
    // Predicated region
    $region74: #{gpt_forward.1} parent=1 // pred_check
      _
    $region75: #{gpt_forward.1} parent=1 // pred_check_branch
      %3055 = sbr.rel (0) target = $region77
    $region76: #{gpt_forward.1} parent=1 // pred_region
      %3057 = vsyncadd [#allocation3], 0
      %s3058 = sshll.u32 [#allocation2], 4
      %s3059 = int_to_ptr.vmem [resolvable:$true] %s3058
      %s3060 = sshll.u32 %s18, 4
      %s3061 = int_to_ptr.hbm [resolvable:$true] %s3060
      %3066 = dma.vmem_to_hbm [thread:$0]  %s3059, 512, %s3061, [#allocation3], 128, 128, 8
    $region77: #{gpt_forward.1} parent=1 // pred_fallthru
      _
    // Predicated region
    $region78: #{gpt_forward.1} parent=1 // pred_check
      _
    $region79: #{gpt_forward.1} parent=1 // pred_check_branch
      %3068 = sbr.rel (0) target = $region81
    $region80: #{gpt_forward.1} parent=1 // pred_region
      %3070 = dma.done [#allocation3], 512
    $region81: #{gpt_forward.1} parent=1 // pred_fallthru
      _
    %3071 = vsyncpa [#allocation3], 1

</llo_original>
